<compile_context>
chip_gen: v6e
topology: v6e:2x2x1
jax: 0.10.0
libtpu: 0.0.40
codegen_flags: <defaults>
</compile_context>

<pallas_src>
import jax
import jax.numpy as jnp
import numpy as np
from jax.experimental import pallas as pl
from jax.experimental.pallas import tpu as pltpu


B_TILE = 8                       # images per grid step (multiple of 8)
TILE_ROWS = B_TILE * 28          # 224 stacked image rows per tile
PAD_ROWS = 24                    # zero slack rows so shifted windows stay in-bounds
BLOCK_ROWS = TILE_ROWS + PAD_ROWS  # 248


# --------------------------------------------------------------------------
# Fused LeNet kernel: one grid step == B_TILE images.
# Row layout of every stacked activation: row b*28 + p belongs to image b.
# --------------------------------------------------------------------------
def lenet_kernel(x_ref, band1_ref, b1_ref, pr1_ref, band2_ref, b2_ref,
                 sel_ref, g1_ref, fb1_ref, fw2_ref, fb2_ref, fw3_ref, fb3_ref,
                 o_ref):
    f32 = jnp.float32

    def sigmoid(z):
        return 1.0 / (1.0 + jnp.exp(-z))

    x = x_ref[...]                                          # (248, 28)

    # ---- conv1 (+bias): band GEMM, kernel-row shift via static row windows --
    # z1[b*28+p, oc*24+q] = b1[oc] + sum_{kh,kw} x[b,p+kh,q+kw] * w1[oc,0,kh,kw]
    z1 = b1_ref[...] + sum(
        jnp.dot(x[kh:kh + 240, :], band1_ref[kh], preferred_element_type=f32)
        for kh in range(5))                                 # (240, 144)
    s1 = sigmoid(z1)

    # ---- 2x2 avg pool 1: row-pair add + host-built lane-pair-sum (0.25 folded)
    t1 = s1[0:232, :] + s1[1:233, :]                        # (232, 144)
    u1 = jnp.dot(t1, pr1_ref[...], preferred_element_type=f32)  # (232, 72)
    # u1[b*28 + 2r, oc*12 + u] == pooled p1[b, oc, r, u]

    # ---- conv2 (+bias): band GEMM over the even-row (stride-2) layout --------
    # z2[b*28+2p, od*8+q] = b2[od] + sum_{oc,kh,kw} p1[b,oc,p+kh,q+kw]*w2[od,oc,kh,kw]
    z2 = b2_ref[...] + sum(
        jnp.dot(u1[2 * kh:2 * kh + 224, :], band2_ref[kh],
                preferred_element_type=f32)
        for kh in range(5))                                 # (224, 128)
    s2 = sigmoid(z2)

    # ---- 2x2 avg pool 2 + NCHW flatten + gather: one constant GEMM ----------
    # sel (host constant, 0.25 folded) picks rows b*28+4r and b*28+4r+2 per image.
    a = jnp.dot(sel_ref[...], s2, preferred_element_type=f32)   # (4*B_TILE, 128)

    # ---- fc1 (batched, M=B_TILE): lane-pair pooling folded into g1 ----------
    h = fb1_ref[...] + sum(
        jnp.dot(a[r * B_TILE:(r + 1) * B_TILE, :], g1_ref[r],
                preferred_element_type=f32)
        for r in range(4))                                  # (B_TILE, 120)
    h = sigmoid(h)

    # ---- fc2 / fc3 (batched); fc3 padded to 128 lanes for a dense store -----
    h = sigmoid(jnp.dot(h, fw2_ref[...], preferred_element_type=f32)
                + fb2_ref[...])                             # (B_TILE, 84)
    out = jnp.dot(h, fw3_ref[...], preferred_element_type=f32) + fb3_ref[...]
    o_ref[...] = out.astype(o_ref.dtype)                    # (B_TILE, 128)


# --------------------------------------------------------------------------
# Host-side, ONE-TIME weight preparation (band matrices, pool/flatten
# constants, transposed fc weights, lane-padded fc3).
# --------------------------------------------------------------------------
def prepare_params(params, b_tile=B_TILE):
    w1 = np.asarray(params["w1"], np.float32)    # (6, 1, 5, 5)
    b1 = np.asarray(params["b1"], np.float32)    # (6,)
    w2 = np.asarray(params["w2"], np.float32)    # (16, 6, 5, 5)
    b2 = np.asarray(params["b2"], np.float32)    # (16,)
    fw1 = np.asarray(params["fw1"], np.float32)  # (120, 256)
    fb1 = np.asarray(params["fb1"], np.float32)
    fw2 = np.asarray(params["fw2"], np.float32)  # (84, 120)
    fb2 = np.asarray(params["fb2"], np.float32)
    fw3 = np.asarray(params["fw3"], np.float32)  # (10, 84)
    fb3 = np.asarray(params["fb3"], np.float32)

    # conv1 band: band1[kh, q+kw, oc*24+q] = w1[oc, 0, kh, kw]
    band1 = np.zeros((5, 28, 6 * 24), np.float32)
    for oc in range(6):
        for kh in range(5):
            for kw in range(5):
                for q in range(24):
                    band1[kh, q + kw, oc * 24 + q] = w1[oc, 0, kh, kw]
    b1row = np.repeat(b1, 24)[None, :]                      # (1, 144)

    # pool1 lane pair-sum, 0.25 folded: pr1[oc*24 + 2u + du, oc*12 + u] = 0.25
    pr1 = np.zeros((144, 72), np.float32)
    for oc in range(6):
        for u in range(12):
            pr1[oc * 24 + 2 * u, oc * 12 + u] = 0.25
            pr1[oc * 24 + 2 * u + 1, oc * 12 + u] = 0.25

    # conv2 band: band2[kh, oc*12+q+kw, od*8+q] = w2[od, oc, kh, kw]
    band2 = np.zeros((5, 6 * 12, 16 * 8), np.float32)
    for od in range(16):
        for oc in range(6):
            for kh in range(5):
                for kw in range(5):
                    for q in range(8):
                        band2[kh, oc * 12 + q + kw, od * 8 + q] = w2[od, oc, kh, kw]
    b2row = np.repeat(b2, 8)[None, :]                       # (1, 128)

    # pool2 row pair-sum + per-image gather into fc layout, 0.25 folded:
    # sel[r*bt + b, b*28 + 4r + {0,2}] = 0.25
    sel = np.zeros((4 * b_tile, b_tile * 28), np.float32)
    for r in range(4):
        for b in range(b_tile):
            sel[r * b_tile + b, b * 28 + 4 * r] = 0.25
            sel[r * b_tile + b, b * 28 + 4 * r + 2] = 0.25

    # fc1 weight regrouped per pooling row r with the lane pair-sum folded in:
    # g1[r, od*8 + 2u + du, n] = fw1[n, od*16 + r*4 + u]   (torch NCHW flatten)
    g1 = np.zeros((4, 128, 120), np.float32)
    for r in range(4):
        for od in range(16):
            for u in range(4):
                col = fw1[:, od * 16 + r * 4 + u]
                g1[r, od * 8 + 2 * u, :] = col
                g1[r, od * 8 + 2 * u + 1, :] = col

    # fc3 padded to 128 lanes for a lane-dense output store.
    fw3p = np.zeros((84, 128), np.float32)
    fw3p[:, :10] = fw3.T
    fb3p = np.zeros((1, 128), np.float32)
    fb3p[0, :10] = fb3

    return {
        "band1": jnp.asarray(band1), "b1": jnp.asarray(b1row),
        "pr1": jnp.asarray(pr1),
        "band2": jnp.asarray(band2), "b2": jnp.asarray(b2row),
        "sel": jnp.asarray(sel), "g1": jnp.asarray(g1),
        "fb1": jnp.asarray(fb1[None, :]),
        "fw2": jnp.asarray(np.ascontiguousarray(fw2.T)),
        "fb2": jnp.asarray(fb2[None, :]),
        "fw3": jnp.asarray(fw3p), "fb3": jnp.asarray(fb3p),
    }


# --------------------------------------------------------------------------
# Forward: one pallas_call, B_TILE images per grid step.
# --------------------------------------------------------------------------
@jax.jit
def lenet_forward(x_nchw, kp):
    B = x_nchw.shape[0]
    n_tiles = (B + B_TILE - 1) // B_TILE
    Bp = n_tiles * B_TILE

    x = x_nchw.reshape(B, 28, 28)                   # C == 1
    if Bp != B:
        x = jnp.pad(x, ((0, Bp - B), (0, 0), (0, 0)))
    # Stack images along rows, add PAD_ROWS zero rows of slack per tile so the
    # kernel's shifted row windows never leave the block.
    x = x.reshape(n_tiles, TILE_ROWS, 28)
    x = jnp.pad(x, ((0, 0), (0, PAD_ROWS), (0, 0)))
    x = x.reshape(n_tiles * BLOCK_ROWS, 28)

    full2 = lambda i: (0, 0)
    full3 = lambda i: (0, 0, 0)
    out = pl.pallas_call(
        lenet_kernel,
        out_shape=jax.ShapeDtypeStruct((Bp, 128), jnp.float32),
        grid=(n_tiles,),
        in_specs=[
            pl.BlockSpec((BLOCK_ROWS, 28), lambda i: (i, 0)),
            pl.BlockSpec((5, 28, 144), full3),
            pl.BlockSpec((1, 144), full2),
            pl.BlockSpec((144, 72), full2),
            pl.BlockSpec((5, 72, 128), full3),
            pl.BlockSpec((1, 128), full2),
            pl.BlockSpec((4 * B_TILE, B_TILE * 28), full2),
            pl.BlockSpec((4, 128, 120), full3),
            pl.BlockSpec((1, 120), full2),
            pl.BlockSpec((120, 84), full2),
            pl.BlockSpec((1, 84), full2),
            pl.BlockSpec((84, 128), full2),
            pl.BlockSpec((1, 128), full2),
        ],
        out_specs=pl.BlockSpec((B_TILE, 128), lambda i: (i, 0)),
        compiler_params=pltpu.CompilerParams(
            dimension_semantics=("parallel",)),
    )(x, kp["band1"], kp["b1"], kp["pr1"], kp["band2"], kp["b2"],
      kp["sel"], kp["g1"], kp["fb1"], kp["fw2"], kp["fb2"],
      kp["fw3"], kp["fb3"])
    return out[:B, :10]


# --------------------------------------------------------------------------
# Parameter init (torch layouts) and pure-JAX reference for verification.
# --------------------------------------------------------------------------
def init_params(key):
    ks = jax.random.split(key, 10)

    def u(k, shape, fan_in):
        bound = 1.0 / np.sqrt(fan_in)
        return jax.random.uniform(k, shape, jnp.float32, -bound, bound)

    return {
        "w1": u(ks[0], (6, 1, 5, 5), 1 * 5 * 5),
        "b1": u(ks[1], (6,), 1 * 5 * 5),
        "w2": u(ks[2], (16, 6, 5, 5), 6 * 5 * 5),
        "b2": u(ks[3], (16,), 6 * 5 * 5),
        "fw1": u(ks[4], (120, 256), 256),
        "fb1": u(ks[5], (120,), 256),
        "fw2": u(ks[6], (84, 120), 120),
        "fb2": u(ks[7], (84,), 120),
        "fw3": u(ks[8], (10, 84), 84),
        "fb3": u(ks[9], (10,), 84),
    }


def ref_forward(x, p):
    def conv(h, w, b):
        y = jax.lax.conv_general_dilated(
            h, w, (1, 1), "VALID", dimension_numbers=("NCHW", "OIHW", "NCHW"))
        return y + b.reshape(1, -1, 1, 1)

    def pool(h):
        return jax.lax.reduce_window(
            h, 0.0, jax.lax.add, (1, 1, 2, 2), (1, 1, 2, 2), "VALID") / 4.0

    sig = jax.nn.sigmoid
    h = pool(sig(conv(x, p["w1"], p["b1"])))
    h = pool(sig(conv(h, p["w2"], p["b2"])))
    h = h.reshape(h.shape[0], -1)
    h = sig(h @ p["fw1"].T + p["fb1"])
    h = sig(h @ p["fw2"].T + p["fb2"])
    return h @ p["fw3"].T + p["fb3"]


if __name__ == "__main__":
    key = jax.random.PRNGKey(0)
    k_param, k_x = jax.random.split(key)
    params = init_params(k_param)
    kernel_params = prepare_params(params)

    # fc1 (16*4*4) forces 28x28 single-channel inputs; batch=2.
    x = jax.random.normal(k_x, (2, 1, 28, 28), jnp.float32)

    out = jax.block_until_ready(lenet_forward(x, kernel_params))
    ref = jax.block_until_ready(ref_forward(x, params))

    np.testing.assert_allclose(np.asarray(out), np.asarray(ref),
                               rtol=5e-4, atol=5e-4)
    assert out.shape == (2, 10)

    print("KERNEL_OK")
</pallas_src>

<mosaic_0001>
module attributes {stable_mosaic.version = 11 : i64} {
  func.func @lenet_kernel(%arg0: i32, %arg1: memref<248x28xf32, #tpu.memory_space<vmem>>, %arg2: memref<5x28x144xf32, #tpu.memory_space<vmem>>, %arg3: memref<1x144xf32, #tpu.memory_space<vmem>>, %arg4: memref<144x72xf32, #tpu.memory_space<vmem>>, %arg5: memref<5x72x128xf32, #tpu.memory_space<vmem>>, %arg6: memref<1x128xf32, #tpu.memory_space<vmem>>, %arg7: memref<32x224xf32, #tpu.memory_space<vmem>>, %arg8: memref<4x128x120xf32, #tpu.memory_space<vmem>>, %arg9: memref<1x120xf32, #tpu.memory_space<vmem>>, %arg10: memref<120x84xf32, #tpu.memory_space<vmem>>, %arg11: memref<1x84xf32, #tpu.memory_space<vmem>>, %arg12: memref<84x128xf32, #tpu.memory_space<vmem>>, %arg13: memref<1x128xf32, #tpu.memory_space<vmem>>, %arg14: memref<8x128xf32, #tpu.memory_space<vmem>>) attributes {dimension_semantics = [#tpu.dimension_semantics<parallel>], iteration_bounds = array<i64: 1>, scalar_prefetch = 0 : i64, scratch_operands = 0 : i64, tpu.core_type = #tpu.core_type<tc>, window_params = [{transform_indices = @transform_0, window_bounds = array<i64: 248, 28>}, {pipeline_mode = #tpu.pipeline_mode<synchronous>, transform_indices = @transform_1, window_bounds = array<i64: 5, 28, 144>}, {pipeline_mode = #tpu.pipeline_mode<synchronous>, transform_indices = @transform_2, window_bounds = array<i64: 1, 144>}, {pipeline_mode = #tpu.pipeline_mode<synchronous>, transform_indices = @transform_3, window_bounds = array<i64: 144, 72>}, {pipeline_mode = #tpu.pipeline_mode<synchronous>, transform_indices = @transform_4, window_bounds = array<i64: 5, 72, 128>}, {pipeline_mode = #tpu.pipeline_mode<synchronous>, transform_indices = @transform_5, window_bounds = array<i64: 1, 128>}, {pipeline_mode = #tpu.pipeline_mode<synchronous>, transform_indices = @transform_6, window_bounds = array<i64: 32, 224>}, {pipeline_mode = #tpu.pipeline_mode<synchronous>, transform_indices = @transform_7, window_bounds = array<i64: 4, 128, 120>}, {pipeline_mode = #tpu.pipeline_mode<synchronous>, transform_indices = @transform_8, window_bounds = array<i64: 1, 120>}, {pipeline_mode = #tpu.pipeline_mode<synchronous>, transform_indices = @transform_9, window_bounds = array<i64: 120, 84>}, {pipeline_mode = #tpu.pipeline_mode<synchronous>, transform_indices = @transform_10, window_bounds = array<i64: 1, 84>}, {pipeline_mode = #tpu.pipeline_mode<synchronous>, transform_indices = @transform_11, window_bounds = array<i64: 84, 128>}, {pipeline_mode = #tpu.pipeline_mode<synchronous>, transform_indices = @transform_12, window_bounds = array<i64: 1, 128>}, {transform_indices = @transform_13, window_bounds = array<i64: 8, 128>}]} {
    %c0 = arith.constant 0 : index
    %c0_0 = arith.constant 0 : index
    %0 = vector.load %arg1[%c0, %c0_0] : memref<248x28xf32, #tpu.memory_space<vmem>>, vector<248x28xf32>
    %c0_1 = arith.constant 0 : index
    %c0_2 = arith.constant 0 : index
    %1 = vector.load %arg3[%c0_1, %c0_2] : memref<1x144xf32, #tpu.memory_space<vmem>>, vector<1x144xf32>
    %2 = vector.extract_strided_slice %0 {offsets = [0, 0], sizes = [240, 28], strides = [1, 1]} : vector<248x28xf32> to vector<240x28xf32>
    %c0_3 = arith.constant 0 : index
    %c0_4 = arith.constant 0 : index
    %c0_5 = arith.constant 0 : index
    %3 = vector.load %arg2[%c0_3, %c0_4, %c0_5] : memref<5x28x144xf32, #tpu.memory_space<vmem>>, vector<1x28x144xf32>
    %4 = vector.shape_cast %3 : vector<1x28x144xf32> to vector<28x144xf32>
    %cst = arith.constant dense<0.000000e+00> : vector<240x144xf32>
    %5 = tpu.matmul %2, %4, %cst {dimension_numbers = #tpu.dot_dimension_numbers<[1], [0], [0], [1], [0, 0, 1, 1], [], []>} : vector<240x28xf32>, vector<28x144xf32>, vector<240x144xf32> -> vector<240x144xf32>
    %cst_6 = arith.constant 0.000000e+00 : f32
    %6 = vector.broadcast %cst_6 : f32 to vector<240x144xf32>
    %7 = arith.addf %6, %5 : vector<240x144xf32>
    %8 = vector.extract_strided_slice %0 {offsets = [1, 0], sizes = [240, 28], strides = [1, 1]} : vector<248x28xf32> to vector<240x28xf32>
    %c1 = arith.constant 1 : index
    %c0_7 = arith.constant 0 : index
    %c0_8 = arith.constant 0 : index
    %9 = vector.load %arg2[%c1, %c0_7, %c0_8] : memref<5x28x144xf32, #tpu.memory_space<vmem>>, vector<1x28x144xf32>
    %10 = vector.shape_cast %9 : vector<1x28x144xf32> to vector<28x144xf32>
    %cst_9 = arith.constant dense<0.000000e+00> : vector<240x144xf32>
    %11 = tpu.matmul %8, %10, %cst_9 {dimension_numbers = #tpu.dot_dimension_numbers<[1], [0], [0], [1], [0, 0, 1, 1], [], []>} : vector<240x28xf32>, vector<28x144xf32>, vector<240x144xf32> -> vector<240x144xf32>
    %12 = arith.addf %7, %11 : vector<240x144xf32>
    %13 = vector.extract_strided_slice %0 {offsets = [2, 0], sizes = [240, 28], strides = [1, 1]} : vector<248x28xf32> to vector<240x28xf32>
    %c2 = arith.constant 2 : index
    %c0_10 = arith.constant 0 : index
    %c0_11 = arith.constant 0 : index
    %14 = vector.load %arg2[%c2, %c0_10, %c0_11] : memref<5x28x144xf32, #tpu.memory_space<vmem>>, vector<1x28x144xf32>
    %15 = vector.shape_cast %14 : vector<1x28x144xf32> to vector<28x144xf32>
    %cst_12 = arith.constant dense<0.000000e+00> : vector<240x144xf32>
    %16 = tpu.matmul %13, %15, %cst_12 {dimension_numbers = #tpu.dot_dimension_numbers<[1], [0], [0], [1], [0, 0, 1, 1], [], []>} : vector<240x28xf32>, vector<28x144xf32>, vector<240x144xf32> -> vector<240x144xf32>
    %17 = arith.addf %12, %16 : vector<240x144xf32>
    %18 = vector.extract_strided_slice %0 {offsets = [3, 0], sizes = [240, 28], strides = [1, 1]} : vector<248x28xf32> to vector<240x28xf32>
    %c3 = arith.constant 3 : index
    %c0_13 = arith.constant 0 : index
    %c0_14 = arith.constant 0 : index
    %19 = vector.load %arg2[%c3, %c0_13, %c0_14] : memref<5x28x144xf32, #tpu.memory_space<vmem>>, vector<1x28x144xf32>
    %20 = vector.shape_cast %19 : vector<1x28x144xf32> to vector<28x144xf32>
    %cst_15 = arith.constant dense<0.000000e+00> : vector<240x144xf32>
    %21 = tpu.matmul %18, %20, %cst_15 {dimension_numbers = #tpu.dot_dimension_numbers<[1], [0], [0], [1], [0, 0, 1, 1], [], []>} : vector<240x28xf32>, vector<28x144xf32>, vector<240x144xf32> -> vector<240x144xf32>
    %22 = arith.addf %17, %21 : vector<240x144xf32>
    %23 = vector.extract_strided_slice %0 {offsets = [4, 0], sizes = [240, 28], strides = [1, 1]} : vector<248x28xf32> to vector<240x28xf32>
    %c4 = arith.constant 4 : index
    %c0_16 = arith.constant 0 : index
    %c0_17 = arith.constant 0 : index
    %24 = vector.load %arg2[%c4, %c0_16, %c0_17] : memref<5x28x144xf32, #tpu.memory_space<vmem>>, vector<1x28x144xf32>
    %25 = vector.shape_cast %24 : vector<1x28x144xf32> to vector<28x144xf32>
    %cst_18 = arith.constant dense<0.000000e+00> : vector<240x144xf32>
    %26 = tpu.matmul %23, %25, %cst_18 {dimension_numbers = #tpu.dot_dimension_numbers<[1], [0], [0], [1], [0, 0, 1, 1], [], []>} : vector<240x28xf32>, vector<28x144xf32>, vector<240x144xf32> -> vector<240x144xf32>
    %27 = arith.addf %22, %26 : vector<240x144xf32>
    %28 = vector.broadcast %1 : vector<1x144xf32> to vector<240x144xf32>
    %29 = arith.addf %28, %27 : vector<240x144xf32>
    %cst_19 = arith.constant 0.000000e+00 : f32
    %30 = vector.broadcast %cst_19 : f32 to vector<240x144xf32>
    %31 = arith.subf %30, %29 : vector<240x144xf32>
    %32 = math.exp %31 : vector<240x144xf32>
    %cst_20 = arith.constant 1.000000e+00 : f32
    %33 = vector.broadcast %cst_20 : f32 to vector<240x144xf32>
    %34 = arith.addf %33, %32 : vector<240x144xf32>
    %cst_21 = arith.constant 1.000000e+00 : f32
    %35 = vector.broadcast %cst_21 : f32 to vector<240x144xf32>
    %36 = arith.divf %35, %34 : vector<240x144xf32>
    %37 = vector.extract_strided_slice %36 {offsets = [0, 0], sizes = [232, 144], strides = [1, 1]} : vector<240x144xf32> to vector<232x144xf32>
    %38 = vector.extract_strided_slice %36 {offsets = [1, 0], sizes = [232, 144], strides = [1, 1]} : vector<240x144xf32> to vector<232x144xf32>
    %39 = arith.addf %37, %38 : vector<232x144xf32>
    %c0_22 = arith.constant 0 : index
    %c0_23 = arith.constant 0 : index
    %40 = vector.load %arg4[%c0_22, %c0_23] : memref<144x72xf32, #tpu.memory_space<vmem>>, vector<144x72xf32>
    %cst_24 = arith.constant dense<0.000000e+00> : vector<232x72xf32>
    %41 = tpu.matmul %39, %40, %cst_24 {dimension_numbers = #tpu.dot_dimension_numbers<[1], [0], [0], [1], [0, 0, 1, 1], [], []>} : vector<232x144xf32>, vector<144x72xf32>, vector<232x72xf32> -> vector<232x72xf32>
    %c0_25 = arith.constant 0 : index
    %c0_26 = arith.constant 0 : index
    %42 = vector.load %arg6[%c0_25, %c0_26] : memref<1x128xf32, #tpu.memory_space<vmem>>, vector<1x128xf32>
    %43 = vector.extract_strided_slice %41 {offsets = [0, 0], sizes = [224, 72], strides = [1, 1]} : vector<232x72xf32> to vector<224x72xf32>
    %c0_27 = arith.constant 0 : index
    %c0_28 = arith.constant 0 : index
    %c0_29 = arith.constant 0 : index
    %44 = vector.load %arg5[%c0_27, %c0_28, %c0_29] : memref<5x72x128xf32, #tpu.memory_space<vmem>>, vector<1x72x128xf32>
    %45 = vector.shape_cast %44 : vector<1x72x128xf32> to vector<72x128xf32>
    %cst_30 = arith.constant dense<0.000000e+00> : vector<224x128xf32>
    %46 = tpu.matmul %43, %45, %cst_30 {dimension_numbers = #tpu.dot_dimension_numbers<[1], [0], [0], [1], [0, 0, 1, 1], [], []>} : vector<224x72xf32>, vector<72x128xf32>, vector<224x128xf32> -> vector<224x128xf32>
    %cst_31 = arith.constant 0.000000e+00 : f32
    %47 = vector.broadcast %cst_31 : f32 to vector<224x128xf32>
    %48 = arith.addf %47, %46 : vector<224x128xf32>
    %49 = vector.extract_strided_slice %41 {offsets = [2, 0], sizes = [224, 72], strides = [1, 1]} : vector<232x72xf32> to vector<224x72xf32>
    %c1_32 = arith.constant 1 : index
    %c0_33 = arith.constant 0 : index
    %c0_34 = arith.constant 0 : index
    %50 = vector.load %arg5[%c1_32, %c0_33, %c0_34] : memref<5x72x128xf32, #tpu.memory_space<vmem>>, vector<1x72x128xf32>
    %51 = vector.shape_cast %50 : vector<1x72x128xf32> to vector<72x128xf32>
    %cst_35 = arith.constant dense<0.000000e+00> : vector<224x128xf32>
    %52 = tpu.matmul %49, %51, %cst_35 {dimension_numbers = #tpu.dot_dimension_numbers<[1], [0], [0], [1], [0, 0, 1, 1], [], []>} : vector<224x72xf32>, vector<72x128xf32>, vector<224x128xf32> -> vector<224x128xf32>
    %53 = arith.addf %48, %52 : vector<224x128xf32>
    %54 = vector.extract_strided_slice %41 {offsets = [4, 0], sizes = [224, 72], strides = [1, 1]} : vector<232x72xf32> to vector<224x72xf32>
    %c2_36 = arith.constant 2 : index
    %c0_37 = arith.constant 0 : index
    %c0_38 = arith.constant 0 : index
    %55 = vector.load %arg5[%c2_36, %c0_37, %c0_38] : memref<5x72x128xf32, #tpu.memory_space<vmem>>, vector<1x72x128xf32>
    %56 = vector.shape_cast %55 : vector<1x72x128xf32> to vector<72x128xf32>
    %cst_39 = arith.constant dense<0.000000e+00> : vector<224x128xf32>
    %57 = tpu.matmul %54, %56, %cst_39 {dimension_numbers = #tpu.dot_dimension_numbers<[1], [0], [0], [1], [0, 0, 1, 1], [], []>} : vector<224x72xf32>, vector<72x128xf32>, vector<224x128xf32> -> vector<224x128xf32>
    %58 = arith.addf %53, %57 : vector<224x128xf32>
    %59 = vector.extract_strided_slice %41 {offsets = [6, 0], sizes = [224, 72], strides = [1, 1]} : vector<232x72xf32> to vector<224x72xf32>
    %c3_40 = arith.constant 3 : index
    %c0_41 = arith.constant 0 : index
    %c0_42 = arith.constant 0 : index
    %60 = vector.load %arg5[%c3_40, %c0_41, %c0_42] : memref<5x72x128xf32, #tpu.memory_space<vmem>>, vector<1x72x128xf32>
    %61 = vector.shape_cast %60 : vector<1x72x128xf32> to vector<72x128xf32>
    %cst_43 = arith.constant dense<0.000000e+00> : vector<224x128xf32>
    %62 = tpu.matmul %59, %61, %cst_43 {dimension_numbers = #tpu.dot_dimension_numbers<[1], [0], [0], [1], [0, 0, 1, 1], [], []>} : vector<224x72xf32>, vector<72x128xf32>, vector<224x128xf32> -> vector<224x128xf32>
    %63 = arith.addf %58, %62 : vector<224x128xf32>
    %64 = vector.extract_strided_slice %41 {offsets = [8, 0], sizes = [224, 72], strides = [1, 1]} : vector<232x72xf32> to vector<224x72xf32>
    %c4_44 = arith.constant 4 : index
    %c0_45 = arith.constant 0 : index
    %c0_46 = arith.constant 0 : index
    %65 = vector.load %arg5[%c4_44, %c0_45, %c0_46] : memref<5x72x128xf32, #tpu.memory_space<vmem>>, vector<1x72x128xf32>
    %66 = vector.shape_cast %65 : vector<1x72x128xf32> to vector<72x128xf32>
    %cst_47 = arith.constant dense<0.000000e+00> : vector<224x128xf32>
    %67 = tpu.matmul %64, %66, %cst_47 {dimension_numbers = #tpu.dot_dimension_numbers<[1], [0], [0], [1], [0, 0, 1, 1], [], []>} : vector<224x72xf32>, vector<72x128xf32>, vector<224x128xf32> -> vector<224x128xf32>
    %68 = arith.addf %63, %67 : vector<224x128xf32>
    %69 = vector.broadcast %42 : vector<1x128xf32> to vector<224x128xf32>
    %70 = arith.addf %69, %68 : vector<224x128xf32>
    %cst_48 = arith.constant 0.000000e+00 : f32
    %71 = vector.broadcast %cst_48 : f32 to vector<224x128xf32>
    %72 = arith.subf %71, %70 : vector<224x128xf32>
    %73 = math.exp %72 : vector<224x128xf32>
    %cst_49 = arith.constant 1.000000e+00 : f32
    %74 = vector.broadcast %cst_49 : f32 to vector<224x128xf32>
    %75 = arith.addf %74, %73 : vector<224x128xf32>
    %cst_50 = arith.constant 1.000000e+00 : f32
    %76 = vector.broadcast %cst_50 : f32 to vector<224x128xf32>
    %77 = arith.divf %76, %75 : vector<224x128xf32>
    %c0_51 = arith.constant 0 : index
    %c0_52 = arith.constant 0 : index
    %78 = vector.load %arg7[%c0_51, %c0_52] : memref<32x224xf32, #tpu.memory_space<vmem>>, vector<32x224xf32>
    %cst_53 = arith.constant dense<0.000000e+00> : vector<32x128xf32>
    %79 = tpu.matmul %78, %77, %cst_53 {dimension_numbers = #tpu.dot_dimension_numbers<[1], [0], [0], [1], [0, 0, 1, 1], [], []>} : vector<32x224xf32>, vector<224x128xf32>, vector<32x128xf32> -> vector<32x128xf32>
    %c0_54 = arith.constant 0 : index
    %c0_55 = arith.constant 0 : index
    %80 = vector.load %arg9[%c0_54, %c0_55] : memref<1x120xf32, #tpu.memory_space<vmem>>, vector<1x120xf32>
    %81 = vector.extract_strided_slice %79 {offsets = [0, 0], sizes = [8, 128], strides = [1, 1]} : vector<32x128xf32> to vector<8x128xf32>
    %c0_56 = arith.constant 0 : index
    %c0_57 = arith.constant 0 : index
    %c0_58 = arith.constant 0 : index
    %82 = vector.load %arg8[%c0_56, %c0_57, %c0_58] : memref<4x128x120xf32, #tpu.memory_space<vmem>>, vector<1x128x120xf32>
    %83 = vector.shape_cast %82 : vector<1x128x120xf32> to vector<128x120xf32>
    %cst_59 = arith.constant dense<0.000000e+00> : vector<8x120xf32>
    %84 = tpu.matmul %81, %83, %cst_59 {dimension_numbers = #tpu.dot_dimension_numbers<[1], [0], [0], [1], [0, 0, 1, 1], [], []>} : vector<8x128xf32>, vector<128x120xf32>, vector<8x120xf32> -> vector<8x120xf32>
    %cst_60 = arith.constant 0.000000e+00 : f32
    %85 = vector.broadcast %cst_60 : f32 to vector<8x120xf32>
    %86 = arith.addf %85, %84 : vector<8x120xf32>
    %87 = vector.extract_strided_slice %79 {offsets = [8, 0], sizes = [8, 128], strides = [1, 1]} : vector<32x128xf32> to vector<8x128xf32>
    %c1_61 = arith.constant 1 : index
    %c0_62 = arith.constant 0 : index
    %c0_63 = arith.constant 0 : index
    %88 = vector.load %arg8[%c1_61, %c0_62, %c0_63] : memref<4x128x120xf32, #tpu.memory_space<vmem>>, vector<1x128x120xf32>
    %89 = vector.shape_cast %88 : vector<1x128x120xf32> to vector<128x120xf32>
    %cst_64 = arith.constant dense<0.000000e+00> : vector<8x120xf32>
    %90 = tpu.matmul %87, %89, %cst_64 {dimension_numbers = #tpu.dot_dimension_numbers<[1], [0], [0], [1], [0, 0, 1, 1], [], []>} : vector<8x128xf32>, vector<128x120xf32>, vector<8x120xf32> -> vector<8x120xf32>
    %91 = arith.addf %86, %90 : vector<8x120xf32>
    %92 = vector.extract_strided_slice %79 {offsets = [16, 0], sizes = [8, 128], strides = [1, 1]} : vector<32x128xf32> to vector<8x128xf32>
    %c2_65 = arith.constant 2 : index
    %c0_66 = arith.constant 0 : index
    %c0_67 = arith.constant 0 : index
    %93 = vector.load %arg8[%c2_65, %c0_66, %c0_67] : memref<4x128x120xf32, #tpu.memory_space<vmem>>, vector<1x128x120xf32>
    %94 = vector.shape_cast %93 : vector<1x128x120xf32> to vector<128x120xf32>
    %cst_68 = arith.constant dense<0.000000e+00> : vector<8x120xf32>
    %95 = tpu.matmul %92, %94, %cst_68 {dimension_numbers = #tpu.dot_dimension_numbers<[1], [0], [0], [1], [0, 0, 1, 1], [], []>} : vector<8x128xf32>, vector<128x120xf32>, vector<8x120xf32> -> vector<8x120xf32>
    %96 = arith.addf %91, %95 : vector<8x120xf32>
    %97 = vector.extract_strided_slice %79 {offsets = [24, 0], sizes = [8, 128], strides = [1, 1]} : vector<32x128xf32> to vector<8x128xf32>
    %c3_69 = arith.constant 3 : index
    %c0_70 = arith.constant 0 : index
    %c0_71 = arith.constant 0 : index
    %98 = vector.load %arg8[%c3_69, %c0_70, %c0_71] : memref<4x128x120xf32, #tpu.memory_space<vmem>>, vector<1x128x120xf32>
    %99 = vector.shape_cast %98 : vector<1x128x120xf32> to vector<128x120xf32>
    %cst_72 = arith.constant dense<0.000000e+00> : vector<8x120xf32>
    %100 = tpu.matmul %97, %99, %cst_72 {dimension_numbers = #tpu.dot_dimension_numbers<[1], [0], [0], [1], [0, 0, 1, 1], [], []>} : vector<8x128xf32>, vector<128x120xf32>, vector<8x120xf32> -> vector<8x120xf32>
    %101 = arith.addf %96, %100 : vector<8x120xf32>
    %102 = vector.broadcast %80 : vector<1x120xf32> to vector<8x120xf32>
    %103 = arith.addf %102, %101 : vector<8x120xf32>
    %cst_73 = arith.constant 0.000000e+00 : f32
    %104 = vector.broadcast %cst_73 : f32 to vector<8x120xf32>
    %105 = arith.subf %104, %103 : vector<8x120xf32>
    %106 = math.exp %105 : vector<8x120xf32>
    %cst_74 = arith.constant 1.000000e+00 : f32
    %107 = vector.broadcast %cst_74 : f32 to vector<8x120xf32>
    %108 = arith.addf %107, %106 : vector<8x120xf32>
    %cst_75 = arith.constant 1.000000e+00 : f32
    %109 = vector.broadcast %cst_75 : f32 to vector<8x120xf32>
    %110 = arith.divf %109, %108 : vector<8x120xf32>
    %c0_76 = arith.constant 0 : index
    %c0_77 = arith.constant 0 : index
    %111 = vector.load %arg10[%c0_76, %c0_77] : memref<120x84xf32, #tpu.memory_space<vmem>>, vector<120x84xf32>
    %cst_78 = arith.constant dense<0.000000e+00> : vector<8x84xf32>
    %112 = tpu.matmul %110, %111, %cst_78 {dimension_numbers = #tpu.dot_dimension_numbers<[1], [0], [0], [1], [0, 0, 1, 1], [], []>} : vector<8x120xf32>, vector<120x84xf32>, vector<8x84xf32> -> vector<8x84xf32>
    %c0_79 = arith.constant 0 : index
    %c0_80 = arith.constant 0 : index
    %113 = vector.load %arg11[%c0_79, %c0_80] : memref<1x84xf32, #tpu.memory_space<vmem>>, vector<1x84xf32>
    %114 = vector.broadcast %113 : vector<1x84xf32> to vector<8x84xf32>
    %115 = arith.addf %112, %114 : vector<8x84xf32>
    %cst_81 = arith.constant 0.000000e+00 : f32
    %116 = vector.broadcast %cst_81 : f32 to vector<8x84xf32>
    %117 = arith.subf %116, %115 : vector<8x84xf32>
    %118 = math.exp %117 : vector<8x84xf32>
    %cst_82 = arith.constant 1.000000e+00 : f32
    %119 = vector.broadcast %cst_82 : f32 to vector<8x84xf32>
    %120 = arith.addf %119, %118 : vector<8x84xf32>
    %cst_83 = arith.constant 1.000000e+00 : f32
    %121 = vector.broadcast %cst_83 : f32 to vector<8x84xf32>
    %122 = arith.divf %121, %120 : vector<8x84xf32>
    %c0_84 = arith.constant 0 : index
    %c0_85 = arith.constant 0 : index
    %123 = vector.load %arg12[%c0_84, %c0_85] : memref<84x128xf32, #tpu.memory_space<vmem>>, vector<84x128xf32>
    %cst_86 = arith.constant dense<0.000000e+00> : vector<8x128xf32>
    %124 = tpu.matmul %122, %123, %cst_86 {dimension_numbers = #tpu.dot_dimension_numbers<[1], [0], [0], [1], [0, 0, 1, 1], [], []>} : vector<8x84xf32>, vector<84x128xf32>, vector<8x128xf32> -> vector<8x128xf32>
    %c0_87 = arith.constant 0 : index
    %c0_88 = arith.constant 0 : index
    %125 = vector.load %arg13[%c0_87, %c0_88] : memref<1x128xf32, #tpu.memory_space<vmem>>, vector<1x128xf32>
    %126 = vector.broadcast %125 : vector<1x128xf32> to vector<8x128xf32>
    %127 = arith.addf %124, %126 : vector<8x128xf32>
    %c0_89 = arith.constant 0 : index
    %c0_90 = arith.constant 0 : index
    %128 = vector.load %arg14[%c0_89, %c0_90] : memref<8x128xf32, #tpu.memory_space<vmem>>, vector<8x128xf32>
    tpu.vector_store %arg14[%c0_89, %c0_90], %127 {strides = array<i32>} : memref<8x128xf32, #tpu.memory_space<vmem>>, vector<8x128xf32>,
    return
  }
  func.func @transform_0(%arg0: i32) -> (i32, i32) {
    %c0_i32 = arith.constant 0 : i32
    %c0_i32_0 = arith.constant 0 : i32
    return %arg0, %c0_i32 : i32, i32
  }
  func.func @transform_1(%arg0: i32) -> (i32, i32, i32) {
    %c0_i32 = arith.constant 0 : i32
    %c0_i32_0 = arith.constant 0 : i32
    %c0_i32_1 = arith.constant 0 : i32
    %c0_i32_2 = arith.constant 0 : i32
    return %c0_i32, %c0_i32_0, %c0_i32_1 : i32, i32, i32
  }
  func.func @transform_2(%arg0: i32) -> (i32, i32) {
    %c0_i32 = arith.constant 0 : i32
    %c0_i32_0 = arith.constant 0 : i32
    %c0_i32_1 = arith.constant 0 : i32
    return %c0_i32, %c0_i32_0 : i32, i32
  }
  func.func @transform_3(%arg0: i32) -> (i32, i32) {
    %c0_i32 = arith.constant 0 : i32
    %c0_i32_0 = arith.constant 0 : i32
    %c0_i32_1 = arith.constant 0 : i32
    return %c0_i32, %c0_i32_0 : i32, i32
  }
  func.func @transform_4(%arg0: i32) -> (i32, i32, i32) {
    %c0_i32 = arith.constant 0 : i32
    %c0_i32_0 = arith.constant 0 : i32
    %c0_i32_1 = arith.constant 0 : i32
    %c0_i32_2 = arith.constant 0 : i32
    return %c0_i32, %c0_i32_0, %c0_i32_1 : i32, i32, i32
  }
  func.func @transform_5(%arg0: i32) -> (i32, i32) {
    %c0_i32 = arith.constant 0 : i32
    %c0_i32_0 = arith.constant 0 : i32
    %c0_i32_1 = arith.constant 0 : i32
    return %c0_i32, %c0_i32_0 : i32, i32
  }
  func.func @transform_6(%arg0: i32) -> (i32, i32) {
    %c0_i32 = arith.constant 0 : i32
    %c0_i32_0 = arith.constant 0 : i32
    %c0_i32_1 = arith.constant 0 : i32
    return %c0_i32, %c0_i32_0 : i32, i32
  }
  func.func @transform_7(%arg0: i32) -> (i32, i32, i32) {
    %c0_i32 = arith.constant 0 : i32
    %c0_i32_0 = arith.constant 0 : i32
    %c0_i32_1 = arith.constant 0 : i32
    %c0_i32_2 = arith.constant 0 : i32
    return %c0_i32, %c0_i32_0, %c0_i32_1 : i32, i32, i32
  }
  func.func @transform_8(%arg0: i32) -> (i32, i32) {
    %c0_i32 = arith.constant 0 : i32
    %c0_i32_0 = arith.constant 0 : i32
    %c0_i32_1 = arith.constant 0 : i32
    return %c0_i32, %c0_i32_0 : i32, i32
  }
  func.func @transform_9(%arg0: i32) -> (i32, i32) {
    %c0_i32 = arith.constant 0 : i32
    %c0_i32_0 = arith.constant 0 : i32
    %c0_i32_1 = arith.constant 0 : i32
    return %c0_i32, %c0_i32_0 : i32, i32
  }
  func.func @transform_10(%arg0: i32) -> (i32, i32) {
    %c0_i32 = arith.constant 0 : i32
    %c0_i32_0 = arith.constant 0 : i32
    %c0_i32_1 = arith.constant 0 : i32
    return %c0_i32, %c0_i32_0 : i32, i32
  }
  func.func @transform_11(%arg0: i32) -> (i32, i32) {
    %c0_i32 = arith.constant 0 : i32
    %c0_i32_0 = arith.constant 0 : i32
    %c0_i32_1 = arith.constant 0 : i32
    return %c0_i32, %c0_i32_0 : i32, i32
  }
  func.func @transform_12(%arg0: i32) -> (i32, i32) {
    %c0_i32 = arith.constant 0 : i32
    %c0_i32_0 = arith.constant 0 : i32
    %c0_i32_1 = arith.constant 0 : i32
    return %c0_i32, %c0_i32_0 : i32, i32
  }
  func.func @transform_13(%arg0: i32) -> (i32, i32) {
    %c0_i32 = arith.constant 0 : i32
    %c0_i32_0 = arith.constant 0 : i32
    return %arg0, %c0_i32 : i32, i32
  }
}

</mosaic_0001>

<llo_original>
// kernel: lenet_forward.1
$region0: #{lenet_forward.1}
  #allocation0 [shape = 'u32[]', space=smem, size = 0x4, offset = 0x4, fixed_abs, tag = 'smem constant byte address 0x4 - core index']
  #allocation1 [shape = 'u32[144,128]{1,0:T(1,128)}', space=vmem, size = 0x12000, scoped, tag = 'internal scratch']
  %s0 = inlined_call_operand.vmem [shape: f32[248,28], index: 0, kind: input, shape index: {}]
  %s1 = inlined_call_operand.vmem [shape: f32[5,28,144], index: 1, kind: input, shape index: {}]
  %s2 = inlined_call_operand.vmem [shape: f32[1,144], index: 2, kind: input, shape index: {}]
  %s3 = inlined_call_operand.vmem [shape: f32[144,72], index: 3, kind: input, shape index: {}]
  %s4 = inlined_call_operand.vmem [shape: f32[5,72,128], index: 4, kind: input, shape index: {}]
  %s5 = inlined_call_operand.vmem [shape: f32[1,128], index: 5, kind: input, shape index: {}]
  %s6 = inlined_call_operand.vmem [shape: f32[32,224], index: 6, kind: input, shape index: {}]
  %s7 = inlined_call_operand.vmem [shape: f32[4,128,120], index: 7, kind: input, shape index: {}]
  %s8 = inlined_call_operand.vmem [shape: f32[1,120], index: 8, kind: input, shape index: {}]
  %s9 = inlined_call_operand.vmem [shape: f32[120,84], index: 9, kind: input, shape index: {}]
  %s10 = inlined_call_operand.vmem [shape: f32[1,84], index: 10, kind: input, shape index: {}]
  %s11 = inlined_call_operand.vmem [shape: f32[84,128], index: 11, kind: input, shape index: {}]
  %s12 = inlined_call_operand.vmem [shape: f32[1,128], index: 12, kind: input, shape index: {}]
  %s13 = inlined_call_operand.vmem [shape: f32[8,128], index: 13, kind: output, shape index: {}]
  %s14 = sld [smem:[#allocation0]]
  $region62: #{lenet_forward.1} parent=0
    _
  %s16 = ssub.s32 1, %s14
  %s17 = scalar_select 0, %s16, %s14
  // Predicated region
  $region2: #{lenet_forward.1} parent=0 // pred_check
    _
  $region3: #{lenet_forward.1} parent=0 // pred_check_branch
    %19 = sbr.rel (0) target = $region5
  $region4: #{lenet_forward.1} parent=0 // pred_region
    _
  $region5: #{lenet_forward.1} parent=0 // pred_fallthru
    _
  // Predicated region
  $region6: #{lenet_forward.1} parent=0 // pred_check
    _
  $region7: #{lenet_forward.1} parent=0 // pred_check_branch
    %21 = sbr.rel (0) target = $region9
  $region8: #{lenet_forward.1} parent=0 // pred_region
    _
  $region9: #{lenet_forward.1} parent=0 // pred_fallthru
    _
  // Predicated region
  $region10: #{lenet_forward.1} parent=0 // pred_check
    _
  $region11: #{lenet_forward.1} parent=0 // pred_check_branch
    %23 = sbr.rel (0) target = $region13
  $region12: #{lenet_forward.1} parent=0 // pred_region
    _
  $region13: #{lenet_forward.1} parent=0 // pred_fallthru
    _
  // Predicated region
  $region14: #{lenet_forward.1} parent=0 // pred_check
    _
  $region15: #{lenet_forward.1} parent=0 // pred_check_branch
    %25 = sbr.rel (0) target = $region17
  $region16: #{lenet_forward.1} parent=0 // pred_region
    _
  $region17: #{lenet_forward.1} parent=0 // pred_fallthru
    _
  // Predicated region
  $region18: #{lenet_forward.1} parent=0 // pred_check
    _
  $region19: #{lenet_forward.1} parent=0 // pred_check_branch
    %27 = sbr.rel (0) target = $region21
  $region20: #{lenet_forward.1} parent=0 // pred_region
    _
  $region21: #{lenet_forward.1} parent=0 // pred_fallthru
    _
  // Predicated region
  $region22: #{lenet_forward.1} parent=0 // pred_check
    _
  $region23: #{lenet_forward.1} parent=0 // pred_check_branch
    %29 = sbr.rel (0) target = $region25
  $region24: #{lenet_forward.1} parent=0 // pred_region
    _
  $region25: #{lenet_forward.1} parent=0 // pred_fallthru
    _
  // Predicated region
  $region26: #{lenet_forward.1} parent=0 // pred_check
    _
  $region27: #{lenet_forward.1} parent=0 // pred_check_branch
    %31 = sbr.rel (0) target = $region29
  $region28: #{lenet_forward.1} parent=0 // pred_region
    _
  $region29: #{lenet_forward.1} parent=0 // pred_fallthru
    _
  // Predicated region
  $region30: #{lenet_forward.1} parent=0 // pred_check
    _
  $region31: #{lenet_forward.1} parent=0 // pred_check_branch
    %33 = sbr.rel (0) target = $region33
  $region32: #{lenet_forward.1} parent=0 // pred_region
    _
  $region33: #{lenet_forward.1} parent=0 // pred_fallthru
    _
  // Predicated region
  $region34: #{lenet_forward.1} parent=0 // pred_check
    _
  $region35: #{lenet_forward.1} parent=0 // pred_check_branch
    %35 = sbr.rel (0) target = $region37
  $region36: #{lenet_forward.1} parent=0 // pred_region
    _
  $region37: #{lenet_forward.1} parent=0 // pred_fallthru
    _
  // Predicated region
  $region38: #{lenet_forward.1} parent=0 // pred_check
    _
  $region39: #{lenet_forward.1} parent=0 // pred_check_branch
    %37 = sbr.rel (0) target = $region41
  $region40: #{lenet_forward.1} parent=0 // pred_region
    _
  $region41: #{lenet_forward.1} parent=0 // pred_fallthru
    _
  // Predicated region
  $region42: #{lenet_forward.1} parent=0 // pred_check
    _
  $region43: #{lenet_forward.1} parent=0 // pred_check_branch
    %39 = sbr.rel (0) target = $region45
  $region44: #{lenet_forward.1} parent=0 // pred_region
    _
  $region45: #{lenet_forward.1} parent=0 // pred_fallthru
    _
  // Predicated region
  $region46: #{lenet_forward.1} parent=0 // pred_check
    _
  $region47: #{lenet_forward.1} parent=0 // pred_check_branch
    %41 = sbr.rel (0) target = $region49
  $region48: #{lenet_forward.1} parent=0 // pred_region
    _
  $region49: #{lenet_forward.1} parent=0 // pred_fallthru
    _
  // Predicated region
  $region50: #{lenet_forward.1} parent=0 // pred_check
    _
  $region51: #{lenet_forward.1} parent=0 // pred_check_branch
    %43 = sbr.rel (0) target = $region53
  $region52: #{lenet_forward.1} parent=0 // pred_region
    _
  $region53: #{lenet_forward.1} parent=0 // pred_fallthru
    _
  %v44 = vld [vmem:[%s0] sm:$0xff]
  %v45 = vld [vmem:[%s0 + $0x8] sm:$0xff]
  %v46 = vld [vmem:[%s0 + $0x10] sm:$0xff]
  %v47 = vld [vmem:[%s0 + $0x18] sm:$0xff]
  %v48 = vld [vmem:[%s0 + $0x20] sm:$0xff]
  %v49 = vld [vmem:[%s0 + $0x28] sm:$0xff]
  %v50 = vld [vmem:[%s0 + $0x30] sm:$0xff]
  %v51 = vld [vmem:[%s0 + $0x38] sm:$0xff]
  %v52 = vld [vmem:[%s0 + $0x40] sm:$0xff]
  %v53 = vld [vmem:[%s0 + $0x48] sm:$0xff]
  %v54 = vld [vmem:[%s0 + $0x50] sm:$0xff]
  %v55 = vld [vmem:[%s0 + $0x58] sm:$0xff]
  %v56 = vld [vmem:[%s0 + $0x60] sm:$0xff]
  %v57 = vld [vmem:[%s0 + $0x68] sm:$0xff]
  %v58 = vld [vmem:[%s0 + $0x70] sm:$0xff]
  %v59 = vld [vmem:[%s0 + $0x78] sm:$0xff]
  %v60 = vld [vmem:[%s0 + $0x80] sm:$0xff]
  %v61 = vld [vmem:[%s0 + $0x88] sm:$0xff]
  %v62 = vld [vmem:[%s0 + $0x90] sm:$0xff]
  %v63 = vld [vmem:[%s0 + $0x98] sm:$0xff]
  %v64 = vld [vmem:[%s0 + $0xa0] sm:$0xff]
  %v65 = vld [vmem:[%s0 + $0xa8] sm:$0xff]
  %v66 = vld [vmem:[%s0 + $0xb0] sm:$0xff]
  %v67 = vld [vmem:[%s0 + $0xb8] sm:$0xff]
  %v68 = vld [vmem:[%s0 + $0xc0] sm:$0xff]
  %v69 = vld [vmem:[%s0 + $0xc8] sm:$0xff]
  %v70 = vld [vmem:[%s0 + $0xd0] sm:$0xff]
  %v71 = vld [vmem:[%s0 + $0xd8] sm:$0xff]
  %v72 = vld [vmem:[%s0 + $0xe0] sm:$0xff]
  %v73 = vld [vmem:[%s0 + $0xe8] sm:$0xff]
  %v74 = vld [vmem:[%s0 + $0xf0] sm:$0xff]
  %v75 = vld [vmem:[%s2] sm:$0x3]
  %v76 = vld [vmem:[%s1] sm:$0xff]
  %v77 = vld [vmem:[%s1 + $0x8] sm:$0xff]
  %v78 = vld [vmem:[%s1 + $0x10] sm:$0xff]
  %v79 = vld [vmem:[%s1 + $0x18] sm:$0xff]
  %v80 = vld [vmem:[%s1 + $0x20] sm:$0xff]
  %v81 = vld [vmem:[%s1 + $0x28] sm:$0xff]
  %v82 = vld [vmem:[%s1 + $0x30] sm:$0xf]
  %v83 = vld [vmem:[%s1 + $0x38] sm:$0xf]
  %s84 = scalar_lea.vmem %s1, 64
  %v85 = vld [vmem:[%s84] sm:$0xff]
  %v86 = vld [vmem:[%s84 + $0x8] sm:$0xff]
  %v87 = vld [vmem:[%s84 + $0x10] sm:$0xff]
  %v88 = vld [vmem:[%s84 + $0x18] sm:$0xff]
  %v89 = vld [vmem:[%s84 + $0x20] sm:$0xff]
  %v90 = vld [vmem:[%s84 + $0x28] sm:$0xff]
  %v91 = vld [vmem:[%s84 + $0x30] sm:$0xf]
  %v92 = vld [vmem:[%s84 + $0x38] sm:$0xf]
  %vm124 = vcmask 1046528
  %v125 = vrot.slane %v44, 1
  %v126 = vrot.slane %v45, 1
  %v127 = vsel %vm124, %v125, %v126
  %v128 = vrot.slane %v46, 1
  %v129 = vsel %vm124, %v126, %v128
  %v130 = vrot.slane %v47, 1
  %v131 = vsel %vm124, %v128, %v130
  %v132 = vrot.slane %v48, 1
  %v133 = vsel %vm124, %v130, %v132
  %v134 = vrot.slane %v49, 1
  %v135 = vsel %vm124, %v132, %v134
  %v136 = vrot.slane %v50, 1
  %v137 = vsel %vm124, %v134, %v136
  %v138 = vrot.slane %v51, 1
  %v139 = vsel %vm124, %v136, %v138
  %v140 = vrot.slane %v52, 1
  %v141 = vsel %vm124, %v138, %v140
  %v142 = vrot.slane %v53, 1
  %v143 = vsel %vm124, %v140, %v142
  %v144 = vrot.slane %v54, 1
  %v145 = vsel %vm124, %v142, %v144
  %v146 = vrot.slane %v55, 1
  %v147 = vsel %vm124, %v144, %v146
  %v148 = vrot.slane %v56, 1
  %v149 = vsel %vm124, %v146, %v148
  %v150 = vrot.slane %v57, 1
  %v151 = vsel %vm124, %v148, %v150
  %v152 = vrot.slane %v58, 1
  %v153 = vsel %vm124, %v150, %v152
  %v154 = vrot.slane %v59, 1
  %v155 = vsel %vm124, %v152, %v154
  %v156 = vrot.slane %v60, 1
  %v157 = vsel %vm124, %v154, %v156
  %v158 = vrot.slane %v61, 1
  %v159 = vsel %vm124, %v156, %v158
  %v160 = vrot.slane %v62, 1
  %v161 = vsel %vm124, %v158, %v160
  %v162 = vrot.slane %v63, 1
  %v163 = vsel %vm124, %v160, %v162
  %v164 = vrot.slane %v64, 1
  %v165 = vsel %vm124, %v162, %v164
  %v166 = vrot.slane %v65, 1
  %v167 = vsel %vm124, %v164, %v166
  %v168 = vrot.slane %v66, 1
  %v169 = vsel %vm124, %v166, %v168
  %v170 = vrot.slane %v67, 1
  %v171 = vsel %vm124, %v168, %v170
  %v172 = vrot.slane %v68, 1
  %v173 = vsel %vm124, %v170, %v172
  %v174 = vrot.slane %v69, 1
  %v175 = vsel %vm124, %v172, %v174
  %v176 = vrot.slane %v70, 1
  %v177 = vsel %vm124, %v174, %v176
  %v178 = vrot.slane %v71, 1
  %v179 = vsel %vm124, %v176, %v178
  %v180 = vrot.slane %v72, 1
  %v181 = vsel %vm124, %v178, %v180
  %v182 = vrot.slane %v73, 1
  %v183 = vsel %vm124, %v180, %v182
  %v184 = vrot.slane %v74, 1
  %v185 = vsel %vm124, %v182, %v184
  %vm186 = vcmask 228352
  %v187 = vsel %vm186, %v127, 0
  %v189 = vsel %vm186, %v129, 0
  %v191 = vsel %vm186, %v131, 0
  %v193 = vsel %vm186, %v133, 0
  %v195 = vsel %vm186, %v135, 0
  %v197 = vsel %vm186, %v137, 0
  %v199 = vsel %vm186, %v139, 0
  %v201 = vsel %vm186, %v141, 0
  %v203 = vsel %vm186, %v143, 0
  %v205 = vsel %vm186, %v145, 0
  %v207 = vsel %vm186, %v147, 0
  %v209 = vsel %vm186, %v149, 0
  %v211 = vsel %vm186, %v151, 0
  %v213 = vsel %vm186, %v153, 0
  %v215 = vsel %vm186, %v155, 0
  %v217 = vsel %vm186, %v157, 0
  %v219 = vsel %vm186, %v159, 0
  %v221 = vsel %vm186, %v161, 0
  %v223 = vsel %vm186, %v163, 0
  %v225 = vsel %vm186, %v165, 0
  %v227 = vsel %vm186, %v167, 0
  %v229 = vsel %vm186, %v169, 0
  %v231 = vsel %vm186, %v171, 0
  %v233 = vsel %vm186, %v173, 0
  %v235 = vsel %vm186, %v175, 0
  %v237 = vsel %vm186, %v177, 0
  %v239 = vsel %vm186, %v179, 0
  %v241 = vsel %vm186, %v181, 0
  %v243 = vsel %vm186, %v183, 0
  %v245 = vsel %vm186, %v185, 0
  %vm247 = vcmask 1043456
  %v249 = vsel %vm247, %v91, 0
  %v252 = vsel %vm247, %v92, 0
  %254 = vmatprep.subr.mxu0 0.0
  %255 = vmatpush1.msra.mxu0 0.0
  %256 = vmatprep.subr.mxu0 0.0
  %257 = vmatpush1.msra.mxu0 0.0
  %258 = vmatprep.subr.mxu0 0.0
  %259 = vmatpush1.msra.mxu0 0.0
  %260 = vmatprep.subr.mxu0 0.0
  %261 = vmatpush1.msra.mxu0 0.0
  %262 = vmatprep.subr.mxu0 0.0
  %263 = vmatpush1.msra.mxu0 0.0
  %264 = vmatprep.subr.mxu0 0.0
  %265 = vmatpush1.msra.mxu0 0.0
  %266 = vmatprep.subr.mxu0 0.0
  %267 = vmatpush1.msra.mxu0 0.0
  %268 = vmatprep.subr.mxu0 0.0
  %269 = vmatpush1.msra.mxu0 0.0
  %270 = vmatprep.subr.mxu0 0.0
  %271 = vmatpush1.msra.mxu0 0.0
  %272 = vmatprep.subr.mxu0 0.0
  %273 = vmatpush1.msra.mxu0 0.0
  %274 = vmatprep.subr.mxu0 0.0
  %275 = vmatpush1.msra.mxu0 0.0
  %276 = vmatprep.subr.mxu0 0.0
  %277 = vmatpush1.msra.mxu0 0.0
  %278 = vmatprep.subr.mxu0 %v252
  %279 = vmatpush1.msra.mxu0 %v249
  %280 = vmatprep.subr.mxu0 %v90
  %281 = vmatpush1.msra.mxu0 %v89
  %282 = vmatprep.subr.mxu0 %v88
  %283 = vmatpush1.msra.mxu0 %v87
  %284 = vmatprep.subr.mxu0 %v86
  %285 = vmatpush1.msra.mxu0 %v85
  %286 = vmatprep.subr.mxu0 0.0
  %287 = vmatpush2.msra.mxu0 0.0
  %288 = vmatprep.subr.mxu0 0.0
  %289 = vmatpush2.msra.mxu0 0.0
  %290 = vmatprep.subr.mxu0 0.0
  %291 = vmatpush2.msra.mxu0 0.0
  %292 = vmatprep.subr.mxu0 0.0
  %293 = vmatpush2.msra.mxu0 0.0
  %294 = vmatprep.subr.mxu0 0.0
  %295 = vmatpush2.msra.mxu0 0.0
  %296 = vmatprep.subr.mxu0 0.0
  %297 = vmatpush2.msra.mxu0 0.0
  %298 = vmatprep.subr.mxu0 0.0
  %299 = vmatpush2.msra.mxu0 0.0
  %300 = vmatprep.subr.mxu0 0.0
  %301 = vmatpush2.msra.mxu0 0.0
  %302 = vmatprep.subr.mxu0 0.0
  %303 = vmatpush2.msra.mxu0 0.0
  %304 = vmatprep.subr.mxu0 0.0
  %305 = vmatpush2.msra.mxu0 0.0
  %306 = vmatprep.subr.mxu0 0.0
  %307 = vmatpush2.msra.mxu0 0.0
  %308 = vmatprep.subr.mxu0 0.0
  %309 = vmatpush2.msra.mxu0 0.0
  %310 = vmatprep.subr.mxu0 0.0
  %311 = vmatpush2.msra.mxu0 0.0
  %312 = vmatprep.subr.mxu0 0.0
  %313 = vmatpush2.msra.mxu0 0.0
  %314 = vmatprep.subr.mxu0 0.0
  %315 = vmatpush2.msra.mxu0 0.0
  %316 = vmatprep.subr.mxu0 0.0
  %317 = vmatpush2.msra.mxu0 0.0
  %318 = vmatprep.mubr.f32.mxu0 0.0
  %319 = vmatmul.mubr.f32.gmra.mxu0 %v187
  %v320 = vpop.f32.mrf.mxu0
  %v321 = vadd.f32 0.0, %v320
  %v322 = vpop.f32.mrf.mxu0
  %v323 = vadd.f32 0.0, %v322
  %324 = vmatprep.mubr.f32.mxu0 0.0
  %325 = vmatmul.mubr.f32.gmra.mxu0 %v189
  %v326 = vpop.f32.mrf.mxu0
  %v327 = vadd.f32 0.0, %v326
  %v328 = vpop.f32.mrf.mxu0
  %v329 = vadd.f32 0.0, %v328
  %330 = vmatprep.mubr.f32.mxu0 0.0
  %331 = vmatmul.mubr.f32.gmra.mxu0 %v191
  %v332 = vpop.f32.mrf.mxu0
  %v333 = vadd.f32 0.0, %v332
  %v334 = vpop.f32.mrf.mxu0
  %v335 = vadd.f32 0.0, %v334
  %336 = vmatprep.mubr.f32.mxu0 0.0
  %337 = vmatmul.mubr.f32.gmra.mxu0 %v193
  %v338 = vpop.f32.mrf.mxu0
  %v339 = vadd.f32 0.0, %v338
  %v340 = vpop.f32.mrf.mxu0
  %v341 = vadd.f32 0.0, %v340
  %342 = vmatprep.mubr.f32.mxu0 0.0
  %343 = vmatmul.mubr.f32.gmra.mxu0 %v195
  %v344 = vpop.f32.mrf.mxu0
  %v345 = vadd.f32 0.0, %v344
  %v346 = vpop.f32.mrf.mxu0
  %v347 = vadd.f32 0.0, %v346
  %348 = vmatprep.mubr.f32.mxu0 0.0
  %349 = vmatmul.mubr.f32.gmra.mxu0 %v197
  %v350 = vpop.f32.mrf.mxu0
  %v351 = vadd.f32 0.0, %v350
  %v352 = vpop.f32.mrf.mxu0
  %v353 = vadd.f32 0.0, %v352
  %354 = vmatprep.mubr.f32.mxu0 0.0
  %355 = vmatmul.mubr.f32.gmra.mxu0 %v199
  %v356 = vpop.f32.mrf.mxu0
  %v357 = vadd.f32 0.0, %v356
  %v358 = vpop.f32.mrf.mxu0
  %v359 = vadd.f32 0.0, %v358
  %360 = vmatprep.mubr.f32.mxu0 0.0
  %361 = vmatmul.mubr.f32.gmra.mxu0 %v201
  %v362 = vpop.f32.mrf.mxu0
  %v363 = vadd.f32 0.0, %v362
  %v364 = vpop.f32.mrf.mxu0
  %v365 = vadd.f32 0.0, %v364
  %366 = vmatprep.mubr.f32.mxu0 0.0
  %367 = vmatmul.mubr.f32.gmra.mxu0 %v203
  %v368 = vpop.f32.mrf.mxu0
  %v369 = vadd.f32 0.0, %v368
  %v370 = vpop.f32.mrf.mxu0
  %v371 = vadd.f32 0.0, %v370
  %372 = vmatprep.mubr.f32.mxu0 0.0
  %373 = vmatmul.mubr.f32.gmra.mxu0 %v205
  %v374 = vpop.f32.mrf.mxu0
  %v375 = vadd.f32 0.0, %v374
  %v376 = vpop.f32.mrf.mxu0
  %v377 = vadd.f32 0.0, %v376
  %378 = vmatprep.mubr.f32.mxu0 0.0
  %379 = vmatmul.mubr.f32.gmra.mxu0 %v207
  %v380 = vpop.f32.mrf.mxu0
  %v381 = vadd.f32 0.0, %v380
  %v382 = vpop.f32.mrf.mxu0
  %v383 = vadd.f32 0.0, %v382
  %384 = vmatprep.mubr.f32.mxu0 0.0
  %385 = vmatmul.mubr.f32.gmra.mxu0 %v209
  %v386 = vpop.f32.mrf.mxu0
  %v387 = vadd.f32 0.0, %v386
  %v388 = vpop.f32.mrf.mxu0
  %v389 = vadd.f32 0.0, %v388
  %390 = vmatprep.mubr.f32.mxu0 0.0
  %391 = vmatmul.mubr.f32.gmra.mxu0 %v211
  %v392 = vpop.f32.mrf.mxu0
  %v393 = vadd.f32 0.0, %v392
  %v394 = vpop.f32.mrf.mxu0
  %v395 = vadd.f32 0.0, %v394
  %396 = vmatprep.mubr.f32.mxu0 0.0
  %397 = vmatmul.mubr.f32.gmra.mxu0 %v213
  %v398 = vpop.f32.mrf.mxu0
  %v399 = vadd.f32 0.0, %v398
  %v400 = vpop.f32.mrf.mxu0
  %v401 = vadd.f32 0.0, %v400
  %402 = vmatprep.mubr.f32.mxu0 0.0
  %403 = vmatmul.mubr.f32.gmra.mxu0 %v215
  %v404 = vpop.f32.mrf.mxu0
  %v405 = vadd.f32 0.0, %v404
  %v406 = vpop.f32.mrf.mxu0
  %v407 = vadd.f32 0.0, %v406
  %408 = vmatprep.mubr.f32.mxu0 0.0
  %409 = vmatmul.mubr.f32.gmra.mxu0 %v217
  %v410 = vpop.f32.mrf.mxu0
  %v411 = vadd.f32 0.0, %v410
  %v412 = vpop.f32.mrf.mxu0
  %v413 = vadd.f32 0.0, %v412
  %414 = vmatprep.mubr.f32.mxu0 0.0
  %415 = vmatmul.mubr.f32.gmra.mxu0 %v219
  %v416 = vpop.f32.mrf.mxu0
  %v417 = vadd.f32 0.0, %v416
  %v418 = vpop.f32.mrf.mxu0
  %v419 = vadd.f32 0.0, %v418
  %420 = vmatprep.mubr.f32.mxu0 0.0
  %421 = vmatmul.mubr.f32.gmra.mxu0 %v221
  %v422 = vpop.f32.mrf.mxu0
  %v423 = vadd.f32 0.0, %v422
  %v424 = vpop.f32.mrf.mxu0
  %v425 = vadd.f32 0.0, %v424
  %426 = vmatprep.mubr.f32.mxu0 0.0
  %427 = vmatmul.mubr.f32.gmra.mxu0 %v223
  %v428 = vpop.f32.mrf.mxu0
  %v429 = vadd.f32 0.0, %v428
  %v430 = vpop.f32.mrf.mxu0
  %v431 = vadd.f32 0.0, %v430
  %432 = vmatprep.mubr.f32.mxu0 0.0
  %433 = vmatmul.mubr.f32.gmra.mxu0 %v225
  %v434 = vpop.f32.mrf.mxu0
  %v435 = vadd.f32 0.0, %v434
  %v436 = vpop.f32.mrf.mxu0
  %v437 = vadd.f32 0.0, %v436
  %438 = vmatprep.mubr.f32.mxu0 0.0
  %439 = vmatmul.mubr.f32.gmra.mxu0 %v227
  %v440 = vpop.f32.mrf.mxu0
  %v441 = vadd.f32 0.0, %v440
  %v442 = vpop.f32.mrf.mxu0
  %v443 = vadd.f32 0.0, %v442
  %444 = vmatprep.mubr.f32.mxu0 0.0
  %445 = vmatmul.mubr.f32.gmra.mxu0 %v229
  %v446 = vpop.f32.mrf.mxu0
  %v447 = vadd.f32 0.0, %v446
  %v448 = vpop.f32.mrf.mxu0
  %v449 = vadd.f32 0.0, %v448
  %450 = vmatprep.mubr.f32.mxu0 0.0
  %451 = vmatmul.mubr.f32.gmra.mxu0 %v231
  %v452 = vpop.f32.mrf.mxu0
  %v453 = vadd.f32 0.0, %v452
  %v454 = vpop.f32.mrf.mxu0
  %v455 = vadd.f32 0.0, %v454
  %456 = vmatprep.mubr.f32.mxu0 0.0
  %457 = vmatmul.mubr.f32.gmra.mxu0 %v233
  %v458 = vpop.f32.mrf.mxu0
  %v459 = vadd.f32 0.0, %v458
  %v460 = vpop.f32.mrf.mxu0
  %v461 = vadd.f32 0.0, %v460
  %462 = vmatprep.mubr.f32.mxu0 0.0
  %463 = vmatmul.mubr.f32.gmra.mxu0 %v235
  %v464 = vpop.f32.mrf.mxu0
  %v465 = vadd.f32 0.0, %v464
  %v466 = vpop.f32.mrf.mxu0
  %v467 = vadd.f32 0.0, %v466
  %468 = vmatprep.mubr.f32.mxu0 0.0
  %469 = vmatmul.mubr.f32.gmra.mxu0 %v237
  %v470 = vpop.f32.mrf.mxu0
  %v471 = vadd.f32 0.0, %v470
  %v472 = vpop.f32.mrf.mxu0
  %v473 = vadd.f32 0.0, %v472
  %474 = vmatprep.mubr.f32.mxu0 0.0
  %475 = vmatmul.mubr.f32.gmra.mxu0 %v239
  %v476 = vpop.f32.mrf.mxu0
  %v477 = vadd.f32 0.0, %v476
  %v478 = vpop.f32.mrf.mxu0
  %v479 = vadd.f32 0.0, %v478
  %480 = vmatprep.mubr.f32.mxu0 0.0
  %481 = vmatmul.mubr.f32.gmra.mxu0 %v241
  %v482 = vpop.f32.mrf.mxu0
  %v483 = vadd.f32 0.0, %v482
  %v484 = vpop.f32.mrf.mxu0
  %v485 = vadd.f32 0.0, %v484
  %486 = vmatprep.mubr.f32.mxu0 0.0
  %487 = vmatmul.mubr.f32.gmra.mxu0 %v243
  %v488 = vpop.f32.mrf.mxu0
  %v489 = vadd.f32 0.0, %v488
  %v490 = vpop.f32.mrf.mxu0
  %v491 = vadd.f32 0.0, %v490
  %492 = vmatprep.mubr.f32.mxu0 0.0
  %493 = vmatmul.mubr.f32.gmra.mxu0 %v245
  %v494 = vpop.f32.mrf.mxu0
  %v495 = vadd.f32 0.0, %v494
  %v496 = vpop.f32.mrf.mxu0
  %v497 = vadd.f32 0.0, %v496
  %498 = vdwg.mxu0
  %v499 = vsel %vm186, %v44, 0
  %v501 = vsel %vm186, %v45, 0
  %v503 = vsel %vm186, %v46, 0
  %v505 = vsel %vm186, %v47, 0
  %v507 = vsel %vm186, %v48, 0
  %v509 = vsel %vm186, %v49, 0
  %v511 = vsel %vm186, %v50, 0
  %v513 = vsel %vm186, %v51, 0
  %v515 = vsel %vm186, %v52, 0
  %v517 = vsel %vm186, %v53, 0
  %v519 = vsel %vm186, %v54, 0
  %v521 = vsel %vm186, %v55, 0
  %v523 = vsel %vm186, %v56, 0
  %v525 = vsel %vm186, %v57, 0
  %v527 = vsel %vm186, %v58, 0
  %v529 = vsel %vm186, %v59, 0
  %v531 = vsel %vm186, %v60, 0
  %v533 = vsel %vm186, %v61, 0
  %v535 = vsel %vm186, %v62, 0
  %v537 = vsel %vm186, %v63, 0
  %v539 = vsel %vm186, %v64, 0
  %v541 = vsel %vm186, %v65, 0
  %v543 = vsel %vm186, %v66, 0
  %v545 = vsel %vm186, %v67, 0
  %v547 = vsel %vm186, %v68, 0
  %v549 = vsel %vm186, %v69, 0
  %v551 = vsel %vm186, %v70, 0
  %v553 = vsel %vm186, %v71, 0
  %v555 = vsel %vm186, %v72, 0
  %v557 = vsel %vm186, %v73, 0
  %v560 = vsel %vm247, %v82, 0
  %v563 = vsel %vm247, %v83, 0
  %565 = vmatprep.subr.mxu0 0.0
  %566 = vmatpush1.msra.mxu0 0.0
  %567 = vmatprep.subr.mxu0 0.0
  %568 = vmatpush1.msra.mxu0 0.0
  %569 = vmatprep.subr.mxu0 0.0
  %570 = vmatpush1.msra.mxu0 0.0
  %571 = vmatprep.subr.mxu0 0.0
  %572 = vmatpush1.msra.mxu0 0.0
  %573 = vmatprep.subr.mxu0 0.0
  %574 = vmatpush1.msra.mxu0 0.0
  %575 = vmatprep.subr.mxu0 0.0
  %576 = vmatpush1.msra.mxu0 0.0
  %577 = vmatprep.subr.mxu0 0.0
  %578 = vmatpush1.msra.mxu0 0.0
  %579 = vmatprep.subr.mxu0 0.0
  %580 = vmatpush1.msra.mxu0 0.0
  %581 = vmatprep.subr.mxu0 0.0
  %582 = vmatpush1.msra.mxu0 0.0
  %583 = vmatprep.subr.mxu0 0.0
  %584 = vmatpush1.msra.mxu0 0.0
  %585 = vmatprep.subr.mxu0 0.0
  %586 = vmatpush1.msra.mxu0 0.0
  %587 = vmatprep.subr.mxu0 0.0
  %588 = vmatpush1.msra.mxu0 0.0
  %589 = vmatprep.subr.mxu0 %v563
  %590 = vmatpush1.msra.mxu0 %v560
  %591 = vmatprep.subr.mxu0 %v81
  %592 = vmatpush1.msra.mxu0 %v80
  %593 = vmatprep.subr.mxu0 %v79
  %594 = vmatpush1.msra.mxu0 %v78
  %595 = vmatprep.subr.mxu0 %v77
  %596 = vmatpush1.msra.mxu0 %v76
  %597 = vmatprep.subr.mxu0 0.0
  %598 = vmatpush2.msra.mxu0 0.0
  %599 = vmatprep.subr.mxu0 0.0
  %600 = vmatpush2.msra.mxu0 0.0
  %601 = vmatprep.subr.mxu0 0.0
  %602 = vmatpush2.msra.mxu0 0.0
  %603 = vmatprep.subr.mxu0 0.0
  %604 = vmatpush2.msra.mxu0 0.0
  %605 = vmatprep.subr.mxu0 0.0
  %606 = vmatpush2.msra.mxu0 0.0
  %607 = vmatprep.subr.mxu0 0.0
  %608 = vmatpush2.msra.mxu0 0.0
  %609 = vmatprep.subr.mxu0 0.0
  %610 = vmatpush2.msra.mxu0 0.0
  %611 = vmatprep.subr.mxu0 0.0
  %612 = vmatpush2.msra.mxu0 0.0
  %613 = vmatprep.subr.mxu0 0.0
  %614 = vmatpush2.msra.mxu0 0.0
  %615 = vmatprep.subr.mxu0 0.0
  %616 = vmatpush2.msra.mxu0 0.0
  %617 = vmatprep.subr.mxu0 0.0
  %618 = vmatpush2.msra.mxu0 0.0
  %619 = vmatprep.subr.mxu0 0.0
  %620 = vmatpush2.msra.mxu0 0.0
  %621 = vmatprep.subr.mxu0 0.0
  %622 = vmatpush2.msra.mxu0 0.0
  %623 = vmatprep.subr.mxu0 0.0
  %624 = vmatpush2.msra.mxu0 0.0
  %625 = vmatprep.subr.mxu0 0.0
  %626 = vmatpush2.msra.mxu0 0.0
  %627 = vmatprep.subr.mxu0 0.0
  %628 = vmatpush2.msra.mxu0 0.0
  %629 = vmatprep.mubr.f32.mxu0 0.0
  %630 = vmatmul.mubr.f32.gmra.mxu0 %v499
  %v631 = vpop.f32.mrf.mxu0
  %v632 = vadd.f32 %v321, %v631
  %v633 = vpop.f32.mrf.mxu0
  %v634 = vadd.f32 %v323, %v633
  %635 = vmatprep.mubr.f32.mxu0 0.0
  %636 = vmatmul.mubr.f32.gmra.mxu0 %v501
  %v637 = vpop.f32.mrf.mxu0
  %v638 = vadd.f32 %v327, %v637
  %v639 = vpop.f32.mrf.mxu0
  %v640 = vadd.f32 %v329, %v639
  %641 = vmatprep.mubr.f32.mxu0 0.0
  %642 = vmatmul.mubr.f32.gmra.mxu0 %v503
  %v643 = vpop.f32.mrf.mxu0
  %v644 = vadd.f32 %v333, %v643
  %v645 = vpop.f32.mrf.mxu0
  %v646 = vadd.f32 %v335, %v645
  %647 = vmatprep.mubr.f32.mxu0 0.0
  %648 = vmatmul.mubr.f32.gmra.mxu0 %v505
  %v649 = vpop.f32.mrf.mxu0
  %v650 = vadd.f32 %v339, %v649
  %v651 = vpop.f32.mrf.mxu0
  %v652 = vadd.f32 %v341, %v651
  %653 = vmatprep.mubr.f32.mxu0 0.0
  %654 = vmatmul.mubr.f32.gmra.mxu0 %v507
  %v655 = vpop.f32.mrf.mxu0
  %v656 = vadd.f32 %v345, %v655
  %v657 = vpop.f32.mrf.mxu0
  %v658 = vadd.f32 %v347, %v657
  %659 = vmatprep.mubr.f32.mxu0 0.0
  %660 = vmatmul.mubr.f32.gmra.mxu0 %v509
  %v661 = vpop.f32.mrf.mxu0
  %v662 = vadd.f32 %v351, %v661
  %v663 = vpop.f32.mrf.mxu0
  %v664 = vadd.f32 %v353, %v663
  %665 = vmatprep.mubr.f32.mxu0 0.0
  %666 = vmatmul.mubr.f32.gmra.mxu0 %v511
  %v667 = vpop.f32.mrf.mxu0
  %v668 = vadd.f32 %v357, %v667
  %v669 = vpop.f32.mrf.mxu0
  %v670 = vadd.f32 %v359, %v669
  %671 = vmatprep.mubr.f32.mxu0 0.0
  %672 = vmatmul.mubr.f32.gmra.mxu0 %v513
  %v673 = vpop.f32.mrf.mxu0
  %v674 = vadd.f32 %v363, %v673
  %v675 = vpop.f32.mrf.mxu0
  %v676 = vadd.f32 %v365, %v675
  %677 = vmatprep.mubr.f32.mxu0 0.0
  %678 = vmatmul.mubr.f32.gmra.mxu0 %v515
  %v679 = vpop.f32.mrf.mxu0
  %v680 = vadd.f32 %v369, %v679
  %v681 = vpop.f32.mrf.mxu0
  %v682 = vadd.f32 %v371, %v681
  %683 = vmatprep.mubr.f32.mxu0 0.0
  %684 = vmatmul.mubr.f32.gmra.mxu0 %v517
  %v685 = vpop.f32.mrf.mxu0
  %v686 = vadd.f32 %v375, %v685
  %v687 = vpop.f32.mrf.mxu0
  %v688 = vadd.f32 %v377, %v687
  %689 = vmatprep.mubr.f32.mxu0 0.0
  %690 = vmatmul.mubr.f32.gmra.mxu0 %v519
  %v691 = vpop.f32.mrf.mxu0
  %v692 = vadd.f32 %v381, %v691
  %v693 = vpop.f32.mrf.mxu0
  %v694 = vadd.f32 %v383, %v693
  %695 = vmatprep.mubr.f32.mxu0 0.0
  %696 = vmatmul.mubr.f32.gmra.mxu0 %v521
  %v697 = vpop.f32.mrf.mxu0
  %v698 = vadd.f32 %v387, %v697
  %v699 = vpop.f32.mrf.mxu0
  %v700 = vadd.f32 %v389, %v699
  %701 = vmatprep.mubr.f32.mxu0 0.0
  %702 = vmatmul.mubr.f32.gmra.mxu0 %v523
  %v703 = vpop.f32.mrf.mxu0
  %v704 = vadd.f32 %v393, %v703
  %v705 = vpop.f32.mrf.mxu0
  %v706 = vadd.f32 %v395, %v705
  %707 = vmatprep.mubr.f32.mxu0 0.0
  %708 = vmatmul.mubr.f32.gmra.mxu0 %v525
  %v709 = vpop.f32.mrf.mxu0
  %v710 = vadd.f32 %v399, %v709
  %v711 = vpop.f32.mrf.mxu0
  %v712 = vadd.f32 %v401, %v711
  %713 = vmatprep.mubr.f32.mxu0 0.0
  %714 = vmatmul.mubr.f32.gmra.mxu0 %v527
  %v715 = vpop.f32.mrf.mxu0
  %v716 = vadd.f32 %v405, %v715
  %v717 = vpop.f32.mrf.mxu0
  %v718 = vadd.f32 %v407, %v717
  %719 = vmatprep.mubr.f32.mxu0 0.0
  %720 = vmatmul.mubr.f32.gmra.mxu0 %v529
  %v721 = vpop.f32.mrf.mxu0
  %v722 = vadd.f32 %v411, %v721
  %v723 = vpop.f32.mrf.mxu0
  %v724 = vadd.f32 %v413, %v723
  %725 = vmatprep.mubr.f32.mxu0 0.0
  %726 = vmatmul.mubr.f32.gmra.mxu0 %v531
  %v727 = vpop.f32.mrf.mxu0
  %v728 = vadd.f32 %v417, %v727
  %v729 = vpop.f32.mrf.mxu0
  %v730 = vadd.f32 %v419, %v729
  %731 = vmatprep.mubr.f32.mxu0 0.0
  %732 = vmatmul.mubr.f32.gmra.mxu0 %v533
  %v733 = vpop.f32.mrf.mxu0
  %v734 = vadd.f32 %v423, %v733
  %v735 = vpop.f32.mrf.mxu0
  %v736 = vadd.f32 %v425, %v735
  %737 = vmatprep.mubr.f32.mxu0 0.0
  %738 = vmatmul.mubr.f32.gmra.mxu0 %v535
  %v739 = vpop.f32.mrf.mxu0
  %v740 = vadd.f32 %v429, %v739
  %v741 = vpop.f32.mrf.mxu0
  %v742 = vadd.f32 %v431, %v741
  %743 = vmatprep.mubr.f32.mxu0 0.0
  %744 = vmatmul.mubr.f32.gmra.mxu0 %v537
  %v745 = vpop.f32.mrf.mxu0
  %v746 = vadd.f32 %v435, %v745
  %v747 = vpop.f32.mrf.mxu0
  %v748 = vadd.f32 %v437, %v747
  %749 = vmatprep.mubr.f32.mxu0 0.0
  %750 = vmatmul.mubr.f32.gmra.mxu0 %v539
  %v751 = vpop.f32.mrf.mxu0
  %v752 = vadd.f32 %v441, %v751
  %v753 = vpop.f32.mrf.mxu0
  %v754 = vadd.f32 %v443, %v753
  %755 = vmatprep.mubr.f32.mxu0 0.0
  %756 = vmatmul.mubr.f32.gmra.mxu0 %v541
  %v757 = vpop.f32.mrf.mxu0
  %v758 = vadd.f32 %v447, %v757
  %v759 = vpop.f32.mrf.mxu0
  %v760 = vadd.f32 %v449, %v759
  %761 = vmatprep.mubr.f32.mxu0 0.0
  %762 = vmatmul.mubr.f32.gmra.mxu0 %v543
  %v763 = vpop.f32.mrf.mxu0
  %v764 = vadd.f32 %v453, %v763
  %v765 = vpop.f32.mrf.mxu0
  %v766 = vadd.f32 %v455, %v765
  %767 = vmatprep.mubr.f32.mxu0 0.0
  %768 = vmatmul.mubr.f32.gmra.mxu0 %v545
  %v769 = vpop.f32.mrf.mxu0
  %v770 = vadd.f32 %v459, %v769
  %v771 = vpop.f32.mrf.mxu0
  %v772 = vadd.f32 %v461, %v771
  %773 = vmatprep.mubr.f32.mxu0 0.0
  %774 = vmatmul.mubr.f32.gmra.mxu0 %v547
  %v775 = vpop.f32.mrf.mxu0
  %v776 = vadd.f32 %v465, %v775
  %v777 = vpop.f32.mrf.mxu0
  %v778 = vadd.f32 %v467, %v777
  %779 = vmatprep.mubr.f32.mxu0 0.0
  %780 = vmatmul.mubr.f32.gmra.mxu0 %v549
  %v781 = vpop.f32.mrf.mxu0
  %v782 = vadd.f32 %v471, %v781
  %v783 = vpop.f32.mrf.mxu0
  %v784 = vadd.f32 %v473, %v783
  %785 = vmatprep.mubr.f32.mxu0 0.0
  %786 = vmatmul.mubr.f32.gmra.mxu0 %v551
  %v787 = vpop.f32.mrf.mxu0
  %v788 = vadd.f32 %v477, %v787
  %v789 = vpop.f32.mrf.mxu0
  %v790 = vadd.f32 %v479, %v789
  %791 = vmatprep.mubr.f32.mxu0 0.0
  %792 = vmatmul.mubr.f32.gmra.mxu0 %v553
  %v793 = vpop.f32.mrf.mxu0
  %v794 = vadd.f32 %v483, %v793
  %v795 = vpop.f32.mrf.mxu0
  %v796 = vadd.f32 %v485, %v795
  %797 = vmatprep.mubr.f32.mxu0 0.0
  %798 = vmatmul.mubr.f32.gmra.mxu0 %v555
  %v799 = vpop.f32.mrf.mxu0
  %v800 = vadd.f32 %v489, %v799
  %v801 = vpop.f32.mrf.mxu0
  %v802 = vadd.f32 %v491, %v801
  %803 = vmatprep.mubr.f32.mxu0 0.0
  %804 = vmatmul.mubr.f32.gmra.mxu0 %v557
  %v805 = vpop.f32.mrf.mxu0
  %v806 = vadd.f32 %v495, %v805
  %v807 = vpop.f32.mrf.mxu0
  %v808 = vadd.f32 %v497, %v807
  %809 = vdwg.mxu0
  %s810 = scalar_lea.vmem %s1, 128
  %v811 = vld [vmem:[%s810] sm:$0xff]
  %v812 = vld [vmem:[%s810 + $0x8] sm:$0xff]
  %v813 = vld [vmem:[%s810 + $0x10] sm:$0xff]
  %v814 = vld [vmem:[%s810 + $0x18] sm:$0xff]
  %v815 = vld [vmem:[%s810 + $0x20] sm:$0xff]
  %v816 = vld [vmem:[%s810 + $0x28] sm:$0xff]
  %v817 = vld [vmem:[%s810 + $0x30] sm:$0xf]
  %v818 = vld [vmem:[%s810 + $0x38] sm:$0xf]
  %vm819 = vcmask 1045504
  %v820 = vrot.slane %v44, 2
  %v821 = vrot.slane %v45, 2
  %v822 = vsel %vm819, %v820, %v821
  %v823 = vrot.slane %v46, 2
  %v824 = vsel %vm819, %v821, %v823
  %v825 = vrot.slane %v47, 2
  %v826 = vsel %vm819, %v823, %v825
  %v827 = vrot.slane %v48, 2
  %v828 = vsel %vm819, %v825, %v827
  %v829 = vrot.slane %v49, 2
  %v830 = vsel %vm819, %v827, %v829
  %v831 = vrot.slane %v50, 2
  %v832 = vsel %vm819, %v829, %v831
  %v833 = vrot.slane %v51, 2
  %v834 = vsel %vm819, %v831, %v833
  %v835 = vrot.slane %v52, 2
  %v836 = vsel %vm819, %v833, %v835
  %v837 = vrot.slane %v53, 2
  %v838 = vsel %vm819, %v835, %v837
  %v839 = vrot.slane %v54, 2
  %v840 = vsel %vm819, %v837, %v839
  %v841 = vrot.slane %v55, 2
  %v842 = vsel %vm819, %v839, %v841
  %v843 = vrot.slane %v56, 2
  %v844 = vsel %vm819, %v841, %v843
  %v845 = vrot.slane %v57, 2
  %v846 = vsel %vm819, %v843, %v845
  %v847 = vrot.slane %v58, 2
  %v848 = vsel %vm819, %v845, %v847
  %v849 = vrot.slane %v59, 2
  %v850 = vsel %vm819, %v847, %v849
  %v851 = vrot.slane %v60, 2
  %v852 = vsel %vm819, %v849, %v851
  %v853 = vrot.slane %v61, 2
  %v854 = vsel %vm819, %v851, %v853
  %v855 = vrot.slane %v62, 2
  %v856 = vsel %vm819, %v853, %v855
  %v857 = vrot.slane %v63, 2
  %v858 = vsel %vm819, %v855, %v857
  %v859 = vrot.slane %v64, 2
  %v860 = vsel %vm819, %v857, %v859
  %v861 = vrot.slane %v65, 2
  %v862 = vsel %vm819, %v859, %v861
  %v863 = vrot.slane %v66, 2
  %v864 = vsel %vm819, %v861, %v863
  %v865 = vrot.slane %v67, 2
  %v866 = vsel %vm819, %v863, %v865
  %v867 = vrot.slane %v68, 2
  %v868 = vsel %vm819, %v865, %v867
  %v869 = vrot.slane %v69, 2
  %v870 = vsel %vm819, %v867, %v869
  %v871 = vrot.slane %v70, 2
  %v872 = vsel %vm819, %v869, %v871
  %v873 = vrot.slane %v71, 2
  %v874 = vsel %vm819, %v871, %v873
  %v875 = vrot.slane %v72, 2
  %v876 = vsel %vm819, %v873, %v875
  %v877 = vrot.slane %v73, 2
  %v878 = vsel %vm819, %v875, %v877
  %v879 = vrot.slane %v74, 2
  %v880 = vsel %vm819, %v877, %v879
  %v881 = vsel %vm186, %v822, 0
  %v883 = vsel %vm186, %v824, 0
  %v885 = vsel %vm186, %v826, 0
  %v887 = vsel %vm186, %v828, 0
  %v889 = vsel %vm186, %v830, 0
  %v891 = vsel %vm186, %v832, 0
  %v893 = vsel %vm186, %v834, 0
  %v895 = vsel %vm186, %v836, 0
  %v897 = vsel %vm186, %v838, 0
  %v899 = vsel %vm186, %v840, 0
  %v901 = vsel %vm186, %v842, 0
  %v903 = vsel %vm186, %v844, 0
  %v905 = vsel %vm186, %v846, 0
  %v907 = vsel %vm186, %v848, 0
  %v909 = vsel %vm186, %v850, 0
  %v911 = vsel %vm186, %v852, 0
  %v913 = vsel %vm186, %v854, 0
  %v915 = vsel %vm186, %v856, 0
  %v917 = vsel %vm186, %v858, 0
  %v919 = vsel %vm186, %v860, 0
  %v921 = vsel %vm186, %v862, 0
  %v923 = vsel %vm186, %v864, 0
  %v925 = vsel %vm186, %v866, 0
  %v927 = vsel %vm186, %v868, 0
  %v929 = vsel %vm186, %v870, 0
  %v931 = vsel %vm186, %v872, 0
  %v933 = vsel %vm186, %v874, 0
  %v935 = vsel %vm186, %v876, 0
  %v937 = vsel %vm186, %v878, 0
  %v939 = vsel %vm186, %v880, 0
  %v942 = vsel %vm247, %v817, 0
  %v945 = vsel %vm247, %v818, 0
  %947 = vmatprep.subr.mxu0 0.0
  %948 = vmatpush1.msra.mxu0 0.0
  %949 = vmatprep.subr.mxu0 0.0
  %950 = vmatpush1.msra.mxu0 0.0
  %951 = vmatprep.subr.mxu0 0.0
  %952 = vmatpush1.msra.mxu0 0.0
  %953 = vmatprep.subr.mxu0 0.0
  %954 = vmatpush1.msra.mxu0 0.0
  %955 = vmatprep.subr.mxu0 0.0
  %956 = vmatpush1.msra.mxu0 0.0
  %957 = vmatprep.subr.mxu0 0.0
  %958 = vmatpush1.msra.mxu0 0.0
  %959 = vmatprep.subr.mxu0 0.0
  %960 = vmatpush1.msra.mxu0 0.0
  %961 = vmatprep.subr.mxu0 0.0
  %962 = vmatpush1.msra.mxu0 0.0
  %963 = vmatprep.subr.mxu0 0.0
  %964 = vmatpush1.msra.mxu0 0.0
  %965 = vmatprep.subr.mxu0 0.0
  %966 = vmatpush1.msra.mxu0 0.0
  %967 = vmatprep.subr.mxu0 0.0
  %968 = vmatpush1.msra.mxu0 0.0
  %969 = vmatprep.subr.mxu0 0.0
  %970 = vmatpush1.msra.mxu0 0.0
  %971 = vmatprep.subr.mxu0 %v945
  %972 = vmatpush1.msra.mxu0 %v942
  %973 = vmatprep.subr.mxu0 %v816
  %974 = vmatpush1.msra.mxu0 %v815
  %975 = vmatprep.subr.mxu0 %v814
  %976 = vmatpush1.msra.mxu0 %v813
  %977 = vmatprep.subr.mxu0 %v812
  %978 = vmatpush1.msra.mxu0 %v811
  %979 = vmatprep.subr.mxu0 0.0
  %980 = vmatpush2.msra.mxu0 0.0
  %981 = vmatprep.subr.mxu0 0.0
  %982 = vmatpush2.msra.mxu0 0.0
  %983 = vmatprep.subr.mxu0 0.0
  %984 = vmatpush2.msra.mxu0 0.0
  %985 = vmatprep.subr.mxu0 0.0
  %986 = vmatpush2.msra.mxu0 0.0
  %987 = vmatprep.subr.mxu0 0.0
  %988 = vmatpush2.msra.mxu0 0.0
  %989 = vmatprep.subr.mxu0 0.0
  %990 = vmatpush2.msra.mxu0 0.0
  %991 = vmatprep.subr.mxu0 0.0
  %992 = vmatpush2.msra.mxu0 0.0
  %993 = vmatprep.subr.mxu0 0.0
  %994 = vmatpush2.msra.mxu0 0.0
  %995 = vmatprep.subr.mxu0 0.0
  %996 = vmatpush2.msra.mxu0 0.0
  %997 = vmatprep.subr.mxu0 0.0
  %998 = vmatpush2.msra.mxu0 0.0
  %999 = vmatprep.subr.mxu0 0.0
  %1000 = vmatpush2.msra.mxu0 0.0
  %1001 = vmatprep.subr.mxu0 0.0
  %1002 = vmatpush2.msra.mxu0 0.0
  %1003 = vmatprep.subr.mxu0 0.0
  %1004 = vmatpush2.msra.mxu0 0.0
  %1005 = vmatprep.subr.mxu0 0.0
  %1006 = vmatpush2.msra.mxu0 0.0
  %1007 = vmatprep.subr.mxu0 0.0
  %1008 = vmatpush2.msra.mxu0 0.0
  %1009 = vmatprep.subr.mxu0 0.0
  %1010 = vmatpush2.msra.mxu0 0.0
  %1011 = vmatprep.mubr.f32.mxu0 0.0
  %1012 = vmatmul.mubr.f32.gmra.mxu0 %v881
  %v1013 = vpop.f32.mrf.mxu0
  %v1014 = vadd.f32 0.0, %v1013
  %v1015 = vpop.f32.mrf.mxu0
  %v1016 = vadd.f32 0.0, %v1015
  %1017 = vmatprep.mubr.f32.mxu0 0.0
  %1018 = vmatmul.mubr.f32.gmra.mxu0 %v883
  %v1019 = vpop.f32.mrf.mxu0
  %v1020 = vadd.f32 0.0, %v1019
  %v1021 = vpop.f32.mrf.mxu0
  %v1022 = vadd.f32 0.0, %v1021
  %1023 = vmatprep.mubr.f32.mxu0 0.0
  %1024 = vmatmul.mubr.f32.gmra.mxu0 %v885
  %v1025 = vpop.f32.mrf.mxu0
  %v1026 = vadd.f32 0.0, %v1025
  %v1027 = vpop.f32.mrf.mxu0
  %v1028 = vadd.f32 0.0, %v1027
  %1029 = vmatprep.mubr.f32.mxu0 0.0
  %1030 = vmatmul.mubr.f32.gmra.mxu0 %v887
  %v1031 = vpop.f32.mrf.mxu0
  %v1032 = vadd.f32 0.0, %v1031
  %v1033 = vpop.f32.mrf.mxu0
  %v1034 = vadd.f32 0.0, %v1033
  %1035 = vmatprep.mubr.f32.mxu0 0.0
  %1036 = vmatmul.mubr.f32.gmra.mxu0 %v889
  %v1037 = vpop.f32.mrf.mxu0
  %v1038 = vadd.f32 0.0, %v1037
  %v1039 = vpop.f32.mrf.mxu0
  %v1040 = vadd.f32 0.0, %v1039
  %1041 = vmatprep.mubr.f32.mxu0 0.0
  %1042 = vmatmul.mubr.f32.gmra.mxu0 %v891
  %v1043 = vpop.f32.mrf.mxu0
  %v1044 = vadd.f32 0.0, %v1043
  %v1045 = vpop.f32.mrf.mxu0
  %v1046 = vadd.f32 0.0, %v1045
  %1047 = vmatprep.mubr.f32.mxu0 0.0
  %1048 = vmatmul.mubr.f32.gmra.mxu0 %v893
  %v1049 = vpop.f32.mrf.mxu0
  %v1050 = vadd.f32 0.0, %v1049
  %v1051 = vpop.f32.mrf.mxu0
  %v1052 = vadd.f32 0.0, %v1051
  %1053 = vmatprep.mubr.f32.mxu0 0.0
  %1054 = vmatmul.mubr.f32.gmra.mxu0 %v895
  %v1055 = vpop.f32.mrf.mxu0
  %v1056 = vadd.f32 0.0, %v1055
  %v1057 = vpop.f32.mrf.mxu0
  %v1058 = vadd.f32 0.0, %v1057
  %1059 = vmatprep.mubr.f32.mxu0 0.0
  %1060 = vmatmul.mubr.f32.gmra.mxu0 %v897
  %v1061 = vpop.f32.mrf.mxu0
  %v1062 = vadd.f32 0.0, %v1061
  %v1063 = vpop.f32.mrf.mxu0
  %v1064 = vadd.f32 0.0, %v1063
  %1065 = vmatprep.mubr.f32.mxu0 0.0
  %1066 = vmatmul.mubr.f32.gmra.mxu0 %v899
  %v1067 = vpop.f32.mrf.mxu0
  %v1068 = vadd.f32 0.0, %v1067
  %v1069 = vpop.f32.mrf.mxu0
  %v1070 = vadd.f32 0.0, %v1069
  %1071 = vmatprep.mubr.f32.mxu0 0.0
  %1072 = vmatmul.mubr.f32.gmra.mxu0 %v901
  %v1073 = vpop.f32.mrf.mxu0
  %v1074 = vadd.f32 0.0, %v1073
  %v1075 = vpop.f32.mrf.mxu0
  %v1076 = vadd.f32 0.0, %v1075
  %1077 = vmatprep.mubr.f32.mxu0 0.0
  %1078 = vmatmul.mubr.f32.gmra.mxu0 %v903
  %v1079 = vpop.f32.mrf.mxu0
  %v1080 = vadd.f32 0.0, %v1079
  %v1081 = vpop.f32.mrf.mxu0
  %v1082 = vadd.f32 0.0, %v1081
  %1083 = vmatprep.mubr.f32.mxu0 0.0
  %1084 = vmatmul.mubr.f32.gmra.mxu0 %v905
  %v1085 = vpop.f32.mrf.mxu0
  %v1086 = vadd.f32 0.0, %v1085
  %v1087 = vpop.f32.mrf.mxu0
  %v1088 = vadd.f32 0.0, %v1087
  %1089 = vmatprep.mubr.f32.mxu0 0.0
  %1090 = vmatmul.mubr.f32.gmra.mxu0 %v907
  %v1091 = vpop.f32.mrf.mxu0
  %v1092 = vadd.f32 0.0, %v1091
  %v1093 = vpop.f32.mrf.mxu0
  %v1094 = vadd.f32 0.0, %v1093
  %1095 = vmatprep.mubr.f32.mxu0 0.0
  %1096 = vmatmul.mubr.f32.gmra.mxu0 %v909
  %v1097 = vpop.f32.mrf.mxu0
  %v1098 = vadd.f32 0.0, %v1097
  %v1099 = vpop.f32.mrf.mxu0
  %v1100 = vadd.f32 0.0, %v1099
  %1101 = vmatprep.mubr.f32.mxu0 0.0
  %1102 = vmatmul.mubr.f32.gmra.mxu0 %v911
  %v1103 = vpop.f32.mrf.mxu0
  %v1104 = vadd.f32 0.0, %v1103
  %v1105 = vpop.f32.mrf.mxu0
  %v1106 = vadd.f32 0.0, %v1105
  %1107 = vmatprep.mubr.f32.mxu0 0.0
  %1108 = vmatmul.mubr.f32.gmra.mxu0 %v913
  %v1109 = vpop.f32.mrf.mxu0
  %v1110 = vadd.f32 0.0, %v1109
  %v1111 = vpop.f32.mrf.mxu0
  %v1112 = vadd.f32 0.0, %v1111
  %1113 = vmatprep.mubr.f32.mxu0 0.0
  %1114 = vmatmul.mubr.f32.gmra.mxu0 %v915
  %v1115 = vpop.f32.mrf.mxu0
  %v1116 = vadd.f32 0.0, %v1115
  %v1117 = vpop.f32.mrf.mxu0
  %v1118 = vadd.f32 0.0, %v1117
  %1119 = vmatprep.mubr.f32.mxu0 0.0
  %1120 = vmatmul.mubr.f32.gmra.mxu0 %v917
  %v1121 = vpop.f32.mrf.mxu0
  %v1122 = vadd.f32 0.0, %v1121
  %v1123 = vpop.f32.mrf.mxu0
  %v1124 = vadd.f32 0.0, %v1123
  %1125 = vmatprep.mubr.f32.mxu0 0.0
  %1126 = vmatmul.mubr.f32.gmra.mxu0 %v919
  %v1127 = vpop.f32.mrf.mxu0
  %v1128 = vadd.f32 0.0, %v1127
  %v1129 = vpop.f32.mrf.mxu0
  %v1130 = vadd.f32 0.0, %v1129
  %1131 = vmatprep.mubr.f32.mxu0 0.0
  %1132 = vmatmul.mubr.f32.gmra.mxu0 %v921
  %v1133 = vpop.f32.mrf.mxu0
  %v1134 = vadd.f32 0.0, %v1133
  %v1135 = vpop.f32.mrf.mxu0
  %v1136 = vadd.f32 0.0, %v1135
  %1137 = vmatprep.mubr.f32.mxu0 0.0
  %1138 = vmatmul.mubr.f32.gmra.mxu0 %v923
  %v1139 = vpop.f32.mrf.mxu0
  %v1140 = vadd.f32 0.0, %v1139
  %v1141 = vpop.f32.mrf.mxu0
  %v1142 = vadd.f32 0.0, %v1141
  %1143 = vmatprep.mubr.f32.mxu0 0.0
  %1144 = vmatmul.mubr.f32.gmra.mxu0 %v925
  %v1145 = vpop.f32.mrf.mxu0
  %v1146 = vadd.f32 0.0, %v1145
  %v1147 = vpop.f32.mrf.mxu0
  %v1148 = vadd.f32 0.0, %v1147
  %1149 = vmatprep.mubr.f32.mxu0 0.0
  %1150 = vmatmul.mubr.f32.gmra.mxu0 %v927
  %v1151 = vpop.f32.mrf.mxu0
  %v1152 = vadd.f32 0.0, %v1151
  %v1153 = vpop.f32.mrf.mxu0
  %v1154 = vadd.f32 0.0, %v1153
  %1155 = vmatprep.mubr.f32.mxu0 0.0
  %1156 = vmatmul.mubr.f32.gmra.mxu0 %v929
  %v1157 = vpop.f32.mrf.mxu0
  %v1158 = vadd.f32 0.0, %v1157
  %v1159 = vpop.f32.mrf.mxu0
  %v1160 = vadd.f32 0.0, %v1159
  %1161 = vmatprep.mubr.f32.mxu0 0.0
  %1162 = vmatmul.mubr.f32.gmra.mxu0 %v931
  %v1163 = vpop.f32.mrf.mxu0
  %v1164 = vadd.f32 0.0, %v1163
  %v1165 = vpop.f32.mrf.mxu0
  %v1166 = vadd.f32 0.0, %v1165
  %1167 = vmatprep.mubr.f32.mxu0 0.0
  %1168 = vmatmul.mubr.f32.gmra.mxu0 %v933
  %v1169 = vpop.f32.mrf.mxu0
  %v1170 = vadd.f32 0.0, %v1169
  %v1171 = vpop.f32.mrf.mxu0
  %v1172 = vadd.f32 0.0, %v1171
  %1173 = vmatprep.mubr.f32.mxu0 0.0
  %1174 = vmatmul.mubr.f32.gmra.mxu0 %v935
  %v1175 = vpop.f32.mrf.mxu0
  %v1176 = vadd.f32 0.0, %v1175
  %v1177 = vpop.f32.mrf.mxu0
  %v1178 = vadd.f32 0.0, %v1177
  %1179 = vmatprep.mubr.f32.mxu0 0.0
  %1180 = vmatmul.mubr.f32.gmra.mxu0 %v937
  %v1181 = vpop.f32.mrf.mxu0
  %v1182 = vadd.f32 0.0, %v1181
  %v1183 = vpop.f32.mrf.mxu0
  %v1184 = vadd.f32 0.0, %v1183
  %1185 = vmatprep.mubr.f32.mxu0 0.0
  %1186 = vmatmul.mubr.f32.gmra.mxu0 %v939
  %v1187 = vpop.f32.mrf.mxu0
  %v1188 = vadd.f32 0.0, %v1187
  %v1189 = vpop.f32.mrf.mxu0
  %v1190 = vadd.f32 0.0, %v1189
  %1191 = vdwg.mxu0
  %v1192 = vadd.f32 %v632, %v1014
  %v1193 = vadd.f32 %v634, %v1016
  %v1194 = vadd.f32 %v638, %v1020
  %v1195 = vadd.f32 %v640, %v1022
  %v1196 = vadd.f32 %v644, %v1026
  %v1197 = vadd.f32 %v646, %v1028
  %v1198 = vadd.f32 %v650, %v1032
  %v1199 = vadd.f32 %v652, %v1034
  %v1200 = vadd.f32 %v656, %v1038
  %v1201 = vadd.f32 %v658, %v1040
  %v1202 = vadd.f32 %v662, %v1044
  %v1203 = vadd.f32 %v664, %v1046
  %v1204 = vadd.f32 %v668, %v1050
  %v1205 = vadd.f32 %v670, %v1052
  %v1206 = vadd.f32 %v674, %v1056
  %v1207 = vadd.f32 %v676, %v1058
  %v1208 = vadd.f32 %v680, %v1062
  %v1209 = vadd.f32 %v682, %v1064
  %v1210 = vadd.f32 %v686, %v1068
  %v1211 = vadd.f32 %v688, %v1070
  %v1212 = vadd.f32 %v692, %v1074
  %v1213 = vadd.f32 %v694, %v1076
  %v1214 = vadd.f32 %v698, %v1080
  %v1215 = vadd.f32 %v700, %v1082
  %v1216 = vadd.f32 %v704, %v1086
  %v1217 = vadd.f32 %v706, %v1088
  %v1218 = vadd.f32 %v710, %v1092
  %v1219 = vadd.f32 %v712, %v1094
  %v1220 = vadd.f32 %v716, %v1098
  %v1221 = vadd.f32 %v718, %v1100
  %v1222 = vadd.f32 %v722, %v1104
  %v1223 = vadd.f32 %v724, %v1106
  %v1224 = vadd.f32 %v728, %v1110
  %v1225 = vadd.f32 %v730, %v1112
  %v1226 = vadd.f32 %v734, %v1116
  %v1227 = vadd.f32 %v736, %v1118
  %v1228 = vadd.f32 %v740, %v1122
  %v1229 = vadd.f32 %v742, %v1124
  %v1230 = vadd.f32 %v746, %v1128
  %v1231 = vadd.f32 %v748, %v1130
  %v1232 = vadd.f32 %v752, %v1134
  %v1233 = vadd.f32 %v754, %v1136
  %v1234 = vadd.f32 %v758, %v1140
  %v1235 = vadd.f32 %v760, %v1142
  %v1236 = vadd.f32 %v764, %v1146
  %v1237 = vadd.f32 %v766, %v1148
  %v1238 = vadd.f32 %v770, %v1152
  %v1239 = vadd.f32 %v772, %v1154
  %v1240 = vadd.f32 %v776, %v1158
  %v1241 = vadd.f32 %v778, %v1160
  %v1242 = vadd.f32 %v782, %v1164
  %v1243 = vadd.f32 %v784, %v1166
  %v1244 = vadd.f32 %v788, %v1170
  %v1245 = vadd.f32 %v790, %v1172
  %v1246 = vadd.f32 %v794, %v1176
  %v1247 = vadd.f32 %v796, %v1178
  %v1248 = vadd.f32 %v800, %v1182
  %v1249 = vadd.f32 %v802, %v1184
  %v1250 = vadd.f32 %v806, %v1188
  %v1251 = vadd.f32 %v808, %v1190
  %s1252 = scalar_lea.vmem %s1, 192
  %v1253 = vld [vmem:[%s1252] sm:$0xff]
  %v1254 = vld [vmem:[%s1252 + $0x8] sm:$0xff]
  %v1255 = vld [vmem:[%s1252 + $0x10] sm:$0xff]
  %v1256 = vld [vmem:[%s1252 + $0x18] sm:$0xff]
  %v1257 = vld [vmem:[%s1252 + $0x20] sm:$0xff]
  %v1258 = vld [vmem:[%s1252 + $0x28] sm:$0xff]
  %v1259 = vld [vmem:[%s1252 + $0x30] sm:$0xf]
  %v1260 = vld [vmem:[%s1252 + $0x38] sm:$0xf]
  %vm1261 = vcmask 1044480
  %v1262 = vrot.slane %v44, 3
  %v1263 = vrot.slane %v45, 3
  %v1264 = vsel %vm1261, %v1262, %v1263
  %v1265 = vrot.slane %v46, 3
  %v1266 = vsel %vm1261, %v1263, %v1265
  %v1267 = vrot.slane %v47, 3
  %v1268 = vsel %vm1261, %v1265, %v1267
  %v1269 = vrot.slane %v48, 3
  %v1270 = vsel %vm1261, %v1267, %v1269
  %v1271 = vrot.slane %v49, 3
  %v1272 = vsel %vm1261, %v1269, %v1271
  %v1273 = vrot.slane %v50, 3
  %v1274 = vsel %vm1261, %v1271, %v1273
  %v1275 = vrot.slane %v51, 3
  %v1276 = vsel %vm1261, %v1273, %v1275
  %v1277 = vrot.slane %v52, 3
  %v1278 = vsel %vm1261, %v1275, %v1277
  %v1279 = vrot.slane %v53, 3
  %v1280 = vsel %vm1261, %v1277, %v1279
  %v1281 = vrot.slane %v54, 3
  %v1282 = vsel %vm1261, %v1279, %v1281
  %v1283 = vrot.slane %v55, 3
  %v1284 = vsel %vm1261, %v1281, %v1283
  %v1285 = vrot.slane %v56, 3
  %v1286 = vsel %vm1261, %v1283, %v1285
  %v1287 = vrot.slane %v57, 3
  %v1288 = vsel %vm1261, %v1285, %v1287
  %v1289 = vrot.slane %v58, 3
  %v1290 = vsel %vm1261, %v1287, %v1289
  %v1291 = vrot.slane %v59, 3
  %v1292 = vsel %vm1261, %v1289, %v1291
  %v1293 = vrot.slane %v60, 3
  %v1294 = vsel %vm1261, %v1291, %v1293
  %v1295 = vrot.slane %v61, 3
  %v1296 = vsel %vm1261, %v1293, %v1295
  %v1297 = vrot.slane %v62, 3
  %v1298 = vsel %vm1261, %v1295, %v1297
  %v1299 = vrot.slane %v63, 3
  %v1300 = vsel %vm1261, %v1297, %v1299
  %v1301 = vrot.slane %v64, 3
  %v1302 = vsel %vm1261, %v1299, %v1301
  %v1303 = vrot.slane %v65, 3
  %v1304 = vsel %vm1261, %v1301, %v1303
  %v1305 = vrot.slane %v66, 3
  %v1306 = vsel %vm1261, %v1303, %v1305
  %v1307 = vrot.slane %v67, 3
  %v1308 = vsel %vm1261, %v1305, %v1307
  %v1309 = vrot.slane %v68, 3
  %v1310 = vsel %vm1261, %v1307, %v1309
  %v1311 = vrot.slane %v69, 3
  %v1312 = vsel %vm1261, %v1309, %v1311
  %v1313 = vrot.slane %v70, 3
  %v1314 = vsel %vm1261, %v1311, %v1313
  %v1315 = vrot.slane %v71, 3
  %v1316 = vsel %vm1261, %v1313, %v1315
  %v1317 = vrot.slane %v72, 3
  %v1318 = vsel %vm1261, %v1315, %v1317
  %v1319 = vrot.slane %v73, 3
  %v1320 = vsel %vm1261, %v1317, %v1319
  %v1321 = vrot.slane %v74, 3
  %v1322 = vsel %vm1261, %v1319, %v1321
  %v1323 = vsel %vm186, %v1264, 0
  %v1325 = vsel %vm186, %v1266, 0
  %v1327 = vsel %vm186, %v1268, 0
  %v1329 = vsel %vm186, %v1270, 0
  %v1331 = vsel %vm186, %v1272, 0
  %v1333 = vsel %vm186, %v1274, 0
  %v1335 = vsel %vm186, %v1276, 0
  %v1337 = vsel %vm186, %v1278, 0
  %v1339 = vsel %vm186, %v1280, 0
  %v1341 = vsel %vm186, %v1282, 0
  %v1343 = vsel %vm186, %v1284, 0
  %v1345 = vsel %vm186, %v1286, 0
  %v1347 = vsel %vm186, %v1288, 0
  %v1349 = vsel %vm186, %v1290, 0
  %v1351 = vsel %vm186, %v1292, 0
  %v1353 = vsel %vm186, %v1294, 0
  %v1355 = vsel %vm186, %v1296, 0
  %v1357 = vsel %vm186, %v1298, 0
  %v1359 = vsel %vm186, %v1300, 0
  %v1361 = vsel %vm186, %v1302, 0
  %v1363 = vsel %vm186, %v1304, 0
  %v1365 = vsel %vm186, %v1306, 0
  %v1367 = vsel %vm186, %v1308, 0
  %v1369 = vsel %vm186, %v1310, 0
  %v1371 = vsel %vm186, %v1312, 0
  %v1373 = vsel %vm186, %v1314, 0
  %v1375 = vsel %vm186, %v1316, 0
  %v1377 = vsel %vm186, %v1318, 0
  %v1379 = vsel %vm186, %v1320, 0
  %v1381 = vsel %vm186, %v1322, 0
  %v1384 = vsel %vm247, %v1259, 0
  %v1387 = vsel %vm247, %v1260, 0
  %1389 = vmatprep.subr.mxu0 0.0
  %1390 = vmatpush1.msra.mxu0 0.0
  %1391 = vmatprep.subr.mxu0 0.0
  %1392 = vmatpush1.msra.mxu0 0.0
  %1393 = vmatprep.subr.mxu0 0.0
  %1394 = vmatpush1.msra.mxu0 0.0
  %1395 = vmatprep.subr.mxu0 0.0
  %1396 = vmatpush1.msra.mxu0 0.0
  %1397 = vmatprep.subr.mxu0 0.0
  %1398 = vmatpush1.msra.mxu0 0.0
  %1399 = vmatprep.subr.mxu0 0.0
  %1400 = vmatpush1.msra.mxu0 0.0
  %1401 = vmatprep.subr.mxu0 0.0
  %1402 = vmatpush1.msra.mxu0 0.0
  %1403 = vmatprep.subr.mxu0 0.0
  %1404 = vmatpush1.msra.mxu0 0.0
  %1405 = vmatprep.subr.mxu0 0.0
  %1406 = vmatpush1.msra.mxu0 0.0
  %1407 = vmatprep.subr.mxu0 0.0
  %1408 = vmatpush1.msra.mxu0 0.0
  %1409 = vmatprep.subr.mxu0 0.0
  %1410 = vmatpush1.msra.mxu0 0.0
  %1411 = vmatprep.subr.mxu0 0.0
  %1412 = vmatpush1.msra.mxu0 0.0
  %1413 = vmatprep.subr.mxu0 %v1387
  %1414 = vmatpush1.msra.mxu0 %v1384
  %1415 = vmatprep.subr.mxu0 %v1258
  %1416 = vmatpush1.msra.mxu0 %v1257
  %1417 = vmatprep.subr.mxu0 %v1256
  %1418 = vmatpush1.msra.mxu0 %v1255
  %1419 = vmatprep.subr.mxu0 %v1254
  %1420 = vmatpush1.msra.mxu0 %v1253
  %1421 = vmatprep.subr.mxu0 0.0
  %1422 = vmatpush2.msra.mxu0 0.0
  %1423 = vmatprep.subr.mxu0 0.0
  %1424 = vmatpush2.msra.mxu0 0.0
  %1425 = vmatprep.subr.mxu0 0.0
  %1426 = vmatpush2.msra.mxu0 0.0
  %1427 = vmatprep.subr.mxu0 0.0
  %1428 = vmatpush2.msra.mxu0 0.0
  %1429 = vmatprep.subr.mxu0 0.0
  %1430 = vmatpush2.msra.mxu0 0.0
  %1431 = vmatprep.subr.mxu0 0.0
  %1432 = vmatpush2.msra.mxu0 0.0
  %1433 = vmatprep.subr.mxu0 0.0
  %1434 = vmatpush2.msra.mxu0 0.0
  %1435 = vmatprep.subr.mxu0 0.0
  %1436 = vmatpush2.msra.mxu0 0.0
  %1437 = vmatprep.subr.mxu0 0.0
  %1438 = vmatpush2.msra.mxu0 0.0
  %1439 = vmatprep.subr.mxu0 0.0
  %1440 = vmatpush2.msra.mxu0 0.0
  %1441 = vmatprep.subr.mxu0 0.0
  %1442 = vmatpush2.msra.mxu0 0.0
  %1443 = vmatprep.subr.mxu0 0.0
  %1444 = vmatpush2.msra.mxu0 0.0
  %1445 = vmatprep.subr.mxu0 0.0
  %1446 = vmatpush2.msra.mxu0 0.0
  %1447 = vmatprep.subr.mxu0 0.0
  %1448 = vmatpush2.msra.mxu0 0.0
  %1449 = vmatprep.subr.mxu0 0.0
  %1450 = vmatpush2.msra.mxu0 0.0
  %1451 = vmatprep.subr.mxu0 0.0
  %1452 = vmatpush2.msra.mxu0 0.0
  %1453 = vmatprep.mubr.f32.mxu0 0.0
  %1454 = vmatmul.mubr.f32.gmra.mxu0 %v1323
  %v1455 = vpop.f32.mrf.mxu0
  %v1456 = vadd.f32 0.0, %v1455
  %v1457 = vpop.f32.mrf.mxu0
  %v1458 = vadd.f32 0.0, %v1457
  %1459 = vmatprep.mubr.f32.mxu0 0.0
  %1460 = vmatmul.mubr.f32.gmra.mxu0 %v1325
  %v1461 = vpop.f32.mrf.mxu0
  %v1462 = vadd.f32 0.0, %v1461
  %v1463 = vpop.f32.mrf.mxu0
  %v1464 = vadd.f32 0.0, %v1463
  %1465 = vmatprep.mubr.f32.mxu0 0.0
  %1466 = vmatmul.mubr.f32.gmra.mxu0 %v1327
  %v1467 = vpop.f32.mrf.mxu0
  %v1468 = vadd.f32 0.0, %v1467
  %v1469 = vpop.f32.mrf.mxu0
  %v1470 = vadd.f32 0.0, %v1469
  %1471 = vmatprep.mubr.f32.mxu0 0.0
  %1472 = vmatmul.mubr.f32.gmra.mxu0 %v1329
  %v1473 = vpop.f32.mrf.mxu0
  %v1474 = vadd.f32 0.0, %v1473
  %v1475 = vpop.f32.mrf.mxu0
  %v1476 = vadd.f32 0.0, %v1475
  %1477 = vmatprep.mubr.f32.mxu0 0.0
  %1478 = vmatmul.mubr.f32.gmra.mxu0 %v1331
  %v1479 = vpop.f32.mrf.mxu0
  %v1480 = vadd.f32 0.0, %v1479
  %v1481 = vpop.f32.mrf.mxu0
  %v1482 = vadd.f32 0.0, %v1481
  %1483 = vmatprep.mubr.f32.mxu0 0.0
  %1484 = vmatmul.mubr.f32.gmra.mxu0 %v1333
  %v1485 = vpop.f32.mrf.mxu0
  %v1486 = vadd.f32 0.0, %v1485
  %v1487 = vpop.f32.mrf.mxu0
  %v1488 = vadd.f32 0.0, %v1487
  %1489 = vmatprep.mubr.f32.mxu0 0.0
  %1490 = vmatmul.mubr.f32.gmra.mxu0 %v1335
  %v1491 = vpop.f32.mrf.mxu0
  %v1492 = vadd.f32 0.0, %v1491
  %v1493 = vpop.f32.mrf.mxu0
  %v1494 = vadd.f32 0.0, %v1493
  %1495 = vmatprep.mubr.f32.mxu0 0.0
  %1496 = vmatmul.mubr.f32.gmra.mxu0 %v1337
  %v1497 = vpop.f32.mrf.mxu0
  %v1498 = vadd.f32 0.0, %v1497
  %v1499 = vpop.f32.mrf.mxu0
  %v1500 = vadd.f32 0.0, %v1499
  %1501 = vmatprep.mubr.f32.mxu0 0.0
  %1502 = vmatmul.mubr.f32.gmra.mxu0 %v1339
  %v1503 = vpop.f32.mrf.mxu0
  %v1504 = vadd.f32 0.0, %v1503
  %v1505 = vpop.f32.mrf.mxu0
  %v1506 = vadd.f32 0.0, %v1505
  %1507 = vmatprep.mubr.f32.mxu0 0.0
  %1508 = vmatmul.mubr.f32.gmra.mxu0 %v1341
  %v1509 = vpop.f32.mrf.mxu0
  %v1510 = vadd.f32 0.0, %v1509
  %v1511 = vpop.f32.mrf.mxu0
  %v1512 = vadd.f32 0.0, %v1511
  %1513 = vmatprep.mubr.f32.mxu0 0.0
  %1514 = vmatmul.mubr.f32.gmra.mxu0 %v1343
  %v1515 = vpop.f32.mrf.mxu0
  %v1516 = vadd.f32 0.0, %v1515
  %v1517 = vpop.f32.mrf.mxu0
  %v1518 = vadd.f32 0.0, %v1517
  %1519 = vmatprep.mubr.f32.mxu0 0.0
  %1520 = vmatmul.mubr.f32.gmra.mxu0 %v1345
  %v1521 = vpop.f32.mrf.mxu0
  %v1522 = vadd.f32 0.0, %v1521
  %v1523 = vpop.f32.mrf.mxu0
  %v1524 = vadd.f32 0.0, %v1523
  %1525 = vmatprep.mubr.f32.mxu0 0.0
  %1526 = vmatmul.mubr.f32.gmra.mxu0 %v1347
  %v1527 = vpop.f32.mrf.mxu0
  %v1528 = vadd.f32 0.0, %v1527
  %v1529 = vpop.f32.mrf.mxu0
  %v1530 = vadd.f32 0.0, %v1529
  %1531 = vmatprep.mubr.f32.mxu0 0.0
  %1532 = vmatmul.mubr.f32.gmra.mxu0 %v1349
  %v1533 = vpop.f32.mrf.mxu0
  %v1534 = vadd.f32 0.0, %v1533
  %v1535 = vpop.f32.mrf.mxu0
  %v1536 = vadd.f32 0.0, %v1535
  %1537 = vmatprep.mubr.f32.mxu0 0.0
  %1538 = vmatmul.mubr.f32.gmra.mxu0 %v1351
  %v1539 = vpop.f32.mrf.mxu0
  %v1540 = vadd.f32 0.0, %v1539
  %v1541 = vpop.f32.mrf.mxu0
  %v1542 = vadd.f32 0.0, %v1541
  %1543 = vmatprep.mubr.f32.mxu0 0.0
  %1544 = vmatmul.mubr.f32.gmra.mxu0 %v1353
  %v1545 = vpop.f32.mrf.mxu0
  %v1546 = vadd.f32 0.0, %v1545
  %v1547 = vpop.f32.mrf.mxu0
  %v1548 = vadd.f32 0.0, %v1547
  %1549 = vmatprep.mubr.f32.mxu0 0.0
  %1550 = vmatmul.mubr.f32.gmra.mxu0 %v1355
  %v1551 = vpop.f32.mrf.mxu0
  %v1552 = vadd.f32 0.0, %v1551
  %v1553 = vpop.f32.mrf.mxu0
  %v1554 = vadd.f32 0.0, %v1553
  %1555 = vmatprep.mubr.f32.mxu0 0.0
  %1556 = vmatmul.mubr.f32.gmra.mxu0 %v1357
  %v1557 = vpop.f32.mrf.mxu0
  %v1558 = vadd.f32 0.0, %v1557
  %v1559 = vpop.f32.mrf.mxu0
  %v1560 = vadd.f32 0.0, %v1559
  %1561 = vmatprep.mubr.f32.mxu0 0.0
  %1562 = vmatmul.mubr.f32.gmra.mxu0 %v1359
  %v1563 = vpop.f32.mrf.mxu0
  %v1564 = vadd.f32 0.0, %v1563
  %v1565 = vpop.f32.mrf.mxu0
  %v1566 = vadd.f32 0.0, %v1565
  %1567 = vmatprep.mubr.f32.mxu0 0.0
  %1568 = vmatmul.mubr.f32.gmra.mxu0 %v1361
  %v1569 = vpop.f32.mrf.mxu0
  %v1570 = vadd.f32 0.0, %v1569
  %v1571 = vpop.f32.mrf.mxu0
  %v1572 = vadd.f32 0.0, %v1571
  %1573 = vmatprep.mubr.f32.mxu0 0.0
  %1574 = vmatmul.mubr.f32.gmra.mxu0 %v1363
  %v1575 = vpop.f32.mrf.mxu0
  %v1576 = vadd.f32 0.0, %v1575
  %v1577 = vpop.f32.mrf.mxu0
  %v1578 = vadd.f32 0.0, %v1577
  %1579 = vmatprep.mubr.f32.mxu0 0.0
  %1580 = vmatmul.mubr.f32.gmra.mxu0 %v1365
  %v1581 = vpop.f32.mrf.mxu0
  %v1582 = vadd.f32 0.0, %v1581
  %v1583 = vpop.f32.mrf.mxu0
  %v1584 = vadd.f32 0.0, %v1583
  %1585 = vmatprep.mubr.f32.mxu0 0.0
  %1586 = vmatmul.mubr.f32.gmra.mxu0 %v1367
  %v1587 = vpop.f32.mrf.mxu0
  %v1588 = vadd.f32 0.0, %v1587
  %v1589 = vpop.f32.mrf.mxu0
  %v1590 = vadd.f32 0.0, %v1589
  %1591 = vmatprep.mubr.f32.mxu0 0.0
  %1592 = vmatmul.mubr.f32.gmra.mxu0 %v1369
  %v1593 = vpop.f32.mrf.mxu0
  %v1594 = vadd.f32 0.0, %v1593
  %v1595 = vpop.f32.mrf.mxu0
  %v1596 = vadd.f32 0.0, %v1595
  %1597 = vmatprep.mubr.f32.mxu0 0.0
  %1598 = vmatmul.mubr.f32.gmra.mxu0 %v1371
  %v1599 = vpop.f32.mrf.mxu0
  %v1600 = vadd.f32 0.0, %v1599
  %v1601 = vpop.f32.mrf.mxu0
  %v1602 = vadd.f32 0.0, %v1601
  %1603 = vmatprep.mubr.f32.mxu0 0.0
  %1604 = vmatmul.mubr.f32.gmra.mxu0 %v1373
  %v1605 = vpop.f32.mrf.mxu0
  %v1606 = vadd.f32 0.0, %v1605
  %v1607 = vpop.f32.mrf.mxu0
  %v1608 = vadd.f32 0.0, %v1607
  %1609 = vmatprep.mubr.f32.mxu0 0.0
  %1610 = vmatmul.mubr.f32.gmra.mxu0 %v1375
  %v1611 = vpop.f32.mrf.mxu0
  %v1612 = vadd.f32 0.0, %v1611
  %v1613 = vpop.f32.mrf.mxu0
  %v1614 = vadd.f32 0.0, %v1613
  %1615 = vmatprep.mubr.f32.mxu0 0.0
  %1616 = vmatmul.mubr.f32.gmra.mxu0 %v1377
  %v1617 = vpop.f32.mrf.mxu0
  %v1618 = vadd.f32 0.0, %v1617
  %v1619 = vpop.f32.mrf.mxu0
  %v1620 = vadd.f32 0.0, %v1619
  %1621 = vmatprep.mubr.f32.mxu0 0.0
  %1622 = vmatmul.mubr.f32.gmra.mxu0 %v1379
  %v1623 = vpop.f32.mrf.mxu0
  %v1624 = vadd.f32 0.0, %v1623
  %v1625 = vpop.f32.mrf.mxu0
  %v1626 = vadd.f32 0.0, %v1625
  %1627 = vmatprep.mubr.f32.mxu0 0.0
  %1628 = vmatmul.mubr.f32.gmra.mxu0 %v1381
  %v1629 = vpop.f32.mrf.mxu0
  %v1630 = vadd.f32 0.0, %v1629
  %v1631 = vpop.f32.mrf.mxu0
  %v1632 = vadd.f32 0.0, %v1631
  %1633 = vdwg.mxu0
  %v1634 = vadd.f32 %v1192, %v1456
  %v1635 = vadd.f32 %v1193, %v1458
  %v1636 = vadd.f32 %v1194, %v1462
  %v1637 = vadd.f32 %v1195, %v1464
  %v1638 = vadd.f32 %v1196, %v1468
  %v1639 = vadd.f32 %v1197, %v1470
  %v1640 = vadd.f32 %v1198, %v1474
  %v1641 = vadd.f32 %v1199, %v1476
  %v1642 = vadd.f32 %v1200, %v1480
  %v1643 = vadd.f32 %v1201, %v1482
  %v1644 = vadd.f32 %v1202, %v1486
  %v1645 = vadd.f32 %v1203, %v1488
  %v1646 = vadd.f32 %v1204, %v1492
  %v1647 = vadd.f32 %v1205, %v1494
  %v1648 = vadd.f32 %v1206, %v1498
  %v1649 = vadd.f32 %v1207, %v1500
  %v1650 = vadd.f32 %v1208, %v1504
  %v1651 = vadd.f32 %v1209, %v1506
  %v1652 = vadd.f32 %v1210, %v1510
  %v1653 = vadd.f32 %v1211, %v1512
  %v1654 = vadd.f32 %v1212, %v1516
  %v1655 = vadd.f32 %v1213, %v1518
  %v1656 = vadd.f32 %v1214, %v1522
  %v1657 = vadd.f32 %v1215, %v1524
  %v1658 = vadd.f32 %v1216, %v1528
  %v1659 = vadd.f32 %v1217, %v1530
  %v1660 = vadd.f32 %v1218, %v1534
  %v1661 = vadd.f32 %v1219, %v1536
  %v1662 = vadd.f32 %v1220, %v1540
  %v1663 = vadd.f32 %v1221, %v1542
  %v1664 = vadd.f32 %v1222, %v1546
  %v1665 = vadd.f32 %v1223, %v1548
  %v1666 = vadd.f32 %v1224, %v1552
  %v1667 = vadd.f32 %v1225, %v1554
  %v1668 = vadd.f32 %v1226, %v1558
  %v1669 = vadd.f32 %v1227, %v1560
  %v1670 = vadd.f32 %v1228, %v1564
  %v1671 = vadd.f32 %v1229, %v1566
  %v1672 = vadd.f32 %v1230, %v1570
  %v1673 = vadd.f32 %v1231, %v1572
  %v1674 = vadd.f32 %v1232, %v1576
  %v1675 = vadd.f32 %v1233, %v1578
  %v1676 = vadd.f32 %v1234, %v1582
  %v1677 = vadd.f32 %v1235, %v1584
  %v1678 = vadd.f32 %v1236, %v1588
  %v1679 = vadd.f32 %v1237, %v1590
  %v1680 = vadd.f32 %v1238, %v1594
  %v1681 = vadd.f32 %v1239, %v1596
  %v1682 = vadd.f32 %v1240, %v1600
  %v1683 = vadd.f32 %v1241, %v1602
  %v1684 = vadd.f32 %v1242, %v1606
  %v1685 = vadd.f32 %v1243, %v1608
  %v1686 = vadd.f32 %v1244, %v1612
  %v1687 = vadd.f32 %v1245, %v1614
  %v1688 = vadd.f32 %v1246, %v1618
  %v1689 = vadd.f32 %v1247, %v1620
  %v1690 = vadd.f32 %v1248, %v1624
  %v1691 = vadd.f32 %v1249, %v1626
  %v1692 = vadd.f32 %v1250, %v1630
  %v1693 = vadd.f32 %v1251, %v1632
  %s1694 = scalar_lea.vmem %s1, 256
  %v1695 = vld [vmem:[%s1694] sm:$0xff]
  %v1696 = vld [vmem:[%s1694 + $0x8] sm:$0xff]
  %v1697 = vld [vmem:[%s1694 + $0x10] sm:$0xff]
  %v1698 = vld [vmem:[%s1694 + $0x18] sm:$0xff]
  %v1699 = vld [vmem:[%s1694 + $0x20] sm:$0xff]
  %v1700 = vld [vmem:[%s1694 + $0x28] sm:$0xff]
  %v1701 = vld [vmem:[%s1694 + $0x30] sm:$0xf]
  %v1702 = vld [vmem:[%s1694 + $0x38] sm:$0xf]
  %v1703 = vrot.slane %v44, 4
  %v1704 = vrot.slane %v45, 4
  %v1705 = vsel %vm247, %v1703, %v1704
  %v1706 = vrot.slane %v46, 4
  %v1707 = vsel %vm247, %v1704, %v1706
  %v1708 = vrot.slane %v47, 4
  %v1709 = vsel %vm247, %v1706, %v1708
  %v1710 = vrot.slane %v48, 4
  %v1711 = vsel %vm247, %v1708, %v1710
  %v1712 = vrot.slane %v49, 4
  %v1713 = vsel %vm247, %v1710, %v1712
  %v1714 = vrot.slane %v50, 4
  %v1715 = vsel %vm247, %v1712, %v1714
  %v1716 = vrot.slane %v51, 4
  %v1717 = vsel %vm247, %v1714, %v1716
  %v1718 = vrot.slane %v52, 4
  %v1719 = vsel %vm247, %v1716, %v1718
  %v1720 = vrot.slane %v53, 4
  %v1721 = vsel %vm247, %v1718, %v1720
  %v1722 = vrot.slane %v54, 4
  %v1723 = vsel %vm247, %v1720, %v1722
  %v1724 = vrot.slane %v55, 4
  %v1725 = vsel %vm247, %v1722, %v1724
  %v1726 = vrot.slane %v56, 4
  %v1727 = vsel %vm247, %v1724, %v1726
  %v1728 = vrot.slane %v57, 4
  %v1729 = vsel %vm247, %v1726, %v1728
  %v1730 = vrot.slane %v58, 4
  %v1731 = vsel %vm247, %v1728, %v1730
  %v1732 = vrot.slane %v59, 4
  %v1733 = vsel %vm247, %v1730, %v1732
  %v1734 = vrot.slane %v60, 4
  %v1735 = vsel %vm247, %v1732, %v1734
  %v1736 = vrot.slane %v61, 4
  %v1737 = vsel %vm247, %v1734, %v1736
  %v1738 = vrot.slane %v62, 4
  %v1739 = vsel %vm247, %v1736, %v1738
  %v1740 = vrot.slane %v63, 4
  %v1741 = vsel %vm247, %v1738, %v1740
  %v1742 = vrot.slane %v64, 4
  %v1743 = vsel %vm247, %v1740, %v1742
  %v1744 = vrot.slane %v65, 4
  %v1745 = vsel %vm247, %v1742, %v1744
  %v1746 = vrot.slane %v66, 4
  %v1747 = vsel %vm247, %v1744, %v1746
  %v1748 = vrot.slane %v67, 4
  %v1749 = vsel %vm247, %v1746, %v1748
  %v1750 = vrot.slane %v68, 4
  %v1751 = vsel %vm247, %v1748, %v1750
  %v1752 = vrot.slane %v69, 4
  %v1753 = vsel %vm247, %v1750, %v1752
  %v1754 = vrot.slane %v70, 4
  %v1755 = vsel %vm247, %v1752, %v1754
  %v1756 = vrot.slane %v71, 4
  %v1757 = vsel %vm247, %v1754, %v1756
  %v1758 = vrot.slane %v72, 4
  %v1759 = vsel %vm247, %v1756, %v1758
  %v1760 = vrot.slane %v73, 4
  %v1761 = vsel %vm247, %v1758, %v1760
  %v1762 = vrot.slane %v74, 4
  %v1763 = vsel %vm247, %v1760, %v1762
  %v1764 = vsel %vm186, %v1705, 0
  %v1766 = vsel %vm186, %v1707, 0
  %v1768 = vsel %vm186, %v1709, 0
  %v1770 = vsel %vm186, %v1711, 0
  %v1772 = vsel %vm186, %v1713, 0
  %v1774 = vsel %vm186, %v1715, 0
  %v1776 = vsel %vm186, %v1717, 0
  %v1778 = vsel %vm186, %v1719, 0
  %v1780 = vsel %vm186, %v1721, 0
  %v1782 = vsel %vm186, %v1723, 0
  %v1784 = vsel %vm186, %v1725, 0
  %v1786 = vsel %vm186, %v1727, 0
  %v1788 = vsel %vm186, %v1729, 0
  %v1790 = vsel %vm186, %v1731, 0
  %v1792 = vsel %vm186, %v1733, 0
  %v1794 = vsel %vm186, %v1735, 0
  %v1796 = vsel %vm186, %v1737, 0
  %v1798 = vsel %vm186, %v1739, 0
  %v1800 = vsel %vm186, %v1741, 0
  %v1802 = vsel %vm186, %v1743, 0
  %v1804 = vsel %vm186, %v1745, 0
  %v1806 = vsel %vm186, %v1747, 0
  %v1808 = vsel %vm186, %v1749, 0
  %v1810 = vsel %vm186, %v1751, 0
  %v1812 = vsel %vm186, %v1753, 0
  %v1814 = vsel %vm186, %v1755, 0
  %v1816 = vsel %vm186, %v1757, 0
  %v1818 = vsel %vm186, %v1759, 0
  %v1820 = vsel %vm186, %v1761, 0
  %v1822 = vsel %vm186, %v1763, 0
  %v1825 = vsel %vm247, %v1701, 0
  %v1828 = vsel %vm247, %v1702, 0
  %1830 = vmatprep.subr.mxu0 0.0
  %1831 = vmatpush1.msra.mxu0 0.0
  %1832 = vmatprep.subr.mxu0 0.0
  %1833 = vmatpush1.msra.mxu0 0.0
  %1834 = vmatprep.subr.mxu0 0.0
  %1835 = vmatpush1.msra.mxu0 0.0
  %1836 = vmatprep.subr.mxu0 0.0
  %1837 = vmatpush1.msra.mxu0 0.0
  %1838 = vmatprep.subr.mxu0 0.0
  %1839 = vmatpush1.msra.mxu0 0.0
  %1840 = vmatprep.subr.mxu0 0.0
  %1841 = vmatpush1.msra.mxu0 0.0
  %1842 = vmatprep.subr.mxu0 0.0
  %1843 = vmatpush1.msra.mxu0 0.0
  %1844 = vmatprep.subr.mxu0 0.0
  %1845 = vmatpush1.msra.mxu0 0.0
  %1846 = vmatprep.subr.mxu0 0.0
  %1847 = vmatpush1.msra.mxu0 0.0
  %1848 = vmatprep.subr.mxu0 0.0
  %1849 = vmatpush1.msra.mxu0 0.0
  %1850 = vmatprep.subr.mxu0 0.0
  %1851 = vmatpush1.msra.mxu0 0.0
  %1852 = vmatprep.subr.mxu0 0.0
  %1853 = vmatpush1.msra.mxu0 0.0
  %1854 = vmatprep.subr.mxu0 %v1828
  %1855 = vmatpush1.msra.mxu0 %v1825
  %1856 = vmatprep.subr.mxu0 %v1700
  %1857 = vmatpush1.msra.mxu0 %v1699
  %1858 = vmatprep.subr.mxu0 %v1698
  %1859 = vmatpush1.msra.mxu0 %v1697
  %1860 = vmatprep.subr.mxu0 %v1696
  %1861 = vmatpush1.msra.mxu0 %v1695
  %1862 = vmatprep.subr.mxu0 0.0
  %1863 = vmatpush2.msra.mxu0 0.0
  %1864 = vmatprep.subr.mxu0 0.0
  %1865 = vmatpush2.msra.mxu0 0.0
  %1866 = vmatprep.subr.mxu0 0.0
  %1867 = vmatpush2.msra.mxu0 0.0
  %1868 = vmatprep.subr.mxu0 0.0
  %1869 = vmatpush2.msra.mxu0 0.0
  %1870 = vmatprep.subr.mxu0 0.0
  %1871 = vmatpush2.msra.mxu0 0.0
  %1872 = vmatprep.subr.mxu0 0.0
  %1873 = vmatpush2.msra.mxu0 0.0
  %1874 = vmatprep.subr.mxu0 0.0
  %1875 = vmatpush2.msra.mxu0 0.0
  %1876 = vmatprep.subr.mxu0 0.0
  %1877 = vmatpush2.msra.mxu0 0.0
  %1878 = vmatprep.subr.mxu0 0.0
  %1879 = vmatpush2.msra.mxu0 0.0
  %1880 = vmatprep.subr.mxu0 0.0
  %1881 = vmatpush2.msra.mxu0 0.0
  %1882 = vmatprep.subr.mxu0 0.0
  %1883 = vmatpush2.msra.mxu0 0.0
  %1884 = vmatprep.subr.mxu0 0.0
  %1885 = vmatpush2.msra.mxu0 0.0
  %1886 = vmatprep.subr.mxu0 0.0
  %1887 = vmatpush2.msra.mxu0 0.0
  %1888 = vmatprep.subr.mxu0 0.0
  %1889 = vmatpush2.msra.mxu0 0.0
  %1890 = vmatprep.subr.mxu0 0.0
  %1891 = vmatpush2.msra.mxu0 0.0
  %1892 = vmatprep.subr.mxu0 0.0
  %1893 = vmatpush2.msra.mxu0 0.0
  %1894 = vmatprep.mubr.f32.mxu0 0.0
  %1895 = vmatmul.mubr.f32.gmra.mxu0 %v1764
  %v1896 = vpop.f32.mrf.mxu0
  %v1897 = vadd.f32 0.0, %v1896
  %v1898 = vpop.f32.mrf.mxu0
  %v1899 = vadd.f32 0.0, %v1898
  %1900 = vmatprep.mubr.f32.mxu0 0.0
  %1901 = vmatmul.mubr.f32.gmra.mxu0 %v1766
  %v1902 = vpop.f32.mrf.mxu0
  %v1903 = vadd.f32 0.0, %v1902
  %v1904 = vpop.f32.mrf.mxu0
  %v1905 = vadd.f32 0.0, %v1904
  %1906 = vmatprep.mubr.f32.mxu0 0.0
  %1907 = vmatmul.mubr.f32.gmra.mxu0 %v1768
  %v1908 = vpop.f32.mrf.mxu0
  %v1909 = vadd.f32 0.0, %v1908
  %v1910 = vpop.f32.mrf.mxu0
  %v1911 = vadd.f32 0.0, %v1910
  %1912 = vmatprep.mubr.f32.mxu0 0.0
  %1913 = vmatmul.mubr.f32.gmra.mxu0 %v1770
  %v1914 = vpop.f32.mrf.mxu0
  %v1915 = vadd.f32 0.0, %v1914
  %v1916 = vpop.f32.mrf.mxu0
  %v1917 = vadd.f32 0.0, %v1916
  %1918 = vmatprep.mubr.f32.mxu0 0.0
  %1919 = vmatmul.mubr.f32.gmra.mxu0 %v1772
  %v1920 = vpop.f32.mrf.mxu0
  %v1921 = vadd.f32 0.0, %v1920
  %v1922 = vpop.f32.mrf.mxu0
  %v1923 = vadd.f32 0.0, %v1922
  %1924 = vmatprep.mubr.f32.mxu0 0.0
  %1925 = vmatmul.mubr.f32.gmra.mxu0 %v1774
  %v1926 = vpop.f32.mrf.mxu0
  %v1927 = vadd.f32 0.0, %v1926
  %v1928 = vpop.f32.mrf.mxu0
  %v1929 = vadd.f32 0.0, %v1928
  %1930 = vmatprep.mubr.f32.mxu0 0.0
  %1931 = vmatmul.mubr.f32.gmra.mxu0 %v1776
  %v1932 = vpop.f32.mrf.mxu0
  %v1933 = vadd.f32 0.0, %v1932
  %v1934 = vpop.f32.mrf.mxu0
  %v1935 = vadd.f32 0.0, %v1934
  %1936 = vmatprep.mubr.f32.mxu0 0.0
  %1937 = vmatmul.mubr.f32.gmra.mxu0 %v1778
  %v1938 = vpop.f32.mrf.mxu0
  %v1939 = vadd.f32 0.0, %v1938
  %v1940 = vpop.f32.mrf.mxu0
  %v1941 = vadd.f32 0.0, %v1940
  %1942 = vmatprep.mubr.f32.mxu0 0.0
  %1943 = vmatmul.mubr.f32.gmra.mxu0 %v1780
  %v1944 = vpop.f32.mrf.mxu0
  %v1945 = vadd.f32 0.0, %v1944
  %v1946 = vpop.f32.mrf.mxu0
  %v1947 = vadd.f32 0.0, %v1946
  %1948 = vmatprep.mubr.f32.mxu0 0.0
  %1949 = vmatmul.mubr.f32.gmra.mxu0 %v1782
  %v1950 = vpop.f32.mrf.mxu0
  %v1951 = vadd.f32 0.0, %v1950
  %v1952 = vpop.f32.mrf.mxu0
  %v1953 = vadd.f32 0.0, %v1952
  %1954 = vmatprep.mubr.f32.mxu0 0.0
  %1955 = vmatmul.mubr.f32.gmra.mxu0 %v1784
  %v1956 = vpop.f32.mrf.mxu0
  %v1957 = vadd.f32 0.0, %v1956
  %v1958 = vpop.f32.mrf.mxu0
  %v1959 = vadd.f32 0.0, %v1958
  %1960 = vmatprep.mubr.f32.mxu0 0.0
  %1961 = vmatmul.mubr.f32.gmra.mxu0 %v1786
  %v1962 = vpop.f32.mrf.mxu0
  %v1963 = vadd.f32 0.0, %v1962
  %v1964 = vpop.f32.mrf.mxu0
  %v1965 = vadd.f32 0.0, %v1964
  %1966 = vmatprep.mubr.f32.mxu0 0.0
  %1967 = vmatmul.mubr.f32.gmra.mxu0 %v1788
  %v1968 = vpop.f32.mrf.mxu0
  %v1969 = vadd.f32 0.0, %v1968
  %v1970 = vpop.f32.mrf.mxu0
  %v1971 = vadd.f32 0.0, %v1970
  %1972 = vmatprep.mubr.f32.mxu0 0.0
  %1973 = vmatmul.mubr.f32.gmra.mxu0 %v1790
  %v1974 = vpop.f32.mrf.mxu0
  %v1975 = vadd.f32 0.0, %v1974
  %v1976 = vpop.f32.mrf.mxu0
  %v1977 = vadd.f32 0.0, %v1976
  %1978 = vmatprep.mubr.f32.mxu0 0.0
  %1979 = vmatmul.mubr.f32.gmra.mxu0 %v1792
  %v1980 = vpop.f32.mrf.mxu0
  %v1981 = vadd.f32 0.0, %v1980
  %v1982 = vpop.f32.mrf.mxu0
  %v1983 = vadd.f32 0.0, %v1982
  %1984 = vmatprep.mubr.f32.mxu0 0.0
  %1985 = vmatmul.mubr.f32.gmra.mxu0 %v1794
  %v1986 = vpop.f32.mrf.mxu0
  %v1987 = vadd.f32 0.0, %v1986
  %v1988 = vpop.f32.mrf.mxu0
  %v1989 = vadd.f32 0.0, %v1988
  %1990 = vmatprep.mubr.f32.mxu0 0.0
  %1991 = vmatmul.mubr.f32.gmra.mxu0 %v1796
  %v1992 = vpop.f32.mrf.mxu0
  %v1993 = vadd.f32 0.0, %v1992
  %v1994 = vpop.f32.mrf.mxu0
  %v1995 = vadd.f32 0.0, %v1994
  %1996 = vmatprep.mubr.f32.mxu0 0.0
  %1997 = vmatmul.mubr.f32.gmra.mxu0 %v1798
  %v1998 = vpop.f32.mrf.mxu0
  %v1999 = vadd.f32 0.0, %v1998
  %v2000 = vpop.f32.mrf.mxu0
  %v2001 = vadd.f32 0.0, %v2000
  %2002 = vmatprep.mubr.f32.mxu0 0.0
  %2003 = vmatmul.mubr.f32.gmra.mxu0 %v1800
  %v2004 = vpop.f32.mrf.mxu0
  %v2005 = vadd.f32 0.0, %v2004
  %v2006 = vpop.f32.mrf.mxu0
  %v2007 = vadd.f32 0.0, %v2006
  %2008 = vmatprep.mubr.f32.mxu0 0.0
  %2009 = vmatmul.mubr.f32.gmra.mxu0 %v1802
  %v2010 = vpop.f32.mrf.mxu0
  %v2011 = vadd.f32 0.0, %v2010
  %v2012 = vpop.f32.mrf.mxu0
  %v2013 = vadd.f32 0.0, %v2012
  %2014 = vmatprep.mubr.f32.mxu0 0.0
  %2015 = vmatmul.mubr.f32.gmra.mxu0 %v1804
  %v2016 = vpop.f32.mrf.mxu0
  %v2017 = vadd.f32 0.0, %v2016
  %v2018 = vpop.f32.mrf.mxu0
  %v2019 = vadd.f32 0.0, %v2018
  %2020 = vmatprep.mubr.f32.mxu0 0.0
  %2021 = vmatmul.mubr.f32.gmra.mxu0 %v1806
  %v2022 = vpop.f32.mrf.mxu0
  %v2023 = vadd.f32 0.0, %v2022
  %v2024 = vpop.f32.mrf.mxu0
  %v2025 = vadd.f32 0.0, %v2024
  %2026 = vmatprep.mubr.f32.mxu0 0.0
  %2027 = vmatmul.mubr.f32.gmra.mxu0 %v1808
  %v2028 = vpop.f32.mrf.mxu0
  %v2029 = vadd.f32 0.0, %v2028
  %v2030 = vpop.f32.mrf.mxu0
  %v2031 = vadd.f32 0.0, %v2030
  %2032 = vmatprep.mubr.f32.mxu0 0.0
  %2033 = vmatmul.mubr.f32.gmra.mxu0 %v1810
  %v2034 = vpop.f32.mrf.mxu0
  %v2035 = vadd.f32 0.0, %v2034
  %v2036 = vpop.f32.mrf.mxu0
  %v2037 = vadd.f32 0.0, %v2036
  %2038 = vmatprep.mubr.f32.mxu0 0.0
  %2039 = vmatmul.mubr.f32.gmra.mxu0 %v1812
  %v2040 = vpop.f32.mrf.mxu0
  %v2041 = vadd.f32 0.0, %v2040
  %v2042 = vpop.f32.mrf.mxu0
  %v2043 = vadd.f32 0.0, %v2042
  %2044 = vmatprep.mubr.f32.mxu0 0.0
  %2045 = vmatmul.mubr.f32.gmra.mxu0 %v1814
  %v2046 = vpop.f32.mrf.mxu0
  %v2047 = vadd.f32 0.0, %v2046
  %v2048 = vpop.f32.mrf.mxu0
  %v2049 = vadd.f32 0.0, %v2048
  %2050 = vmatprep.mubr.f32.mxu0 0.0
  %2051 = vmatmul.mubr.f32.gmra.mxu0 %v1816
  %v2052 = vpop.f32.mrf.mxu0
  %v2053 = vadd.f32 0.0, %v2052
  %v2054 = vpop.f32.mrf.mxu0
  %v2055 = vadd.f32 0.0, %v2054
  %2056 = vmatprep.mubr.f32.mxu0 0.0
  %2057 = vmatmul.mubr.f32.gmra.mxu0 %v1818
  %v2058 = vpop.f32.mrf.mxu0
  %v2059 = vadd.f32 0.0, %v2058
  %v2060 = vpop.f32.mrf.mxu0
  %v2061 = vadd.f32 0.0, %v2060
  %2062 = vmatprep.mubr.f32.mxu0 0.0
  %2063 = vmatmul.mubr.f32.gmra.mxu0 %v1820
  %v2064 = vpop.f32.mrf.mxu0
  %v2065 = vadd.f32 0.0, %v2064
  %v2066 = vpop.f32.mrf.mxu0
  %v2067 = vadd.f32 0.0, %v2066
  %2068 = vmatprep.mubr.f32.mxu0 0.0
  %2069 = vmatmul.mubr.f32.gmra.mxu0 %v1822
  %v2070 = vpop.f32.mrf.mxu0
  %v2071 = vadd.f32 0.0, %v2070
  %v2072 = vpop.f32.mrf.mxu0
  %v2073 = vadd.f32 0.0, %v2072
  %2074 = vdwg.mxu0
  %v2075 = vadd.f32 %v1634, %v1897
  %v2076 = vadd.f32 %v1635, %v1899
  %v2077 = vadd.f32 %v1636, %v1903
  %v2078 = vadd.f32 %v1637, %v1905
  %v2079 = vadd.f32 %v1638, %v1909
  %v2080 = vadd.f32 %v1639, %v1911
  %v2081 = vadd.f32 %v1640, %v1915
  %v2082 = vadd.f32 %v1641, %v1917
  %v2083 = vadd.f32 %v1642, %v1921
  %v2084 = vadd.f32 %v1643, %v1923
  %v2085 = vadd.f32 %v1644, %v1927
  %v2086 = vadd.f32 %v1645, %v1929
  %v2087 = vadd.f32 %v1646, %v1933
  %v2088 = vadd.f32 %v1647, %v1935
  %v2089 = vadd.f32 %v1648, %v1939
  %v2090 = vadd.f32 %v1649, %v1941
  %v2091 = vadd.f32 %v1650, %v1945
  %v2092 = vadd.f32 %v1651, %v1947
  %v2093 = vadd.f32 %v1652, %v1951
  %v2094 = vadd.f32 %v1653, %v1953
  %v2095 = vadd.f32 %v1654, %v1957
  %v2096 = vadd.f32 %v1655, %v1959
  %v2097 = vadd.f32 %v1656, %v1963
  %v2098 = vadd.f32 %v1657, %v1965
  %v2099 = vadd.f32 %v1658, %v1969
  %v2100 = vadd.f32 %v1659, %v1971
  %v2101 = vadd.f32 %v1660, %v1975
  %v2102 = vadd.f32 %v1661, %v1977
  %v2103 = vadd.f32 %v1662, %v1981
  %v2104 = vadd.f32 %v1663, %v1983
  %v2105 = vadd.f32 %v1664, %v1987
  %v2106 = vadd.f32 %v1665, %v1989
  %v2107 = vadd.f32 %v1666, %v1993
  %v2108 = vadd.f32 %v1667, %v1995
  %v2109 = vadd.f32 %v1668, %v1999
  %v2110 = vadd.f32 %v1669, %v2001
  %v2111 = vadd.f32 %v1670, %v2005
  %v2112 = vadd.f32 %v1671, %v2007
  %v2113 = vadd.f32 %v1672, %v2011
  %v2114 = vadd.f32 %v1673, %v2013
  %v2115 = vadd.f32 %v1674, %v2017
  %v2116 = vadd.f32 %v1675, %v2019
  %v2117 = vadd.f32 %v1676, %v2023
  %v2118 = vadd.f32 %v1677, %v2025
  %v2119 = vadd.f32 %v1678, %v2029
  %v2120 = vadd.f32 %v1679, %v2031
  %v2121 = vadd.f32 %v1680, %v2035
  %v2122 = vadd.f32 %v1681, %v2037
  %v2123 = vadd.f32 %v1682, %v2041
  %v2124 = vadd.f32 %v1683, %v2043
  %v2125 = vadd.f32 %v1684, %v2047
  %v2126 = vadd.f32 %v1685, %v2049
  %v2127 = vadd.f32 %v1686, %v2053
  %v2128 = vadd.f32 %v1687, %v2055
  %v2129 = vadd.f32 %v1688, %v2059
  %v2130 = vadd.f32 %v1689, %v2061
  %v2131 = vadd.f32 %v1690, %v2065
  %v2132 = vadd.f32 %v1691, %v2067
  %v2133 = vadd.f32 %v1692, %v2071
  %v2134 = vadd.f32 %v1693, %v2073
  %v2136 = vlaneseq
  %v2137 = vshrl.u32 %v2136, 7
  %v2138 = vsub.s32 0, %v2137
  %v2139 = vrot.slane %v75, %v2138
  %v2140 = vlaneseq
  %v2141 = vshrl.u32 %v2140, 7
  %v2142 = vsub.s32 1, %v2141
  %v2143 = vrot.slane %v75, %v2142
  %v2146 = vadd.f32 %v2139, %v2075
  %v2147 = vadd.f32 %v2143, %v2076
  %v2148 = vadd.f32 %v2139, %v2077
  %v2149 = vadd.f32 %v2143, %v2078
  %v2150 = vadd.f32 %v2139, %v2079
  %v2151 = vadd.f32 %v2143, %v2080
  %v2152 = vadd.f32 %v2139, %v2081
  %v2153 = vadd.f32 %v2143, %v2082
  %v2154 = vadd.f32 %v2139, %v2083
  %v2155 = vadd.f32 %v2143, %v2084
  %v2156 = vadd.f32 %v2139, %v2085
  %v2157 = vadd.f32 %v2143, %v2086
  %v2158 = vadd.f32 %v2139, %v2087
  %v2159 = vadd.f32 %v2143, %v2088
  %v2160 = vadd.f32 %v2139, %v2089
  %v2161 = vadd.f32 %v2143, %v2090
  %v2162 = vadd.f32 %v2139, %v2091
  %v2163 = vadd.f32 %v2143, %v2092
  %v2164 = vadd.f32 %v2139, %v2093
  %v2165 = vadd.f32 %v2143, %v2094
  %v2166 = vadd.f32 %v2139, %v2095
  %v2167 = vadd.f32 %v2143, %v2096
  %v2168 = vadd.f32 %v2139, %v2097
  %v2169 = vadd.f32 %v2143, %v2098
  %v2170 = vadd.f32 %v2139, %v2099
  %v2171 = vadd.f32 %v2143, %v2100
  %v2172 = vadd.f32 %v2139, %v2101
  %v2173 = vadd.f32 %v2143, %v2102
  %v2174 = vadd.f32 %v2139, %v2103
  %v2175 = vadd.f32 %v2143, %v2104
  %v2176 = vadd.f32 %v2139, %v2105
  %v2177 = vadd.f32 %v2143, %v2106
  %v2178 = vadd.f32 %v2139, %v2107
  %v2179 = vadd.f32 %v2143, %v2108
  %v2180 = vadd.f32 %v2139, %v2109
  %v2181 = vadd.f32 %v2143, %v2110
  %v2182 = vadd.f32 %v2139, %v2111
  %v2183 = vadd.f32 %v2143, %v2112
  %v2184 = vadd.f32 %v2139, %v2113
  %v2185 = vadd.f32 %v2143, %v2114
  %v2186 = vadd.f32 %v2139, %v2115
  %v2187 = vadd.f32 %v2143, %v2116
  %v2188 = vadd.f32 %v2139, %v2117
  %v2189 = vadd.f32 %v2143, %v2118
  %v2190 = vadd.f32 %v2139, %v2119
  %v2191 = vadd.f32 %v2143, %v2120
  %v2192 = vadd.f32 %v2139, %v2121
  %v2193 = vadd.f32 %v2143, %v2122
  %v2194 = vadd.f32 %v2139, %v2123
  %v2195 = vadd.f32 %v2143, %v2124
  %v2196 = vadd.f32 %v2139, %v2125
  %v2197 = vadd.f32 %v2143, %v2126
  %v2198 = vadd.f32 %v2139, %v2127
  %v2199 = vadd.f32 %v2143, %v2128
  %v2200 = vadd.f32 %v2139, %v2129
  %v2201 = vadd.f32 %v2143, %v2130
  %v2202 = vadd.f32 %v2139, %v2131
  %v2203 = vadd.f32 %v2143, %v2132
  %v2204 = vadd.f32 %v2139, %v2133
  %v2205 = vadd.f32 %v2143, %v2134
  %v2206 = vsub.f32 0.0, %v2146
  %v2207 = vsub.f32 0.0, %v2147
  %v2208 = vsub.f32 0.0, %v2148
  %v2209 = vsub.f32 0.0, %v2149
  %v2210 = vsub.f32 0.0, %v2150
  %v2211 = vsub.f32 0.0, %v2151
  %v2212 = vsub.f32 0.0, %v2152
  %v2213 = vsub.f32 0.0, %v2153
  %v2214 = vsub.f32 0.0, %v2154
  %v2215 = vsub.f32 0.0, %v2155
  %v2216 = vsub.f32 0.0, %v2156
  %v2217 = vsub.f32 0.0, %v2157
  %v2218 = vsub.f32 0.0, %v2158
  %v2219 = vsub.f32 0.0, %v2159
  %v2220 = vsub.f32 0.0, %v2160
  %v2221 = vsub.f32 0.0, %v2161
  %v2222 = vsub.f32 0.0, %v2162
  %v2223 = vsub.f32 0.0, %v2163
  %v2224 = vsub.f32 0.0, %v2164
  %v2225 = vsub.f32 0.0, %v2165
  %v2226 = vsub.f32 0.0, %v2166
  %v2227 = vsub.f32 0.0, %v2167
  %v2228 = vsub.f32 0.0, %v2168
  %v2229 = vsub.f32 0.0, %v2169
  %v2230 = vsub.f32 0.0, %v2170
  %v2231 = vsub.f32 0.0, %v2171
  %v2232 = vsub.f32 0.0, %v2172
  %v2233 = vsub.f32 0.0, %v2173
  %v2234 = vsub.f32 0.0, %v2174
  %v2235 = vsub.f32 0.0, %v2175
  %v2236 = vsub.f32 0.0, %v2176
  %v2237 = vsub.f32 0.0, %v2177
  %v2238 = vsub.f32 0.0, %v2178
  %v2239 = vsub.f32 0.0, %v2179
  %v2240 = vsub.f32 0.0, %v2180
  %v2241 = vsub.f32 0.0, %v2181
  %v2242 = vsub.f32 0.0, %v2182
  %v2243 = vsub.f32 0.0, %v2183
  %v2244 = vsub.f32 0.0, %v2184
  %v2245 = vsub.f32 0.0, %v2185
  %v2246 = vsub.f32 0.0, %v2186
  %v2247 = vsub.f32 0.0, %v2187
  %v2248 = vsub.f32 0.0, %v2188
  %v2249 = vsub.f32 0.0, %v2189
  %v2250 = vsub.f32 0.0, %v2190
  %v2251 = vsub.f32 0.0, %v2191
  %v2252 = vsub.f32 0.0, %v2192
  %v2253 = vsub.f32 0.0, %v2193
  %v2254 = vsub.f32 0.0, %v2194
  %v2255 = vsub.f32 0.0, %v2195
  %v2256 = vsub.f32 0.0, %v2196
  %v2257 = vsub.f32 0.0, %v2197
  %v2258 = vsub.f32 0.0, %v2198
  %v2259 = vsub.f32 0.0, %v2199
  %v2260 = vsub.f32 0.0, %v2200
  %v2261 = vsub.f32 0.0, %v2201
  %v2262 = vsub.f32 0.0, %v2202
  %v2263 = vsub.f32 0.0, %v2203
  %v2264 = vsub.f32 0.0, %v2204
  %v2265 = vsub.f32 0.0, %v2205
  %v2266 = vmul.f32 %v2206, 1.442695
  %v2267 = vpow.pop %v2266
  %v2268 = vmul.f32 %v2207, 1.442695
  %v2269 = vpow.pop %v2268
  %v2270 = vmul.f32 %v2208, 1.442695
  %v2271 = vpow.pop %v2270
  %v2272 = vmul.f32 %v2209, 1.442695
  %v2273 = vpow.pop %v2272
  %v2274 = vmul.f32 %v2210, 1.442695
  %v2275 = vpow.pop %v2274
  %v2276 = vmul.f32 %v2211, 1.442695
  %v2277 = vpow.pop %v2276
  %v2278 = vmul.f32 %v2212, 1.442695
  %v2279 = vpow.pop %v2278
  %v2280 = vmul.f32 %v2213, 1.442695
  %v2281 = vpow.pop %v2280
  %v2282 = vmul.f32 %v2214, 1.442695
  %v2283 = vpow.pop %v2282
  %v2284 = vmul.f32 %v2215, 1.442695
  %v2285 = vpow.pop %v2284
  %v2286 = vmul.f32 %v2216, 1.442695
  %v2287 = vpow.pop %v2286
  %v2288 = vmul.f32 %v2217, 1.442695
  %v2289 = vpow.pop %v2288
  %v2290 = vmul.f32 %v2218, 1.442695
  %v2291 = vpow.pop %v2290
  %v2292 = vmul.f32 %v2219, 1.442695
  %v2293 = vpow.pop %v2292
  %v2294 = vmul.f32 %v2220, 1.442695
  %v2295 = vpow.pop %v2294
  %v2296 = vmul.f32 %v2221, 1.442695
  %v2297 = vpow.pop %v2296
  %v2298 = vmul.f32 %v2222, 1.442695
  %v2299 = vpow.pop %v2298
  %v2300 = vmul.f32 %v2223, 1.442695
  %v2301 = vpow.pop %v2300
  %v2302 = vmul.f32 %v2224, 1.442695
  %v2303 = vpow.pop %v2302
  %v2304 = vmul.f32 %v2225, 1.442695
  %v2305 = vpow.pop %v2304
  %v2306 = vmul.f32 %v2226, 1.442695
  %v2307 = vpow.pop %v2306
  %v2308 = vmul.f32 %v2227, 1.442695
  %v2309 = vpow.pop %v2308
  %v2310 = vmul.f32 %v2228, 1.442695
  %v2311 = vpow.pop %v2310
  %v2312 = vmul.f32 %v2229, 1.442695
  %v2313 = vpow.pop %v2312
  %v2314 = vmul.f32 %v2230, 1.442695
  %v2315 = vpow.pop %v2314
  %v2316 = vmul.f32 %v2231, 1.442695
  %v2317 = vpow.pop %v2316
  %v2318 = vmul.f32 %v2232, 1.442695
  %v2319 = vpow.pop %v2318
  %v2320 = vmul.f32 %v2233, 1.442695
  %v2321 = vpow.pop %v2320
  %v2322 = vmul.f32 %v2234, 1.442695
  %v2323 = vpow.pop %v2322
  %v2324 = vmul.f32 %v2235, 1.442695
  %v2325 = vpow.pop %v2324
  %v2326 = vmul.f32 %v2236, 1.442695
  %v2327 = vpow.pop %v2326
  %v2328 = vmul.f32 %v2237, 1.442695
  %v2329 = vpow.pop %v2328
  %v2330 = vmul.f32 %v2238, 1.442695
  %v2331 = vpow.pop %v2330
  %v2332 = vmul.f32 %v2239, 1.442695
  %v2333 = vpow.pop %v2332
  %v2334 = vmul.f32 %v2240, 1.442695
  %v2335 = vpow.pop %v2334
  %v2336 = vmul.f32 %v2241, 1.442695
  %v2337 = vpow.pop %v2336
  %v2338 = vmul.f32 %v2242, 1.442695
  %v2339 = vpow.pop %v2338
  %v2340 = vmul.f32 %v2243, 1.442695
  %v2341 = vpow.pop %v2340
  %v2342 = vmul.f32 %v2244, 1.442695
  %v2343 = vpow.pop %v2342
  %v2344 = vmul.f32 %v2245, 1.442695
  %v2345 = vpow.pop %v2344
  %v2346 = vmul.f32 %v2246, 1.442695
  %v2347 = vpow.pop %v2346
  %v2348 = vmul.f32 %v2247, 1.442695
  %v2349 = vpow.pop %v2348
  %v2350 = vmul.f32 %v2248, 1.442695
  %v2351 = vpow.pop %v2350
  %v2352 = vmul.f32 %v2249, 1.442695
  %v2353 = vpow.pop %v2352
  %v2354 = vmul.f32 %v2250, 1.442695
  %v2355 = vpow.pop %v2354
  %v2356 = vmul.f32 %v2251, 1.442695
  %v2357 = vpow.pop %v2356
  %v2358 = vmul.f32 %v2252, 1.442695
  %v2359 = vpow.pop %v2358
  %v2360 = vmul.f32 %v2253, 1.442695
  %v2361 = vpow.pop %v2360
  %v2362 = vmul.f32 %v2254, 1.442695
  %v2363 = vpow.pop %v2362
  %v2364 = vmul.f32 %v2255, 1.442695
  %v2365 = vpow.pop %v2364
  %v2366 = vmul.f32 %v2256, 1.442695
  %v2367 = vpow.pop %v2366
  %v2368 = vmul.f32 %v2257, 1.442695
  %v2369 = vpow.pop %v2368
  %v2370 = vmul.f32 %v2258, 1.442695
  %v2371 = vpow.pop %v2370
  %v2372 = vmul.f32 %v2259, 1.442695
  %v2373 = vpow.pop %v2372
  %v2374 = vmul.f32 %v2260, 1.442695
  %v2375 = vpow.pop %v2374
  %v2376 = vmul.f32 %v2261, 1.442695
  %v2377 = vpow.pop %v2376
  %v2378 = vmul.f32 %v2262, 1.442695
  %v2379 = vpow.pop %v2378
  %v2380 = vmul.f32 %v2263, 1.442695
  %v2381 = vpow.pop %v2380
  %v2382 = vmul.f32 %v2264, 1.442695
  %v2383 = vpow.pop %v2382
  %v2384 = vmul.f32 %v2265, 1.442695
  %v2385 = vpow.pop %v2384
  %v2386 = vadd.f32 %v2267, 1.0
  %v2387 = vadd.f32 %v2269, 1.0
  %v2388 = vadd.f32 %v2271, 1.0
  %v2389 = vadd.f32 %v2273, 1.0
  %v2390 = vadd.f32 %v2275, 1.0
  %v2391 = vadd.f32 %v2277, 1.0
  %v2392 = vadd.f32 %v2279, 1.0
  %v2393 = vadd.f32 %v2281, 1.0
  %v2394 = vadd.f32 %v2283, 1.0
  %v2395 = vadd.f32 %v2285, 1.0
  %v2396 = vadd.f32 %v2287, 1.0
  %v2397 = vadd.f32 %v2289, 1.0
  %v2398 = vadd.f32 %v2291, 1.0
  %v2399 = vadd.f32 %v2293, 1.0
  %v2400 = vadd.f32 %v2295, 1.0
  %v2401 = vadd.f32 %v2297, 1.0
  %v2402 = vadd.f32 %v2299, 1.0
  %v2403 = vadd.f32 %v2301, 1.0
  %v2404 = vadd.f32 %v2303, 1.0
  %v2405 = vadd.f32 %v2305, 1.0
  %v2406 = vadd.f32 %v2307, 1.0
  %v2407 = vadd.f32 %v2309, 1.0
  %v2408 = vadd.f32 %v2311, 1.0
  %v2409 = vadd.f32 %v2313, 1.0
  %v2410 = vadd.f32 %v2315, 1.0
  %v2411 = vadd.f32 %v2317, 1.0
  %v2412 = vadd.f32 %v2319, 1.0
  %v2413 = vadd.f32 %v2321, 1.0
  %v2414 = vadd.f32 %v2323, 1.0
  %v2415 = vadd.f32 %v2325, 1.0
  %v2416 = vadd.f32 %v2327, 1.0
  %v2417 = vadd.f32 %v2329, 1.0
  %v2418 = vadd.f32 %v2331, 1.0
  %v2419 = vadd.f32 %v2333, 1.0
  %v2420 = vadd.f32 %v2335, 1.0
  %v2421 = vadd.f32 %v2337, 1.0
  %v2422 = vadd.f32 %v2339, 1.0
  %v2423 = vadd.f32 %v2341, 1.0
  %v2424 = vadd.f32 %v2343, 1.0
  %v2425 = vadd.f32 %v2345, 1.0
  %v2426 = vadd.f32 %v2347, 1.0
  %v2427 = vadd.f32 %v2349, 1.0
  %v2428 = vadd.f32 %v2351, 1.0
  %v2429 = vadd.f32 %v2353, 1.0
  %v2430 = vadd.f32 %v2355, 1.0
  %v2431 = vadd.f32 %v2357, 1.0
  %v2432 = vadd.f32 %v2359, 1.0
  %v2433 = vadd.f32 %v2361, 1.0
  %v2434 = vadd.f32 %v2363, 1.0
  %v2435 = vadd.f32 %v2365, 1.0
  %v2436 = vadd.f32 %v2367, 1.0
  %v2437 = vadd.f32 %v2369, 1.0
  %v2438 = vadd.f32 %v2371, 1.0
  %v2439 = vadd.f32 %v2373, 1.0
  %v2440 = vadd.f32 %v2375, 1.0
  %v2441 = vadd.f32 %v2377, 1.0
  %v2442 = vadd.f32 %v2379, 1.0
  %v2443 = vadd.f32 %v2381, 1.0
  %v2444 = vadd.f32 %v2383, 1.0
  %v2445 = vadd.f32 %v2385, 1.0
  %v2446 = vrcp.pop %v2386
  %v2447 = vmul.f32 1.0, %v2446
  %v2448 = vrcp.pop %v2387
  %v2449 = vmul.f32 1.0, %v2448
  %v2450 = vrcp.pop %v2388
  %v2451 = vmul.f32 1.0, %v2450
  %v2452 = vrcp.pop %v2389
  %v2453 = vmul.f32 1.0, %v2452
  %v2454 = vrcp.pop %v2390
  %v2455 = vmul.f32 1.0, %v2454
  %v2456 = vrcp.pop %v2391
  %v2457 = vmul.f32 1.0, %v2456
  %v2458 = vrcp.pop %v2392
  %v2459 = vmul.f32 1.0, %v2458
  %v2460 = vrcp.pop %v2393
  %v2461 = vmul.f32 1.0, %v2460
  %v2462 = vrcp.pop %v2394
  %v2463 = vmul.f32 1.0, %v2462
  %v2464 = vrcp.pop %v2395
  %v2465 = vmul.f32 1.0, %v2464
  %v2466 = vrcp.pop %v2396
  %v2467 = vmul.f32 1.0, %v2466
  %v2468 = vrcp.pop %v2397
  %v2469 = vmul.f32 1.0, %v2468
  %v2470 = vrcp.pop %v2398
  %v2471 = vmul.f32 1.0, %v2470
  %v2472 = vrcp.pop %v2399
  %v2473 = vmul.f32 1.0, %v2472
  %v2474 = vrcp.pop %v2400
  %v2475 = vmul.f32 1.0, %v2474
  %v2476 = vrcp.pop %v2401
  %v2477 = vmul.f32 1.0, %v2476
  %v2478 = vrcp.pop %v2402
  %v2479 = vmul.f32 1.0, %v2478
  %v2480 = vrcp.pop %v2403
  %v2481 = vmul.f32 1.0, %v2480
  %v2482 = vrcp.pop %v2404
  %v2483 = vmul.f32 1.0, %v2482
  %v2484 = vrcp.pop %v2405
  %v2485 = vmul.f32 1.0, %v2484
  %v2486 = vrcp.pop %v2406
  %v2487 = vmul.f32 1.0, %v2486
  %v2488 = vrcp.pop %v2407
  %v2489 = vmul.f32 1.0, %v2488
  %v2490 = vrcp.pop %v2408
  %v2491 = vmul.f32 1.0, %v2490
  %v2492 = vrcp.pop %v2409
  %v2493 = vmul.f32 1.0, %v2492
  %v2494 = vrcp.pop %v2410
  %v2495 = vmul.f32 1.0, %v2494
  %v2496 = vrcp.pop %v2411
  %v2497 = vmul.f32 1.0, %v2496
  %v2498 = vrcp.pop %v2412
  %v2499 = vmul.f32 1.0, %v2498
  %v2500 = vrcp.pop %v2413
  %v2501 = vmul.f32 1.0, %v2500
  %v2502 = vrcp.pop %v2414
  %v2503 = vmul.f32 1.0, %v2502
  %v2504 = vrcp.pop %v2415
  %v2505 = vmul.f32 1.0, %v2504
  %v2506 = vrcp.pop %v2416
  %v2507 = vmul.f32 1.0, %v2506
  %v2508 = vrcp.pop %v2417
  %v2509 = vmul.f32 1.0, %v2508
  %v2510 = vrcp.pop %v2418
  %v2511 = vmul.f32 1.0, %v2510
  %v2512 = vrcp.pop %v2419
  %v2513 = vmul.f32 1.0, %v2512
  %v2514 = vrcp.pop %v2420
  %v2515 = vmul.f32 1.0, %v2514
  %v2516 = vrcp.pop %v2421
  %v2517 = vmul.f32 1.0, %v2516
  %v2518 = vrcp.pop %v2422
  %v2519 = vmul.f32 1.0, %v2518
  %v2520 = vrcp.pop %v2423
  %v2521 = vmul.f32 1.0, %v2520
  %v2522 = vrcp.pop %v2424
  %v2523 = vmul.f32 1.0, %v2522
  %v2524 = vrcp.pop %v2425
  %v2525 = vmul.f32 1.0, %v2524
  %v2526 = vrcp.pop %v2426
  %v2527 = vmul.f32 1.0, %v2526
  %v2528 = vrcp.pop %v2427
  %v2529 = vmul.f32 1.0, %v2528
  %v2530 = vrcp.pop %v2428
  %v2531 = vmul.f32 1.0, %v2530
  %v2532 = vrcp.pop %v2429
  %v2533 = vmul.f32 1.0, %v2532
  %v2534 = vrcp.pop %v2430
  %v2535 = vmul.f32 1.0, %v2534
  %v2536 = vrcp.pop %v2431
  %v2537 = vmul.f32 1.0, %v2536
  %v2538 = vrcp.pop %v2432
  %v2539 = vmul.f32 1.0, %v2538
  %v2540 = vrcp.pop %v2433
  %v2541 = vmul.f32 1.0, %v2540
  %v2542 = vrcp.pop %v2434
  %v2543 = vmul.f32 1.0, %v2542
  %v2544 = vrcp.pop %v2435
  %v2545 = vmul.f32 1.0, %v2544
  %v2546 = vrcp.pop %v2436
  %v2547 = vmul.f32 1.0, %v2546
  %v2548 = vrcp.pop %v2437
  %v2549 = vmul.f32 1.0, %v2548
  %v2550 = vrcp.pop %v2438
  %v2551 = vmul.f32 1.0, %v2550
  %v2552 = vrcp.pop %v2439
  %v2553 = vmul.f32 1.0, %v2552
  %v2554 = vrcp.pop %v2440
  %v2555 = vmul.f32 1.0, %v2554
  %v2556 = vrcp.pop %v2441
  %v2557 = vmul.f32 1.0, %v2556
  %v2558 = vrcp.pop %v2442
  %v2559 = vmul.f32 1.0, %v2558
  %v2560 = vrcp.pop %v2443
  %v2561 = vmul.f32 1.0, %v2560
  %v2562 = vrcp.pop %v2444
  %v2563 = vmul.f32 1.0, %v2562
  %v2564 = vrcp.pop %v2445
  %v2565 = vmul.f32 1.0, %v2564
  %v2626 = vrot.slane %v2447, 1
  %v2627 = vrot.slane %v2451, 1
  %v2628 = vsel %vm124, %v2626, %v2627
  %v2629 = vrot.slane %v2449, 1
  %v2630 = vrot.slane %v2453, 1
  %v2631 = vsel %vm124, %v2629, %v2630
  %v2632 = vrot.slane %v2455, 1
  %v2633 = vsel %vm124, %v2627, %v2632
  %v2634 = vrot.slane %v2457, 1
  %v2635 = vsel %vm124, %v2630, %v2634
  %v2636 = vrot.slane %v2459, 1
  %v2637 = vsel %vm124, %v2632, %v2636
  %v2638 = vrot.slane %v2461, 1
  %v2639 = vsel %vm124, %v2634, %v2638
  %v2640 = vrot.slane %v2463, 1
  %v2641 = vsel %vm124, %v2636, %v2640
  %v2642 = vrot.slane %v2465, 1
  %v2643 = vsel %vm124, %v2638, %v2642
  %v2644 = vrot.slane %v2467, 1
  %v2645 = vsel %vm124, %v2640, %v2644
  %v2646 = vrot.slane %v2469, 1
  %v2647 = vsel %vm124, %v2642, %v2646
  %v2648 = vrot.slane %v2471, 1
  %v2649 = vsel %vm124, %v2644, %v2648
  %v2650 = vrot.slane %v2473, 1
  %v2651 = vsel %vm124, %v2646, %v2650
  %v2652 = vrot.slane %v2475, 1
  %v2653 = vsel %vm124, %v2648, %v2652
  %v2654 = vrot.slane %v2477, 1
  %v2655 = vsel %vm124, %v2650, %v2654
  %v2656 = vrot.slane %v2479, 1
  %v2657 = vsel %vm124, %v2652, %v2656
  %v2658 = vrot.slane %v2481, 1
  %v2659 = vsel %vm124, %v2654, %v2658
  %v2660 = vrot.slane %v2483, 1
  %v2661 = vsel %vm124, %v2656, %v2660
  %v2662 = vrot.slane %v2485, 1
  %v2663 = vsel %vm124, %v2658, %v2662
  %v2664 = vrot.slane %v2487, 1
  %v2665 = vsel %vm124, %v2660, %v2664
  %v2666 = vrot.slane %v2489, 1
  %v2667 = vsel %vm124, %v2662, %v2666
  %v2668 = vrot.slane %v2491, 1
  %v2669 = vsel %vm124, %v2664, %v2668
  %v2670 = vrot.slane %v2493, 1
  %v2671 = vsel %vm124, %v2666, %v2670
  %v2672 = vrot.slane %v2495, 1
  %v2673 = vsel %vm124, %v2668, %v2672
  %v2674 = vrot.slane %v2497, 1
  %v2675 = vsel %vm124, %v2670, %v2674
  %v2676 = vrot.slane %v2499, 1
  %v2677 = vsel %vm124, %v2672, %v2676
  %v2678 = vrot.slane %v2501, 1
  %v2679 = vsel %vm124, %v2674, %v2678
  %v2680 = vrot.slane %v2503, 1
  %v2681 = vsel %vm124, %v2676, %v2680
  %v2682 = vrot.slane %v2505, 1
  %v2683 = vsel %vm124, %v2678, %v2682
  %v2684 = vrot.slane %v2507, 1
  %v2685 = vsel %vm124, %v2680, %v2684
  %v2686 = vrot.slane %v2509, 1
  %v2687 = vsel %vm124, %v2682, %v2686
  %v2688 = vrot.slane %v2511, 1
  %v2689 = vsel %vm124, %v2684, %v2688
  %v2690 = vrot.slane %v2513, 1
  %v2691 = vsel %vm124, %v2686, %v2690
  %v2692 = vrot.slane %v2515, 1
  %v2693 = vsel %vm124, %v2688, %v2692
  %v2694 = vrot.slane %v2517, 1
  %v2695 = vsel %vm124, %v2690, %v2694
  %v2696 = vrot.slane %v2519, 1
  %v2697 = vsel %vm124, %v2692, %v2696
  %v2698 = vrot.slane %v2521, 1
  %v2699 = vsel %vm124, %v2694, %v2698
  %v2700 = vrot.slane %v2523, 1
  %v2701 = vsel %vm124, %v2696, %v2700
  %v2702 = vrot.slane %v2525, 1
  %v2703 = vsel %vm124, %v2698, %v2702
  %v2704 = vrot.slane %v2527, 1
  %v2705 = vsel %vm124, %v2700, %v2704
  %v2706 = vrot.slane %v2529, 1
  %v2707 = vsel %vm124, %v2702, %v2706
  %v2708 = vrot.slane %v2531, 1
  %v2709 = vsel %vm124, %v2704, %v2708
  %v2710 = vrot.slane %v2533, 1
  %v2711 = vsel %vm124, %v2706, %v2710
  %v2712 = vrot.slane %v2535, 1
  %v2713 = vsel %vm124, %v2708, %v2712
  %v2714 = vrot.slane %v2537, 1
  %v2715 = vsel %vm124, %v2710, %v2714
  %v2716 = vrot.slane %v2539, 1
  %v2717 = vsel %vm124, %v2712, %v2716
  %v2718 = vrot.slane %v2541, 1
  %v2719 = vsel %vm124, %v2714, %v2718
  %v2720 = vrot.slane %v2543, 1
  %v2721 = vsel %vm124, %v2716, %v2720
  %v2722 = vrot.slane %v2545, 1
  %v2723 = vsel %vm124, %v2718, %v2722
  %v2724 = vrot.slane %v2547, 1
  %v2725 = vsel %vm124, %v2720, %v2724
  %v2726 = vrot.slane %v2549, 1
  %v2727 = vsel %vm124, %v2722, %v2726
  %v2728 = vrot.slane %v2551, 1
  %v2729 = vsel %vm124, %v2724, %v2728
  %v2730 = vrot.slane %v2553, 1
  %v2731 = vsel %vm124, %v2726, %v2730
  %v2732 = vrot.slane %v2555, 1
  %v2733 = vsel %vm124, %v2728, %v2732
  %v2734 = vrot.slane %v2557, 1
  %v2735 = vsel %vm124, %v2730, %v2734
  %v2736 = vrot.slane %v2559, 1
  %v2737 = vsel %vm124, %v2732, %v2736
  %v2738 = vrot.slane %v2561, 1
  %v2739 = vsel %vm124, %v2734, %v2738
  %v2740 = vrot.slane %v2563, 1
  %v2741 = vsel %vm124, %v2736, %v2740
  %v2742 = vrot.slane %v2565, 1
  %v2743 = vsel %vm124, %v2738, %v2742
  %v2802 = vadd.f32 %v2447, %v2628
  %v2803 = vadd.f32 %v2449, %v2631
  %v2804 = vadd.f32 %v2451, %v2633
  %v2805 = vadd.f32 %v2453, %v2635
  %v2806 = vadd.f32 %v2455, %v2637
  %v2807 = vadd.f32 %v2457, %v2639
  %v2808 = vadd.f32 %v2459, %v2641
  %v2809 = vadd.f32 %v2461, %v2643
  %v2810 = vadd.f32 %v2463, %v2645
  %v2811 = vadd.f32 %v2465, %v2647
  %v2812 = vadd.f32 %v2467, %v2649
  %v2813 = vadd.f32 %v2469, %v2651
  %v2814 = vadd.f32 %v2471, %v2653
  %v2815 = vadd.f32 %v2473, %v2655
  %v2816 = vadd.f32 %v2475, %v2657
  %v2817 = vadd.f32 %v2477, %v2659
  %v2818 = vadd.f32 %v2479, %v2661
  %v2819 = vadd.f32 %v2481, %v2663
  %v2820 = vadd.f32 %v2483, %v2665
  %v2821 = vadd.f32 %v2485, %v2667
  %v2822 = vadd.f32 %v2487, %v2669
  %v2823 = vadd.f32 %v2489, %v2671
  %v2824 = vadd.f32 %v2491, %v2673
  %v2825 = vadd.f32 %v2493, %v2675
  %v2826 = vadd.f32 %v2495, %v2677
  %v2827 = vadd.f32 %v2497, %v2679
  %v2828 = vadd.f32 %v2499, %v2681
  %v2829 = vadd.f32 %v2501, %v2683
  %v2830 = vadd.f32 %v2503, %v2685
  %v2831 = vadd.f32 %v2505, %v2687
  %v2832 = vadd.f32 %v2507, %v2689
  %v2833 = vadd.f32 %v2509, %v2691
  %v2834 = vadd.f32 %v2511, %v2693
  %v2835 = vadd.f32 %v2513, %v2695
  %v2836 = vadd.f32 %v2515, %v2697
  %v2837 = vadd.f32 %v2517, %v2699
  %v2838 = vadd.f32 %v2519, %v2701
  %v2839 = vadd.f32 %v2521, %v2703
  %v2840 = vadd.f32 %v2523, %v2705
  %v2841 = vadd.f32 %v2525, %v2707
  %v2842 = vadd.f32 %v2527, %v2709
  %v2843 = vadd.f32 %v2529, %v2711
  %v2844 = vadd.f32 %v2531, %v2713
  %v2845 = vadd.f32 %v2533, %v2715
  %v2846 = vadd.f32 %v2535, %v2717
  %v2847 = vadd.f32 %v2537, %v2719
  %v2848 = vadd.f32 %v2539, %v2721
  %v2849 = vadd.f32 %v2541, %v2723
  %v2850 = vadd.f32 %v2543, %v2725
  %v2851 = vadd.f32 %v2545, %v2727
  %v2852 = vadd.f32 %v2547, %v2729
  %v2853 = vadd.f32 %v2549, %v2731
  %v2854 = vadd.f32 %v2551, %v2733
  %v2855 = vadd.f32 %v2553, %v2735
  %v2856 = vadd.f32 %v2555, %v2737
  %v2857 = vadd.f32 %v2557, %v2739
  %v2858 = vadd.f32 %v2559, %v2741
  %v2859 = vadd.f32 %v2561, %v2743
  %v2860 = vld [vmem:[%s3] sm:$0xff]
  %v2861 = vld [vmem:[%s3 + $0x8] sm:$0xff]
  %v2862 = vld [vmem:[%s3 + $0x10] sm:$0xff]
  %v2863 = vld [vmem:[%s3 + $0x18] sm:$0xff]
  %v2864 = vld [vmem:[%s3 + $0x20] sm:$0xff]
  %v2865 = vld [vmem:[%s3 + $0x28] sm:$0xff]
  %v2866 = vld [vmem:[%s3 + $0x30] sm:$0xff]
  %v2867 = vld [vmem:[%s3 + $0x38] sm:$0xff]
  %v2868 = vld [vmem:[%s3 + $0x40] sm:$0xff]
  %v2869 = vld [vmem:[%s3 + $0x48] sm:$0xff]
  %v2870 = vld [vmem:[%s3 + $0x50] sm:$0xff]
  %v2871 = vld [vmem:[%s3 + $0x58] sm:$0xff]
  %v2872 = vld [vmem:[%s3 + $0x60] sm:$0xff]
  %v2873 = vld [vmem:[%s3 + $0x68] sm:$0xff]
  %v2874 = vld [vmem:[%s3 + $0x70] sm:$0xff]
  %v2875 = vld [vmem:[%s3 + $0x78] sm:$0xff]
  %v2876 = vld [vmem:[%s3 + $0x80] sm:$0xff]
  %v2877 = vld [vmem:[%s3 + $0x88] sm:$0xff]
  %vm2878 = vcmask 130048
  %v2880 = vsel %vm2878, %v2803, 0
  %v2883 = vsel %vm2878, %v2805, 0
  %v2886 = vsel %vm2878, %v2807, 0
  %v2889 = vsel %vm2878, %v2809, 0
  %v2892 = vsel %vm2878, %v2811, 0
  %v2895 = vsel %vm2878, %v2813, 0
  %v2898 = vsel %vm2878, %v2815, 0
  %v2901 = vsel %vm2878, %v2817, 0
  %v2904 = vsel %vm2878, %v2819, 0
  %v2907 = vsel %vm2878, %v2821, 0
  %v2910 = vsel %vm2878, %v2823, 0
  %v2913 = vsel %vm2878, %v2825, 0
  %v2916 = vsel %vm2878, %v2827, 0
  %v2919 = vsel %vm2878, %v2829, 0
  %v2922 = vsel %vm2878, %v2831, 0
  %v2925 = vsel %vm2878, %v2833, 0
  %v2928 = vsel %vm2878, %v2835, 0
  %v2931 = vsel %vm2878, %v2837, 0
  %v2934 = vsel %vm2878, %v2839, 0
  %v2937 = vsel %vm2878, %v2841, 0
  %v2940 = vsel %vm2878, %v2843, 0
  %v2943 = vsel %vm2878, %v2845, 0
  %v2946 = vsel %vm2878, %v2847, 0
  %v2949 = vsel %vm2878, %v2849, 0
  %v2952 = vsel %vm2878, %v2851, 0
  %v2955 = vsel %vm2878, %v2853, 0
  %v2958 = vsel %vm2878, %v2855, 0
  %v2961 = vsel %vm2878, %v2857, 0
  %v2964 = vsel %vm2878, %v2859, 0
  %2966 = vmatprep.subr.mxu0 0.0
  %2967 = vmatpush1.msra.mxu0 %v2875
  %2968 = vmatprep.subr.mxu0 0.0
  %2969 = vmatpush1.msra.mxu0 %v2874
  %2970 = vmatprep.subr.mxu0 0.0
  %2971 = vmatpush1.msra.mxu0 %v2873
  %2972 = vmatprep.subr.mxu0 0.0
  %2973 = vmatpush1.msra.mxu0 %v2872
  %2974 = vmatprep.subr.mxu0 0.0
  %2975 = vmatpush1.msra.mxu0 %v2871
  %2976 = vmatprep.subr.mxu0 0.0
  %2977 = vmatpush1.msra.mxu0 %v2870
  %2978 = vmatprep.subr.mxu0 0.0
  %2979 = vmatpush1.msra.mxu0 %v2869
  %2980 = vmatprep.subr.mxu0 0.0
  %2981 = vmatpush1.msra.mxu0 %v2868
  %2982 = vmatprep.subr.mxu0 0.0
  %2983 = vmatpush1.msra.mxu0 %v2867
  %2984 = vmatprep.subr.mxu0 0.0
  %2985 = vmatpush1.msra.mxu0 %v2866
  %2986 = vmatprep.subr.mxu0 0.0
  %2987 = vmatpush1.msra.mxu0 %v2865
  %2988 = vmatprep.subr.mxu0 0.0
  %2989 = vmatpush1.msra.mxu0 %v2864
  %2990 = vmatprep.subr.mxu0 0.0
  %2991 = vmatpush1.msra.mxu0 %v2863
  %2992 = vmatprep.subr.mxu0 0.0
  %2993 = vmatpush1.msra.mxu0 %v2862
  %2994 = vmatprep.subr.mxu0 0.0
  %2995 = vmatpush1.msra.mxu0 %v2861
  %2996 = vmatprep.subr.mxu0 0.0
  %2997 = vmatpush1.msra.mxu0 %v2860
  %2998 = vmatprep.subr.mxu0 0.0
  %2999 = vmatpush2.msra.mxu0 0.0
  %3000 = vmatprep.subr.mxu0 0.0
  %3001 = vmatpush2.msra.mxu0 0.0
  %3002 = vmatprep.subr.mxu0 0.0
  %3003 = vmatpush2.msra.mxu0 0.0
  %3004 = vmatprep.subr.mxu0 0.0
  %3005 = vmatpush2.msra.mxu0 0.0
  %3006 = vmatprep.subr.mxu0 0.0
  %3007 = vmatpush2.msra.mxu0 0.0
  %3008 = vmatprep.subr.mxu0 0.0
  %3009 = vmatpush2.msra.mxu0 0.0
  %3010 = vmatprep.subr.mxu0 0.0
  %3011 = vmatpush2.msra.mxu0 0.0
  %3012 = vmatprep.subr.mxu0 0.0
  %3013 = vmatpush2.msra.mxu0 0.0
  %3014 = vmatprep.subr.mxu0 0.0
  %3015 = vmatpush2.msra.mxu0 0.0
  %3016 = vmatprep.subr.mxu0 0.0
  %3017 = vmatpush2.msra.mxu0 0.0
  %3018 = vmatprep.subr.mxu0 0.0
  %3019 = vmatpush2.msra.mxu0 0.0
  %3020 = vmatprep.subr.mxu0 0.0
  %3021 = vmatpush2.msra.mxu0 0.0
  %3022 = vmatprep.subr.mxu0 0.0
  %3023 = vmatpush2.msra.mxu0 0.0
  %3024 = vmatprep.subr.mxu0 0.0
  %3025 = vmatpush2.msra.mxu0 0.0
  %3026 = vmatprep.subr.mxu0 0.0
  %3027 = vmatpush2.msra.mxu0 %v2877
  %3028 = vmatprep.subr.mxu0 0.0
  %3029 = vmatpush2.msra.mxu0 %v2876
  %3030 = vmatprep.mubr.f32.mxu0 %v2880
  %3031 = vmatmul.mubr.f32.gmra.mxu0 %v2802
  %v3032 = vpop.f32.mrf.mxu0
  %v3033 = vadd.f32 0.0, %v3032
  %v3034 = vpop.f32.mrf.mxu0
  %3035 = vmatprep.mubr.f32.mxu0 %v2883
  %3036 = vmatmul.mubr.f32.gmra.mxu0 %v2804
  %v3037 = vpop.f32.mrf.mxu0
  %v3038 = vadd.f32 0.0, %v3037
  %v3039 = vpop.f32.mrf.mxu0
  %3040 = vmatprep.mubr.f32.mxu0 %v2886
  %3041 = vmatmul.mubr.f32.gmra.mxu0 %v2806
  %v3042 = vpop.f32.mrf.mxu0
  %v3043 = vadd.f32 0.0, %v3042
  %v3044 = vpop.f32.mrf.mxu0
  %3045 = vmatprep.mubr.f32.mxu0 %v2889
  %3046 = vmatmul.mubr.f32.gmra.mxu0 %v2808
  %v3047 = vpop.f32.mrf.mxu0
  %v3048 = vadd.f32 0.0, %v3047
  %v3049 = vpop.f32.mrf.mxu0
  %3050 = vmatprep.mubr.f32.mxu0 %v2892
  %3051 = vmatmul.mubr.f32.gmra.mxu0 %v2810
  %v3052 = vpop.f32.mrf.mxu0
  %v3053 = vadd.f32 0.0, %v3052
  %v3054 = vpop.f32.mrf.mxu0
  %3055 = vmatprep.mubr.f32.mxu0 %v2895
  %3056 = vmatmul.mubr.f32.gmra.mxu0 %v2812
  %v3057 = vpop.f32.mrf.mxu0
  %v3058 = vadd.f32 0.0, %v3057
  %v3059 = vpop.f32.mrf.mxu0
  %3060 = vmatprep.mubr.f32.mxu0 %v2898
  %3061 = vmatmul.mubr.f32.gmra.mxu0 %v2814
  %v3062 = vpop.f32.mrf.mxu0
  %v3063 = vadd.f32 0.0, %v3062
  %v3064 = vpop.f32.mrf.mxu0
  %3065 = vmatprep.mubr.f32.mxu0 %v2901
  %3066 = vmatmul.mubr.f32.gmra.mxu0 %v2816
  %v3067 = vpop.f32.mrf.mxu0
  %v3068 = vadd.f32 0.0, %v3067
  %v3069 = vpop.f32.mrf.mxu0
  %3070 = vmatprep.mubr.f32.mxu0 %v2904
  %3071 = vmatmul.mubr.f32.gmra.mxu0 %v2818
  %v3072 = vpop.f32.mrf.mxu0
  %v3073 = vadd.f32 0.0, %v3072
  %v3074 = vpop.f32.mrf.mxu0
  %3075 = vmatprep.mubr.f32.mxu0 %v2907
  %3076 = vmatmul.mubr.f32.gmra.mxu0 %v2820
  %v3077 = vpop.f32.mrf.mxu0
  %v3078 = vadd.f32 0.0, %v3077
  %v3079 = vpop.f32.mrf.mxu0
  %3080 = vmatprep.mubr.f32.mxu0 %v2910
  %3081 = vmatmul.mubr.f32.gmra.mxu0 %v2822
  %v3082 = vpop.f32.mrf.mxu0
  %v3083 = vadd.f32 0.0, %v3082
  %v3084 = vpop.f32.mrf.mxu0
  %3085 = vmatprep.mubr.f32.mxu0 %v2913
  %3086 = vmatmul.mubr.f32.gmra.mxu0 %v2824
  %v3087 = vpop.f32.mrf.mxu0
  %v3088 = vadd.f32 0.0, %v3087
  %v3089 = vpop.f32.mrf.mxu0
  %3090 = vmatprep.mubr.f32.mxu0 %v2916
  %3091 = vmatmul.mubr.f32.gmra.mxu0 %v2826
  %v3092 = vpop.f32.mrf.mxu0
  %v3093 = vadd.f32 0.0, %v3092
  %v3094 = vpop.f32.mrf.mxu0
  %3095 = vmatprep.mubr.f32.mxu0 %v2919
  %3096 = vmatmul.mubr.f32.gmra.mxu0 %v2828
  %v3097 = vpop.f32.mrf.mxu0
  %v3098 = vadd.f32 0.0, %v3097
  %v3099 = vpop.f32.mrf.mxu0
  %3100 = vmatprep.mubr.f32.mxu0 %v2922
  %3101 = vmatmul.mubr.f32.gmra.mxu0 %v2830
  %v3102 = vpop.f32.mrf.mxu0
  %v3103 = vadd.f32 0.0, %v3102
  %v3104 = vpop.f32.mrf.mxu0
  %3105 = vmatprep.mubr.f32.mxu0 %v2925
  %3106 = vmatmul.mubr.f32.gmra.mxu0 %v2832
  %v3107 = vpop.f32.mrf.mxu0
  %v3108 = vadd.f32 0.0, %v3107
  %v3109 = vpop.f32.mrf.mxu0
  %3110 = vmatprep.mubr.f32.mxu0 %v2928
  %3111 = vmatmul.mubr.f32.gmra.mxu0 %v2834
  %v3112 = vpop.f32.mrf.mxu0
  %v3113 = vadd.f32 0.0, %v3112
  %v3114 = vpop.f32.mrf.mxu0
  %3115 = vmatprep.mubr.f32.mxu0 %v2931
  %3116 = vmatmul.mubr.f32.gmra.mxu0 %v2836
  %v3117 = vpop.f32.mrf.mxu0
  %v3118 = vadd.f32 0.0, %v3117
  %v3119 = vpop.f32.mrf.mxu0
  %3120 = vmatprep.mubr.f32.mxu0 %v2934
  %3121 = vmatmul.mubr.f32.gmra.mxu0 %v2838
  %v3122 = vpop.f32.mrf.mxu0
  %v3123 = vadd.f32 0.0, %v3122
  %v3124 = vpop.f32.mrf.mxu0
  %3125 = vmatprep.mubr.f32.mxu0 %v2937
  %3126 = vmatmul.mubr.f32.gmra.mxu0 %v2840
  %v3127 = vpop.f32.mrf.mxu0
  %v3128 = vadd.f32 0.0, %v3127
  %v3129 = vpop.f32.mrf.mxu0
  %3130 = vmatprep.mubr.f32.mxu0 %v2940
  %3131 = vmatmul.mubr.f32.gmra.mxu0 %v2842
  %v3132 = vpop.f32.mrf.mxu0
  %v3133 = vadd.f32 0.0, %v3132
  %v3134 = vpop.f32.mrf.mxu0
  %3135 = vmatprep.mubr.f32.mxu0 %v2943
  %3136 = vmatmul.mubr.f32.gmra.mxu0 %v2844
  %v3137 = vpop.f32.mrf.mxu0
  %v3138 = vadd.f32 0.0, %v3137
  %v3139 = vpop.f32.mrf.mxu0
  %3140 = vmatprep.mubr.f32.mxu0 %v2946
  %3141 = vmatmul.mubr.f32.gmra.mxu0 %v2846
  %v3142 = vpop.f32.mrf.mxu0
  %v3143 = vadd.f32 0.0, %v3142
  %v3144 = vpop.f32.mrf.mxu0
  %3145 = vmatprep.mubr.f32.mxu0 %v2949
  %3146 = vmatmul.mubr.f32.gmra.mxu0 %v2848
  %v3147 = vpop.f32.mrf.mxu0
  %v3148 = vadd.f32 0.0, %v3147
  %v3149 = vpop.f32.mrf.mxu0
  %3150 = vmatprep.mubr.f32.mxu0 %v2952
  %3151 = vmatmul.mubr.f32.gmra.mxu0 %v2850
  %v3152 = vpop.f32.mrf.mxu0
  %v3153 = vadd.f32 0.0, %v3152
  %v3154 = vpop.f32.mrf.mxu0
  %3155 = vmatprep.mubr.f32.mxu0 %v2955
  %3156 = vmatmul.mubr.f32.gmra.mxu0 %v2852
  %v3157 = vpop.f32.mrf.mxu0
  %v3158 = vadd.f32 0.0, %v3157
  %v3159 = vpop.f32.mrf.mxu0
  %3160 = vmatprep.mubr.f32.mxu0 %v2958
  %3161 = vmatmul.mubr.f32.gmra.mxu0 %v2854
  %v3162 = vpop.f32.mrf.mxu0
  %v3163 = vadd.f32 0.0, %v3162
  %v3164 = vpop.f32.mrf.mxu0
  %3165 = vmatprep.mubr.f32.mxu0 %v2961
  %3166 = vmatmul.mubr.f32.gmra.mxu0 %v2856
  %v3167 = vpop.f32.mrf.mxu0
  %v3168 = vadd.f32 0.0, %v3167
  %v3169 = vpop.f32.mrf.mxu0
  %3170 = vmatprep.mubr.f32.mxu0 %v2964
  %3171 = vmatmul.mubr.f32.gmra.mxu0 %v2858
  %v3172 = vpop.f32.mrf.mxu0
  %v3173 = vadd.f32 0.0, %v3172
  %v3174 = vpop.f32.mrf.mxu0
  %3175 = vdwg.mxu0
  %v3176 = vld [vmem:[%s5] sm:$0x1]
  %v3177 = vld [vmem:[%s4] sm:$0xff]
  %v3178 = vld [vmem:[%s4 + $0x8] sm:$0xff]
  %v3179 = vld [vmem:[%s4 + $0x10] sm:$0xff]
  %v3180 = vld [vmem:[%s4 + $0x18] sm:$0xff]
  %v3181 = vld [vmem:[%s4 + $0x20] sm:$0xff]
  %v3182 = vld [vmem:[%s4 + $0x28] sm:$0xff]
  %v3183 = vld [vmem:[%s4 + $0x30] sm:$0xff]
  %v3184 = vld [vmem:[%s4 + $0x38] sm:$0xff]
  %v3185 = vld [vmem:[%s4 + $0x40] sm:$0xff]
  %s3186 = scalar_lea.vmem %s4, 72
  %v3187 = vld [vmem:[%s3186] sm:$0xff]
  %v3188 = vld [vmem:[%s3186 + $0x8] sm:$0xff]
  %v3189 = vld [vmem:[%s3186 + $0x10] sm:$0xff]
  %v3190 = vld [vmem:[%s3186 + $0x18] sm:$0xff]
  %v3191 = vld [vmem:[%s3186 + $0x20] sm:$0xff]
  %v3192 = vld [vmem:[%s3186 + $0x28] sm:$0xff]
  %v3193 = vld [vmem:[%s3186 + $0x30] sm:$0xff]
  %v3194 = vld [vmem:[%s3186 + $0x38] sm:$0xff]
  %v3195 = vld [vmem:[%s3186 + $0x40] sm:$0xff]
  %v3225 = vrot.slane %v3033, 2
  %v3226 = vrot.slane %v3038, 2
  %v3227 = vsel %vm819, %v3225, %v3226
  %v3228 = vrot.slane %v3043, 2
  %v3229 = vsel %vm819, %v3226, %v3228
  %v3230 = vrot.slane %v3048, 2
  %v3231 = vsel %vm819, %v3228, %v3230
  %v3232 = vrot.slane %v3053, 2
  %v3233 = vsel %vm819, %v3230, %v3232
  %v3234 = vrot.slane %v3058, 2
  %v3235 = vsel %vm819, %v3232, %v3234
  %v3236 = vrot.slane %v3063, 2
  %v3237 = vsel %vm819, %v3234, %v3236
  %v3238 = vrot.slane %v3068, 2
  %v3239 = vsel %vm819, %v3236, %v3238
  %v3240 = vrot.slane %v3073, 2
  %v3241 = vsel %vm819, %v3238, %v3240
  %v3242 = vrot.slane %v3078, 2
  %v3243 = vsel %vm819, %v3240, %v3242
  %v3244 = vrot.slane %v3083, 2
  %v3245 = vsel %vm819, %v3242, %v3244
  %v3246 = vrot.slane %v3088, 2
  %v3247 = vsel %vm819, %v3244, %v3246
  %v3248 = vrot.slane %v3093, 2
  %v3249 = vsel %vm819, %v3246, %v3248
  %v3250 = vrot.slane %v3098, 2
  %v3251 = vsel %vm819, %v3248, %v3250
  %v3252 = vrot.slane %v3103, 2
  %v3253 = vsel %vm819, %v3250, %v3252
  %v3254 = vrot.slane %v3108, 2
  %v3255 = vsel %vm819, %v3252, %v3254
  %v3256 = vrot.slane %v3113, 2
  %v3257 = vsel %vm819, %v3254, %v3256
  %v3258 = vrot.slane %v3118, 2
  %v3259 = vsel %vm819, %v3256, %v3258
  %v3260 = vrot.slane %v3123, 2
  %v3261 = vsel %vm819, %v3258, %v3260
  %v3262 = vrot.slane %v3128, 2
  %v3263 = vsel %vm819, %v3260, %v3262
  %v3264 = vrot.slane %v3133, 2
  %v3265 = vsel %vm819, %v3262, %v3264
  %v3266 = vrot.slane %v3138, 2
  %v3267 = vsel %vm819, %v3264, %v3266
  %v3268 = vrot.slane %v3143, 2
  %v3269 = vsel %vm819, %v3266, %v3268
  %v3270 = vrot.slane %v3148, 2
  %v3271 = vsel %vm819, %v3268, %v3270
  %v3272 = vrot.slane %v3153, 2
  %v3273 = vsel %vm819, %v3270, %v3272
  %v3274 = vrot.slane %v3158, 2
  %v3275 = vsel %vm819, %v3272, %v3274
  %v3276 = vrot.slane %v3163, 2
  %v3277 = vsel %vm819, %v3274, %v3276
  %v3278 = vrot.slane %v3168, 2
  %v3279 = vsel %vm819, %v3276, %v3278
  %v3280 = vrot.slane %v3173, 2
  %v3281 = vsel %vm819, %v3278, %v3280
  %vm3282 = vcmask 588800
  %v3283 = vsel %vm3282, %v3227, 0
  %v3285 = vsel %vm3282, %v3229, 0
  %v3287 = vsel %vm3282, %v3231, 0
  %v3289 = vsel %vm3282, %v3233, 0
  %v3291 = vsel %vm3282, %v3235, 0
  %v3293 = vsel %vm3282, %v3237, 0
  %v3295 = vsel %vm3282, %v3239, 0
  %v3297 = vsel %vm3282, %v3241, 0
  %v3299 = vsel %vm3282, %v3243, 0
  %v3301 = vsel %vm3282, %v3245, 0
  %v3303 = vsel %vm3282, %v3247, 0
  %v3305 = vsel %vm3282, %v3249, 0
  %v3307 = vsel %vm3282, %v3251, 0
  %v3309 = vsel %vm3282, %v3253, 0
  %v3311 = vsel %vm3282, %v3255, 0
  %v3313 = vsel %vm3282, %v3257, 0
  %v3315 = vsel %vm3282, %v3259, 0
  %v3317 = vsel %vm3282, %v3261, 0
  %v3319 = vsel %vm3282, %v3263, 0
  %v3321 = vsel %vm3282, %v3265, 0
  %v3323 = vsel %vm3282, %v3267, 0
  %v3325 = vsel %vm3282, %v3269, 0
  %v3327 = vsel %vm3282, %v3271, 0
  %v3329 = vsel %vm3282, %v3273, 0
  %v3331 = vsel %vm3282, %v3275, 0
  %v3333 = vsel %vm3282, %v3277, 0
  %v3335 = vsel %vm3282, %v3279, 0
  %v3337 = vsel %vm3282, %v3281, 0
  %3339 = vmatprep.subr.mxu0 0.0
  %3340 = vmatpush1.msra.mxu0 0.0
  %3341 = vmatprep.subr.mxu0 0.0
  %3342 = vmatpush1.msra.mxu0 0.0
  %3343 = vmatprep.subr.mxu0 0.0
  %3344 = vmatpush1.msra.mxu0 0.0
  %3345 = vmatprep.subr.mxu0 0.0
  %3346 = vmatpush1.msra.mxu0 0.0
  %3347 = vmatprep.subr.mxu0 0.0
  %3348 = vmatpush1.msra.mxu0 0.0
  %3349 = vmatprep.subr.mxu0 0.0
  %3350 = vmatpush1.msra.mxu0 0.0
  %3351 = vmatprep.subr.mxu0 0.0
  %3352 = vmatpush1.msra.mxu0 0.0
  %3353 = vmatprep.subr.mxu0 0.0
  %3354 = vmatpush1.msra.mxu0 %v3195
  %3355 = vmatprep.subr.mxu0 0.0
  %3356 = vmatpush1.msra.mxu0 %v3194
  %3357 = vmatprep.subr.mxu0 0.0
  %3358 = vmatpush1.msra.mxu0 %v3193
  %3359 = vmatprep.subr.mxu0 0.0
  %3360 = vmatpush1.msra.mxu0 %v3192
  %3361 = vmatprep.subr.mxu0 0.0
  %3362 = vmatpush1.msra.mxu0 %v3191
  %3363 = vmatprep.subr.mxu0 0.0
  %3364 = vmatpush1.msra.mxu0 %v3190
  %3365 = vmatprep.subr.mxu0 0.0
  %3366 = vmatpush1.msra.mxu0 %v3189
  %3367 = vmatprep.subr.mxu0 0.0
  %3368 = vmatpush1.msra.mxu0 %v3188
  %3369 = vmatprep.subr.mxu0 0.0
  %3370 = vmatpush1.msra.mxu0 %v3187
  %3371 = vmatprep.subr.mxu0 0.0
  %3372 = vmatpush2.msra.mxu0 0.0
  %3373 = vmatprep.subr.mxu0 0.0
  %3374 = vmatpush2.msra.mxu0 0.0
  %3375 = vmatprep.subr.mxu0 0.0
  %3376 = vmatpush2.msra.mxu0 0.0
  %3377 = vmatprep.subr.mxu0 0.0
  %3378 = vmatpush2.msra.mxu0 0.0
  %3379 = vmatprep.subr.mxu0 0.0
  %3380 = vmatpush2.msra.mxu0 0.0
  %3381 = vmatprep.subr.mxu0 0.0
  %3382 = vmatpush2.msra.mxu0 0.0
  %3383 = vmatprep.subr.mxu0 0.0
  %3384 = vmatpush2.msra.mxu0 0.0
  %3385 = vmatprep.subr.mxu0 0.0
  %3386 = vmatpush2.msra.mxu0 0.0
  %3387 = vmatprep.subr.mxu0 0.0
  %3388 = vmatpush2.msra.mxu0 0.0
  %3389 = vmatprep.subr.mxu0 0.0
  %3390 = vmatpush2.msra.mxu0 0.0
  %3391 = vmatprep.subr.mxu0 0.0
  %3392 = vmatpush2.msra.mxu0 0.0
  %3393 = vmatprep.subr.mxu0 0.0
  %3394 = vmatpush2.msra.mxu0 0.0
  %3395 = vmatprep.subr.mxu0 0.0
  %3396 = vmatpush2.msra.mxu0 0.0
  %3397 = vmatprep.subr.mxu0 0.0
  %3398 = vmatpush2.msra.mxu0 0.0
  %3399 = vmatprep.subr.mxu0 0.0
  %3400 = vmatpush2.msra.mxu0 0.0
  %3401 = vmatprep.subr.mxu0 0.0
  %3402 = vmatpush2.msra.mxu0 0.0
  %3403 = vmatprep.mubr.f32.mxu0 0.0
  %3404 = vmatmul.mubr.f32.gmra.mxu0 %v3283
  %v3405 = vpop.f32.mrf.mxu0
  %v3406 = vadd.f32 0.0, %v3405
  %v3407 = vpop.f32.mrf.mxu0
  %3408 = vmatprep.mubr.f32.mxu0 0.0
  %3409 = vmatmul.mubr.f32.gmra.mxu0 %v3285
  %v3410 = vpop.f32.mrf.mxu0
  %v3411 = vadd.f32 0.0, %v3410
  %v3412 = vpop.f32.mrf.mxu0
  %3413 = vmatprep.mubr.f32.mxu0 0.0
  %3414 = vmatmul.mubr.f32.gmra.mxu0 %v3287
  %v3415 = vpop.f32.mrf.mxu0
  %v3416 = vadd.f32 0.0, %v3415
  %v3417 = vpop.f32.mrf.mxu0
  %3418 = vmatprep.mubr.f32.mxu0 0.0
  %3419 = vmatmul.mubr.f32.gmra.mxu0 %v3289
  %v3420 = vpop.f32.mrf.mxu0
  %v3421 = vadd.f32 0.0, %v3420
  %v3422 = vpop.f32.mrf.mxu0
  %3423 = vmatprep.mubr.f32.mxu0 0.0
  %3424 = vmatmul.mubr.f32.gmra.mxu0 %v3291
  %v3425 = vpop.f32.mrf.mxu0
  %v3426 = vadd.f32 0.0, %v3425
  %v3427 = vpop.f32.mrf.mxu0
  %3428 = vmatprep.mubr.f32.mxu0 0.0
  %3429 = vmatmul.mubr.f32.gmra.mxu0 %v3293
  %v3430 = vpop.f32.mrf.mxu0
  %v3431 = vadd.f32 0.0, %v3430
  %v3432 = vpop.f32.mrf.mxu0
  %3433 = vmatprep.mubr.f32.mxu0 0.0
  %3434 = vmatmul.mubr.f32.gmra.mxu0 %v3295
  %v3435 = vpop.f32.mrf.mxu0
  %v3436 = vadd.f32 0.0, %v3435
  %v3437 = vpop.f32.mrf.mxu0
  %3438 = vmatprep.mubr.f32.mxu0 0.0
  %3439 = vmatmul.mubr.f32.gmra.mxu0 %v3297
  %v3440 = vpop.f32.mrf.mxu0
  %v3441 = vadd.f32 0.0, %v3440
  %v3442 = vpop.f32.mrf.mxu0
  %3443 = vmatprep.mubr.f32.mxu0 0.0
  %3444 = vmatmul.mubr.f32.gmra.mxu0 %v3299
  %v3445 = vpop.f32.mrf.mxu0
  %v3446 = vadd.f32 0.0, %v3445
  %v3447 = vpop.f32.mrf.mxu0
  %3448 = vmatprep.mubr.f32.mxu0 0.0
  %3449 = vmatmul.mubr.f32.gmra.mxu0 %v3301
  %v3450 = vpop.f32.mrf.mxu0
  %v3451 = vadd.f32 0.0, %v3450
  %v3452 = vpop.f32.mrf.mxu0
  %3453 = vmatprep.mubr.f32.mxu0 0.0
  %3454 = vmatmul.mubr.f32.gmra.mxu0 %v3303
  %v3455 = vpop.f32.mrf.mxu0
  %v3456 = vadd.f32 0.0, %v3455
  %v3457 = vpop.f32.mrf.mxu0
  %3458 = vmatprep.mubr.f32.mxu0 0.0
  %3459 = vmatmul.mubr.f32.gmra.mxu0 %v3305
  %v3460 = vpop.f32.mrf.mxu0
  %v3461 = vadd.f32 0.0, %v3460
  %v3462 = vpop.f32.mrf.mxu0
  %3463 = vmatprep.mubr.f32.mxu0 0.0
  %3464 = vmatmul.mubr.f32.gmra.mxu0 %v3307
  %v3465 = vpop.f32.mrf.mxu0
  %v3466 = vadd.f32 0.0, %v3465
  %v3467 = vpop.f32.mrf.mxu0
  %3468 = vmatprep.mubr.f32.mxu0 0.0
  %3469 = vmatmul.mubr.f32.gmra.mxu0 %v3309
  %v3470 = vpop.f32.mrf.mxu0
  %v3471 = vadd.f32 0.0, %v3470
  %v3472 = vpop.f32.mrf.mxu0
  %3473 = vmatprep.mubr.f32.mxu0 0.0
  %3474 = vmatmul.mubr.f32.gmra.mxu0 %v3311
  %v3475 = vpop.f32.mrf.mxu0
  %v3476 = vadd.f32 0.0, %v3475
  %v3477 = vpop.f32.mrf.mxu0
  %3478 = vmatprep.mubr.f32.mxu0 0.0
  %3479 = vmatmul.mubr.f32.gmra.mxu0 %v3313
  %v3480 = vpop.f32.mrf.mxu0
  %v3481 = vadd.f32 0.0, %v3480
  %v3482 = vpop.f32.mrf.mxu0
  %3483 = vmatprep.mubr.f32.mxu0 0.0
  %3484 = vmatmul.mubr.f32.gmra.mxu0 %v3315
  %v3485 = vpop.f32.mrf.mxu0
  %v3486 = vadd.f32 0.0, %v3485
  %v3487 = vpop.f32.mrf.mxu0
  %3488 = vmatprep.mubr.f32.mxu0 0.0
  %3489 = vmatmul.mubr.f32.gmra.mxu0 %v3317
  %v3490 = vpop.f32.mrf.mxu0
  %v3491 = vadd.f32 0.0, %v3490
  %v3492 = vpop.f32.mrf.mxu0
  %3493 = vmatprep.mubr.f32.mxu0 0.0
  %3494 = vmatmul.mubr.f32.gmra.mxu0 %v3319
  %v3495 = vpop.f32.mrf.mxu0
  %v3496 = vadd.f32 0.0, %v3495
  %v3497 = vpop.f32.mrf.mxu0
  %3498 = vmatprep.mubr.f32.mxu0 0.0
  %3499 = vmatmul.mubr.f32.gmra.mxu0 %v3321
  %v3500 = vpop.f32.mrf.mxu0
  %v3501 = vadd.f32 0.0, %v3500
  %v3502 = vpop.f32.mrf.mxu0
  %3503 = vmatprep.mubr.f32.mxu0 0.0
  %3504 = vmatmul.mubr.f32.gmra.mxu0 %v3323
  %v3505 = vpop.f32.mrf.mxu0
  %v3506 = vadd.f32 0.0, %v3505
  %v3507 = vpop.f32.mrf.mxu0
  %3508 = vmatprep.mubr.f32.mxu0 0.0
  %3509 = vmatmul.mubr.f32.gmra.mxu0 %v3325
  %v3510 = vpop.f32.mrf.mxu0
  %v3511 = vadd.f32 0.0, %v3510
  %v3512 = vpop.f32.mrf.mxu0
  %3513 = vmatprep.mubr.f32.mxu0 0.0
  %3514 = vmatmul.mubr.f32.gmra.mxu0 %v3327
  %v3515 = vpop.f32.mrf.mxu0
  %v3516 = vadd.f32 0.0, %v3515
  %v3517 = vpop.f32.mrf.mxu0
  %3518 = vmatprep.mubr.f32.mxu0 0.0
  %3519 = vmatmul.mubr.f32.gmra.mxu0 %v3329
  %v3520 = vpop.f32.mrf.mxu0
  %v3521 = vadd.f32 0.0, %v3520
  %v3522 = vpop.f32.mrf.mxu0
  %3523 = vmatprep.mubr.f32.mxu0 0.0
  %3524 = vmatmul.mubr.f32.gmra.mxu0 %v3331
  %v3525 = vpop.f32.mrf.mxu0
  %v3526 = vadd.f32 0.0, %v3525
  %v3527 = vpop.f32.mrf.mxu0
  %3528 = vmatprep.mubr.f32.mxu0 0.0
  %3529 = vmatmul.mubr.f32.gmra.mxu0 %v3333
  %v3530 = vpop.f32.mrf.mxu0
  %v3531 = vadd.f32 0.0, %v3530
  %v3532 = vpop.f32.mrf.mxu0
  %3533 = vmatprep.mubr.f32.mxu0 0.0
  %3534 = vmatmul.mubr.f32.gmra.mxu0 %v3335
  %v3535 = vpop.f32.mrf.mxu0
  %v3536 = vadd.f32 0.0, %v3535
  %v3537 = vpop.f32.mrf.mxu0
  %3538 = vmatprep.mubr.f32.mxu0 0.0
  %3539 = vmatmul.mubr.f32.gmra.mxu0 %v3337
  %v3540 = vpop.f32.mrf.mxu0
  %v3541 = vadd.f32 0.0, %v3540
  %v3542 = vpop.f32.mrf.mxu0
  %3543 = vdwg.mxu0
  %v3544 = vsel %vm3282, %v3033, 0
  %v3546 = vsel %vm3282, %v3038, 0
  %v3548 = vsel %vm3282, %v3043, 0
  %v3550 = vsel %vm3282, %v3048, 0
  %v3552 = vsel %vm3282, %v3053, 0
  %v3554 = vsel %vm3282, %v3058, 0
  %v3556 = vsel %vm3282, %v3063, 0
  %v3558 = vsel %vm3282, %v3068, 0
  %v3560 = vsel %vm3282, %v3073, 0
  %v3562 = vsel %vm3282, %v3078, 0
  %v3564 = vsel %vm3282, %v3083, 0
  %v3566 = vsel %vm3282, %v3088, 0
  %v3568 = vsel %vm3282, %v3093, 0
  %v3570 = vsel %vm3282, %v3098, 0
  %v3572 = vsel %vm3282, %v3103, 0
  %v3574 = vsel %vm3282, %v3108, 0
  %v3576 = vsel %vm3282, %v3113, 0
  %v3578 = vsel %vm3282, %v3118, 0
  %v3580 = vsel %vm3282, %v3123, 0
  %v3582 = vsel %vm3282, %v3128, 0
  %v3584 = vsel %vm3282, %v3133, 0
  %v3586 = vsel %vm3282, %v3138, 0
  %v3588 = vsel %vm3282, %v3143, 0
  %v3590 = vsel %vm3282, %v3148, 0
  %v3592 = vsel %vm3282, %v3153, 0
  %v3594 = vsel %vm3282, %v3158, 0
  %v3596 = vsel %vm3282, %v3163, 0
  %v3598 = vsel %vm3282, %v3168, 0
  %3600 = vmatprep.subr.mxu0 0.0
  %3601 = vmatpush1.msra.mxu0 0.0
  %3602 = vmatprep.subr.mxu0 0.0
  %3603 = vmatpush1.msra.mxu0 0.0
  %3604 = vmatprep.subr.mxu0 0.0
  %3605 = vmatpush1.msra.mxu0 0.0
  %3606 = vmatprep.subr.mxu0 0.0
  %3607 = vmatpush1.msra.mxu0 0.0
  %3608 = vmatprep.subr.mxu0 0.0
  %3609 = vmatpush1.msra.mxu0 0.0
  %3610 = vmatprep.subr.mxu0 0.0
  %3611 = vmatpush1.msra.mxu0 0.0
  %3612 = vmatprep.subr.mxu0 0.0
  %3613 = vmatpush1.msra.mxu0 0.0
  %3614 = vmatprep.subr.mxu0 0.0
  %3615 = vmatpush1.msra.mxu0 %v3185
  %3616 = vmatprep.subr.mxu0 0.0
  %3617 = vmatpush1.msra.mxu0 %v3184
  %3618 = vmatprep.subr.mxu0 0.0
  %3619 = vmatpush1.msra.mxu0 %v3183
  %3620 = vmatprep.subr.mxu0 0.0
  %3621 = vmatpush1.msra.mxu0 %v3182
  %3622 = vmatprep.subr.mxu0 0.0
  %3623 = vmatpush1.msra.mxu0 %v3181
  %3624 = vmatprep.subr.mxu0 0.0
  %3625 = vmatpush1.msra.mxu0 %v3180
  %3626 = vmatprep.subr.mxu0 0.0
  %3627 = vmatpush1.msra.mxu0 %v3179
  %3628 = vmatprep.subr.mxu0 0.0
  %3629 = vmatpush1.msra.mxu0 %v3178
  %3630 = vmatprep.subr.mxu0 0.0
  %3631 = vmatpush1.msra.mxu0 %v3177
  %3632 = vmatprep.subr.mxu0 0.0
  %3633 = vmatpush2.msra.mxu0 0.0
  %3634 = vmatprep.subr.mxu0 0.0
  %3635 = vmatpush2.msra.mxu0 0.0
  %3636 = vmatprep.subr.mxu0 0.0
  %3637 = vmatpush2.msra.mxu0 0.0
  %3638 = vmatprep.subr.mxu0 0.0
  %3639 = vmatpush2.msra.mxu0 0.0
  %3640 = vmatprep.subr.mxu0 0.0
  %3641 = vmatpush2.msra.mxu0 0.0
  %3642 = vmatprep.subr.mxu0 0.0
  %3643 = vmatpush2.msra.mxu0 0.0
  %3644 = vmatprep.subr.mxu0 0.0
  %3645 = vmatpush2.msra.mxu0 0.0
  %3646 = vmatprep.subr.mxu0 0.0
  %3647 = vmatpush2.msra.mxu0 0.0
  %3648 = vmatprep.subr.mxu0 0.0
  %3649 = vmatpush2.msra.mxu0 0.0
  %3650 = vmatprep.subr.mxu0 0.0
  %3651 = vmatpush2.msra.mxu0 0.0
  %3652 = vmatprep.subr.mxu0 0.0
  %3653 = vmatpush2.msra.mxu0 0.0
  %3654 = vmatprep.subr.mxu0 0.0
  %3655 = vmatpush2.msra.mxu0 0.0
  %3656 = vmatprep.subr.mxu0 0.0
  %3657 = vmatpush2.msra.mxu0 0.0
  %3658 = vmatprep.subr.mxu0 0.0
  %3659 = vmatpush2.msra.mxu0 0.0
  %3660 = vmatprep.subr.mxu0 0.0
  %3661 = vmatpush2.msra.mxu0 0.0
  %3662 = vmatprep.subr.mxu0 0.0
  %3663 = vmatpush2.msra.mxu0 0.0
  %3664 = vmatprep.mubr.f32.mxu0 0.0
  %3665 = vmatmul.mubr.f32.gmra.mxu0 %v3544
  %v3666 = vpop.f32.mrf.mxu0
  %v3667 = vadd.f32 %v3406, %v3666
  %v3668 = vpop.f32.mrf.mxu0
  %3669 = vmatprep.mubr.f32.mxu0 0.0
  %3670 = vmatmul.mubr.f32.gmra.mxu0 %v3546
  %v3671 = vpop.f32.mrf.mxu0
  %v3672 = vadd.f32 %v3411, %v3671
  %v3673 = vpop.f32.mrf.mxu0
  %3674 = vmatprep.mubr.f32.mxu0 0.0
  %3675 = vmatmul.mubr.f32.gmra.mxu0 %v3548
  %v3676 = vpop.f32.mrf.mxu0
  %v3677 = vadd.f32 %v3416, %v3676
  %v3678 = vpop.f32.mrf.mxu0
  %3679 = vmatprep.mubr.f32.mxu0 0.0
  %3680 = vmatmul.mubr.f32.gmra.mxu0 %v3550
  %v3681 = vpop.f32.mrf.mxu0
  %v3682 = vadd.f32 %v3421, %v3681
  %v3683 = vpop.f32.mrf.mxu0
  %3684 = vmatprep.mubr.f32.mxu0 0.0
  %3685 = vmatmul.mubr.f32.gmra.mxu0 %v3552
  %v3686 = vpop.f32.mrf.mxu0
  %v3687 = vadd.f32 %v3426, %v3686
  %v3688 = vpop.f32.mrf.mxu0
  %3689 = vmatprep.mubr.f32.mxu0 0.0
  %3690 = vmatmul.mubr.f32.gmra.mxu0 %v3554
  %v3691 = vpop.f32.mrf.mxu0
  %v3692 = vadd.f32 %v3431, %v3691
  %v3693 = vpop.f32.mrf.mxu0
  %3694 = vmatprep.mubr.f32.mxu0 0.0
  %3695 = vmatmul.mubr.f32.gmra.mxu0 %v3556
  %v3696 = vpop.f32.mrf.mxu0
  %v3697 = vadd.f32 %v3436, %v3696
  %v3698 = vpop.f32.mrf.mxu0
  %3699 = vmatprep.mubr.f32.mxu0 0.0
  %3700 = vmatmul.mubr.f32.gmra.mxu0 %v3558
  %v3701 = vpop.f32.mrf.mxu0
  %v3702 = vadd.f32 %v3441, %v3701
  %v3703 = vpop.f32.mrf.mxu0
  %3704 = vmatprep.mubr.f32.mxu0 0.0
  %3705 = vmatmul.mubr.f32.gmra.mxu0 %v3560
  %v3706 = vpop.f32.mrf.mxu0
  %v3707 = vadd.f32 %v3446, %v3706
  %v3708 = vpop.f32.mrf.mxu0
  %3709 = vmatprep.mubr.f32.mxu0 0.0
  %3710 = vmatmul.mubr.f32.gmra.mxu0 %v3562
  %v3711 = vpop.f32.mrf.mxu0
  %v3712 = vadd.f32 %v3451, %v3711
  %v3713 = vpop.f32.mrf.mxu0
  %3714 = vmatprep.mubr.f32.mxu0 0.0
  %3715 = vmatmul.mubr.f32.gmra.mxu0 %v3564
  %v3716 = vpop.f32.mrf.mxu0
  %v3717 = vadd.f32 %v3456, %v3716
  %v3718 = vpop.f32.mrf.mxu0
  %3719 = vmatprep.mubr.f32.mxu0 0.0
  %3720 = vmatmul.mubr.f32.gmra.mxu0 %v3566
  %v3721 = vpop.f32.mrf.mxu0
  %v3722 = vadd.f32 %v3461, %v3721
  %v3723 = vpop.f32.mrf.mxu0
  %3724 = vmatprep.mubr.f32.mxu0 0.0
  %3725 = vmatmul.mubr.f32.gmra.mxu0 %v3568
  %v3726 = vpop.f32.mrf.mxu0
  %v3727 = vadd.f32 %v3466, %v3726
  %v3728 = vpop.f32.mrf.mxu0
  %3729 = vmatprep.mubr.f32.mxu0 0.0
  %3730 = vmatmul.mubr.f32.gmra.mxu0 %v3570
  %v3731 = vpop.f32.mrf.mxu0
  %v3732 = vadd.f32 %v3471, %v3731
  %v3733 = vpop.f32.mrf.mxu0
  %3734 = vmatprep.mubr.f32.mxu0 0.0
  %3735 = vmatmul.mubr.f32.gmra.mxu0 %v3572
  %v3736 = vpop.f32.mrf.mxu0
  %v3737 = vadd.f32 %v3476, %v3736
  %v3738 = vpop.f32.mrf.mxu0
  %3739 = vmatprep.mubr.f32.mxu0 0.0
  %3740 = vmatmul.mubr.f32.gmra.mxu0 %v3574
  %v3741 = vpop.f32.mrf.mxu0
  %v3742 = vadd.f32 %v3481, %v3741
  %v3743 = vpop.f32.mrf.mxu0
  %3744 = vmatprep.mubr.f32.mxu0 0.0
  %3745 = vmatmul.mubr.f32.gmra.mxu0 %v3576
  %v3746 = vpop.f32.mrf.mxu0
  %v3747 = vadd.f32 %v3486, %v3746
  %v3748 = vpop.f32.mrf.mxu0
  %3749 = vmatprep.mubr.f32.mxu0 0.0
  %3750 = vmatmul.mubr.f32.gmra.mxu0 %v3578
  %v3751 = vpop.f32.mrf.mxu0
  %v3752 = vadd.f32 %v3491, %v3751
  %v3753 = vpop.f32.mrf.mxu0
  %3754 = vmatprep.mubr.f32.mxu0 0.0
  %3755 = vmatmul.mubr.f32.gmra.mxu0 %v3580
  %v3756 = vpop.f32.mrf.mxu0
  %v3757 = vadd.f32 %v3496, %v3756
  %v3758 = vpop.f32.mrf.mxu0
  %3759 = vmatprep.mubr.f32.mxu0 0.0
  %3760 = vmatmul.mubr.f32.gmra.mxu0 %v3582
  %v3761 = vpop.f32.mrf.mxu0
  %v3762 = vadd.f32 %v3501, %v3761
  %v3763 = vpop.f32.mrf.mxu0
  %3764 = vmatprep.mubr.f32.mxu0 0.0
  %3765 = vmatmul.mubr.f32.gmra.mxu0 %v3584
  %v3766 = vpop.f32.mrf.mxu0
  %v3767 = vadd.f32 %v3506, %v3766
  %v3768 = vpop.f32.mrf.mxu0
  %3769 = vmatprep.mubr.f32.mxu0 0.0
  %3770 = vmatmul.mubr.f32.gmra.mxu0 %v3586
  %v3771 = vpop.f32.mrf.mxu0
  %v3772 = vadd.f32 %v3511, %v3771
  %v3773 = vpop.f32.mrf.mxu0
  %3774 = vmatprep.mubr.f32.mxu0 0.0
  %3775 = vmatmul.mubr.f32.gmra.mxu0 %v3588
  %v3776 = vpop.f32.mrf.mxu0
  %v3777 = vadd.f32 %v3516, %v3776
  %v3778 = vpop.f32.mrf.mxu0
  %3779 = vmatprep.mubr.f32.mxu0 0.0
  %3780 = vmatmul.mubr.f32.gmra.mxu0 %v3590
  %v3781 = vpop.f32.mrf.mxu0
  %v3782 = vadd.f32 %v3521, %v3781
  %v3783 = vpop.f32.mrf.mxu0
  %3784 = vmatprep.mubr.f32.mxu0 0.0
  %3785 = vmatmul.mubr.f32.gmra.mxu0 %v3592
  %v3786 = vpop.f32.mrf.mxu0
  %v3787 = vadd.f32 %v3526, %v3786
  %v3788 = vpop.f32.mrf.mxu0
  %3789 = vmatprep.mubr.f32.mxu0 0.0
  %3790 = vmatmul.mubr.f32.gmra.mxu0 %v3594
  %v3791 = vpop.f32.mrf.mxu0
  %v3792 = vadd.f32 %v3531, %v3791
  %v3793 = vpop.f32.mrf.mxu0
  %3794 = vmatprep.mubr.f32.mxu0 0.0
  %3795 = vmatmul.mubr.f32.gmra.mxu0 %v3596
  %v3796 = vpop.f32.mrf.mxu0
  %v3797 = vadd.f32 %v3536, %v3796
  %v3798 = vpop.f32.mrf.mxu0
  %3799 = vmatprep.mubr.f32.mxu0 0.0
  %3800 = vmatmul.mubr.f32.gmra.mxu0 %v3598
  %v3801 = vpop.f32.mrf.mxu0
  %v3802 = vadd.f32 %v3541, %v3801
  %v3803 = vpop.f32.mrf.mxu0
  %3804 = vdwg.mxu0
  %s3805 = scalar_lea.vmem %s4, 144
  %v3806 = vld [vmem:[%s3805] sm:$0xff]
  %v3807 = vld [vmem:[%s3805 + $0x8] sm:$0xff]
  %v3808 = vld [vmem:[%s3805 + $0x10] sm:$0xff]
  %v3809 = vld [vmem:[%s3805 + $0x18] sm:$0xff]
  %v3810 = vld [vmem:[%s3805 + $0x20] sm:$0xff]
  %v3811 = vld [vmem:[%s3805 + $0x28] sm:$0xff]
  %v3812 = vld [vmem:[%s3805 + $0x30] sm:$0xff]
  %v3813 = vld [vmem:[%s3805 + $0x38] sm:$0xff]
  %v3814 = vld [vmem:[%s3805 + $0x40] sm:$0xff]
  %v3815 = vrot.slane %v3033, 4
  %v3816 = vrot.slane %v3038, 4
  %v3817 = vsel %vm247, %v3815, %v3816
  %v3818 = vrot.slane %v3043, 4
  %v3819 = vsel %vm247, %v3816, %v3818
  %v3820 = vrot.slane %v3048, 4
  %v3821 = vsel %vm247, %v3818, %v3820
  %v3822 = vrot.slane %v3053, 4
  %v3823 = vsel %vm247, %v3820, %v3822
  %v3824 = vrot.slane %v3058, 4
  %v3825 = vsel %vm247, %v3822, %v3824
  %v3826 = vrot.slane %v3063, 4
  %v3827 = vsel %vm247, %v3824, %v3826
  %v3828 = vrot.slane %v3068, 4
  %v3829 = vsel %vm247, %v3826, %v3828
  %v3830 = vrot.slane %v3073, 4
  %v3831 = vsel %vm247, %v3828, %v3830
  %v3832 = vrot.slane %v3078, 4
  %v3833 = vsel %vm247, %v3830, %v3832
  %v3834 = vrot.slane %v3083, 4
  %v3835 = vsel %vm247, %v3832, %v3834
  %v3836 = vrot.slane %v3088, 4
  %v3837 = vsel %vm247, %v3834, %v3836
  %v3838 = vrot.slane %v3093, 4
  %v3839 = vsel %vm247, %v3836, %v3838
  %v3840 = vrot.slane %v3098, 4
  %v3841 = vsel %vm247, %v3838, %v3840
  %v3842 = vrot.slane %v3103, 4
  %v3843 = vsel %vm247, %v3840, %v3842
  %v3844 = vrot.slane %v3108, 4
  %v3845 = vsel %vm247, %v3842, %v3844
  %v3846 = vrot.slane %v3113, 4
  %v3847 = vsel %vm247, %v3844, %v3846
  %v3848 = vrot.slane %v3118, 4
  %v3849 = vsel %vm247, %v3846, %v3848
  %v3850 = vrot.slane %v3123, 4
  %v3851 = vsel %vm247, %v3848, %v3850
  %v3852 = vrot.slane %v3128, 4
  %v3853 = vsel %vm247, %v3850, %v3852
  %v3854 = vrot.slane %v3133, 4
  %v3855 = vsel %vm247, %v3852, %v3854
  %v3856 = vrot.slane %v3138, 4
  %v3857 = vsel %vm247, %v3854, %v3856
  %v3858 = vrot.slane %v3143, 4
  %v3859 = vsel %vm247, %v3856, %v3858
  %v3860 = vrot.slane %v3148, 4
  %v3861 = vsel %vm247, %v3858, %v3860
  %v3862 = vrot.slane %v3153, 4
  %v3863 = vsel %vm247, %v3860, %v3862
  %v3864 = vrot.slane %v3158, 4
  %v3865 = vsel %vm247, %v3862, %v3864
  %v3866 = vrot.slane %v3163, 4
  %v3867 = vsel %vm247, %v3864, %v3866
  %v3868 = vrot.slane %v3168, 4
  %v3869 = vsel %vm247, %v3866, %v3868
  %v3870 = vrot.slane %v3173, 4
  %v3871 = vsel %vm247, %v3868, %v3870
  %v3872 = vsel %vm3282, %v3817, 0
  %v3874 = vsel %vm3282, %v3819, 0
  %v3876 = vsel %vm3282, %v3821, 0
  %v3878 = vsel %vm3282, %v3823, 0
  %v3880 = vsel %vm3282, %v3825, 0
  %v3882 = vsel %vm3282, %v3827, 0
  %v3884 = vsel %vm3282, %v3829, 0
  %v3886 = vsel %vm3282, %v3831, 0
  %v3888 = vsel %vm3282, %v3833, 0
  %v3890 = vsel %vm3282, %v3835, 0
  %v3892 = vsel %vm3282, %v3837, 0
  %v3894 = vsel %vm3282, %v3839, 0
  %v3896 = vsel %vm3282, %v3841, 0
  %v3898 = vsel %vm3282, %v3843, 0
  %v3900 = vsel %vm3282, %v3845, 0
  %v3902 = vsel %vm3282, %v3847, 0
  %v3904 = vsel %vm3282, %v3849, 0
  %v3906 = vsel %vm3282, %v3851, 0
  %v3908 = vsel %vm3282, %v3853, 0
  %v3910 = vsel %vm3282, %v3855, 0
  %v3912 = vsel %vm3282, %v3857, 0
  %v3914 = vsel %vm3282, %v3859, 0
  %v3916 = vsel %vm3282, %v3861, 0
  %v3918 = vsel %vm3282, %v3863, 0
  %v3920 = vsel %vm3282, %v3865, 0
  %v3922 = vsel %vm3282, %v3867, 0
  %v3924 = vsel %vm3282, %v3869, 0
  %v3926 = vsel %vm3282, %v3871, 0
  %3928 = vmatprep.subr.mxu0 0.0
  %3929 = vmatpush1.msra.mxu0 0.0
  %3930 = vmatprep.subr.mxu0 0.0
  %3931 = vmatpush1.msra.mxu0 0.0
  %3932 = vmatprep.subr.mxu0 0.0
  %3933 = vmatpush1.msra.mxu0 0.0
  %3934 = vmatprep.subr.mxu0 0.0
  %3935 = vmatpush1.msra.mxu0 0.0
  %3936 = vmatprep.subr.mxu0 0.0
  %3937 = vmatpush1.msra.mxu0 0.0
  %3938 = vmatprep.subr.mxu0 0.0
  %3939 = vmatpush1.msra.mxu0 0.0
  %3940 = vmatprep.subr.mxu0 0.0
  %3941 = vmatpush1.msra.mxu0 0.0
  %3942 = vmatprep.subr.mxu0 0.0
  %3943 = vmatpush1.msra.mxu0 %v3814
  %3944 = vmatprep.subr.mxu0 0.0
  %3945 = vmatpush1.msra.mxu0 %v3813
  %3946 = vmatprep.subr.mxu0 0.0
  %3947 = vmatpush1.msra.mxu0 %v3812
  %3948 = vmatprep.subr.mxu0 0.0
  %3949 = vmatpush1.msra.mxu0 %v3811
  %3950 = vmatprep.subr.mxu0 0.0
  %3951 = vmatpush1.msra.mxu0 %v3810
  %3952 = vmatprep.subr.mxu0 0.0
  %3953 = vmatpush1.msra.mxu0 %v3809
  %3954 = vmatprep.subr.mxu0 0.0
  %3955 = vmatpush1.msra.mxu0 %v3808
  %3956 = vmatprep.subr.mxu0 0.0
  %3957 = vmatpush1.msra.mxu0 %v3807
  %3958 = vmatprep.subr.mxu0 0.0
  %3959 = vmatpush1.msra.mxu0 %v3806
  %3960 = vmatprep.subr.mxu0 0.0
  %3961 = vmatpush2.msra.mxu0 0.0
  %3962 = vmatprep.subr.mxu0 0.0
  %3963 = vmatpush2.msra.mxu0 0.0
  %3964 = vmatprep.subr.mxu0 0.0
  %3965 = vmatpush2.msra.mxu0 0.0
  %3966 = vmatprep.subr.mxu0 0.0
  %3967 = vmatpush2.msra.mxu0 0.0
  %3968 = vmatprep.subr.mxu0 0.0
  %3969 = vmatpush2.msra.mxu0 0.0
  %3970 = vmatprep.subr.mxu0 0.0
  %3971 = vmatpush2.msra.mxu0 0.0
  %3972 = vmatprep.subr.mxu0 0.0
  %3973 = vmatpush2.msra.mxu0 0.0
  %3974 = vmatprep.subr.mxu0 0.0
  %3975 = vmatpush2.msra.mxu0 0.0
  %3976 = vmatprep.subr.mxu0 0.0
  %3977 = vmatpush2.msra.mxu0 0.0
  %3978 = vmatprep.subr.mxu0 0.0
  %3979 = vmatpush2.msra.mxu0 0.0
  %3980 = vmatprep.subr.mxu0 0.0
  %3981 = vmatpush2.msra.mxu0 0.0
  %3982 = vmatprep.subr.mxu0 0.0
  %3983 = vmatpush2.msra.mxu0 0.0
  %3984 = vmatprep.subr.mxu0 0.0
  %3985 = vmatpush2.msra.mxu0 0.0
  %3986 = vmatprep.subr.mxu0 0.0
  %3987 = vmatpush2.msra.mxu0 0.0
  %3988 = vmatprep.subr.mxu0 0.0
  %3989 = vmatpush2.msra.mxu0 0.0
  %3990 = vmatprep.subr.mxu0 0.0
  %3991 = vmatpush2.msra.mxu0 0.0
  %3992 = vmatprep.mubr.f32.mxu0 0.0
  %3993 = vmatmul.mubr.f32.gmra.mxu0 %v3872
  %v3994 = vpop.f32.mrf.mxu0
  %v3995 = vadd.f32 0.0, %v3994
  %v3996 = vpop.f32.mrf.mxu0
  %3997 = vmatprep.mubr.f32.mxu0 0.0
  %3998 = vmatmul.mubr.f32.gmra.mxu0 %v3874
  %v3999 = vpop.f32.mrf.mxu0
  %v4000 = vadd.f32 0.0, %v3999
  %v4001 = vpop.f32.mrf.mxu0
  %4002 = vmatprep.mubr.f32.mxu0 0.0
  %4003 = vmatmul.mubr.f32.gmra.mxu0 %v3876
  %v4004 = vpop.f32.mrf.mxu0
  %v4005 = vadd.f32 0.0, %v4004
  %v4006 = vpop.f32.mrf.mxu0
  %4007 = vmatprep.mubr.f32.mxu0 0.0
  %4008 = vmatmul.mubr.f32.gmra.mxu0 %v3878
  %v4009 = vpop.f32.mrf.mxu0
  %v4010 = vadd.f32 0.0, %v4009
  %v4011 = vpop.f32.mrf.mxu0
  %4012 = vmatprep.mubr.f32.mxu0 0.0
  %4013 = vmatmul.mubr.f32.gmra.mxu0 %v3880
  %v4014 = vpop.f32.mrf.mxu0
  %v4015 = vadd.f32 0.0, %v4014
  %v4016 = vpop.f32.mrf.mxu0
  %4017 = vmatprep.mubr.f32.mxu0 0.0
  %4018 = vmatmul.mubr.f32.gmra.mxu0 %v3882
  %v4019 = vpop.f32.mrf.mxu0
  %v4020 = vadd.f32 0.0, %v4019
  %v4021 = vpop.f32.mrf.mxu0
  %4022 = vmatprep.mubr.f32.mxu0 0.0
  %4023 = vmatmul.mubr.f32.gmra.mxu0 %v3884
  %v4024 = vpop.f32.mrf.mxu0
  %v4025 = vadd.f32 0.0, %v4024
  %v4026 = vpop.f32.mrf.mxu0
  %4027 = vmatprep.mubr.f32.mxu0 0.0
  %4028 = vmatmul.mubr.f32.gmra.mxu0 %v3886
  %v4029 = vpop.f32.mrf.mxu0
  %v4030 = vadd.f32 0.0, %v4029
  %v4031 = vpop.f32.mrf.mxu0
  %4032 = vmatprep.mubr.f32.mxu0 0.0
  %4033 = vmatmul.mubr.f32.gmra.mxu0 %v3888
  %v4034 = vpop.f32.mrf.mxu0
  %v4035 = vadd.f32 0.0, %v4034
  %v4036 = vpop.f32.mrf.mxu0
  %4037 = vmatprep.mubr.f32.mxu0 0.0
  %4038 = vmatmul.mubr.f32.gmra.mxu0 %v3890
  %v4039 = vpop.f32.mrf.mxu0
  %v4040 = vadd.f32 0.0, %v4039
  %v4041 = vpop.f32.mrf.mxu0
  %4042 = vmatprep.mubr.f32.mxu0 0.0
  %4043 = vmatmul.mubr.f32.gmra.mxu0 %v3892
  %v4044 = vpop.f32.mrf.mxu0
  %v4045 = vadd.f32 0.0, %v4044
  %v4046 = vpop.f32.mrf.mxu0
  %4047 = vmatprep.mubr.f32.mxu0 0.0
  %4048 = vmatmul.mubr.f32.gmra.mxu0 %v3894
  %v4049 = vpop.f32.mrf.mxu0
  %v4050 = vadd.f32 0.0, %v4049
  %v4051 = vpop.f32.mrf.mxu0
  %4052 = vmatprep.mubr.f32.mxu0 0.0
  %4053 = vmatmul.mubr.f32.gmra.mxu0 %v3896
  %v4054 = vpop.f32.mrf.mxu0
  %v4055 = vadd.f32 0.0, %v4054
  %v4056 = vpop.f32.mrf.mxu0
  %4057 = vmatprep.mubr.f32.mxu0 0.0
  %4058 = vmatmul.mubr.f32.gmra.mxu0 %v3898
  %v4059 = vpop.f32.mrf.mxu0
  %v4060 = vadd.f32 0.0, %v4059
  %v4061 = vpop.f32.mrf.mxu0
  %4062 = vmatprep.mubr.f32.mxu0 0.0
  %4063 = vmatmul.mubr.f32.gmra.mxu0 %v3900
  %v4064 = vpop.f32.mrf.mxu0
  %v4065 = vadd.f32 0.0, %v4064
  %v4066 = vpop.f32.mrf.mxu0
  %4067 = vmatprep.mubr.f32.mxu0 0.0
  %4068 = vmatmul.mubr.f32.gmra.mxu0 %v3902
  %v4069 = vpop.f32.mrf.mxu0
  %v4070 = vadd.f32 0.0, %v4069
  %v4071 = vpop.f32.mrf.mxu0
  %4072 = vmatprep.mubr.f32.mxu0 0.0
  %4073 = vmatmul.mubr.f32.gmra.mxu0 %v3904
  %v4074 = vpop.f32.mrf.mxu0
  %v4075 = vadd.f32 0.0, %v4074
  %v4076 = vpop.f32.mrf.mxu0
  %4077 = vmatprep.mubr.f32.mxu0 0.0
  %4078 = vmatmul.mubr.f32.gmra.mxu0 %v3906
  %v4079 = vpop.f32.mrf.mxu0
  %v4080 = vadd.f32 0.0, %v4079
  %v4081 = vpop.f32.mrf.mxu0
  %4082 = vmatprep.mubr.f32.mxu0 0.0
  %4083 = vmatmul.mubr.f32.gmra.mxu0 %v3908
  %v4084 = vpop.f32.mrf.mxu0
  %v4085 = vadd.f32 0.0, %v4084
  %v4086 = vpop.f32.mrf.mxu0
  %4087 = vmatprep.mubr.f32.mxu0 0.0
  %4088 = vmatmul.mubr.f32.gmra.mxu0 %v3910
  %v4089 = vpop.f32.mrf.mxu0
  %v4090 = vadd.f32 0.0, %v4089
  %v4091 = vpop.f32.mrf.mxu0
  %4092 = vmatprep.mubr.f32.mxu0 0.0
  %4093 = vmatmul.mubr.f32.gmra.mxu0 %v3912
  %v4094 = vpop.f32.mrf.mxu0
  %v4095 = vadd.f32 0.0, %v4094
  %v4096 = vpop.f32.mrf.mxu0
  %4097 = vmatprep.mubr.f32.mxu0 0.0
  %4098 = vmatmul.mubr.f32.gmra.mxu0 %v3914
  %v4099 = vpop.f32.mrf.mxu0
  %v4100 = vadd.f32 0.0, %v4099
  %v4101 = vpop.f32.mrf.mxu0
  %4102 = vmatprep.mubr.f32.mxu0 0.0
  %4103 = vmatmul.mubr.f32.gmra.mxu0 %v3916
  %v4104 = vpop.f32.mrf.mxu0
  %v4105 = vadd.f32 0.0, %v4104
  %v4106 = vpop.f32.mrf.mxu0
  %4107 = vmatprep.mubr.f32.mxu0 0.0
  %4108 = vmatmul.mubr.f32.gmra.mxu0 %v3918
  %v4109 = vpop.f32.mrf.mxu0
  %v4110 = vadd.f32 0.0, %v4109
  %v4111 = vpop.f32.mrf.mxu0
  %4112 = vmatprep.mubr.f32.mxu0 0.0
  %4113 = vmatmul.mubr.f32.gmra.mxu0 %v3920
  %v4114 = vpop.f32.mrf.mxu0
  %v4115 = vadd.f32 0.0, %v4114
  %v4116 = vpop.f32.mrf.mxu0
  %4117 = vmatprep.mubr.f32.mxu0 0.0
  %4118 = vmatmul.mubr.f32.gmra.mxu0 %v3922
  %v4119 = vpop.f32.mrf.mxu0
  %v4120 = vadd.f32 0.0, %v4119
  %v4121 = vpop.f32.mrf.mxu0
  %4122 = vmatprep.mubr.f32.mxu0 0.0
  %4123 = vmatmul.mubr.f32.gmra.mxu0 %v3924
  %v4124 = vpop.f32.mrf.mxu0
  %v4125 = vadd.f32 0.0, %v4124
  %v4126 = vpop.f32.mrf.mxu0
  %4127 = vmatprep.mubr.f32.mxu0 0.0
  %4128 = vmatmul.mubr.f32.gmra.mxu0 %v3926
  %v4129 = vpop.f32.mrf.mxu0
  %v4130 = vadd.f32 0.0, %v4129
  %v4131 = vpop.f32.mrf.mxu0
  %4132 = vdwg.mxu0
  %v4133 = vadd.f32 %v3667, %v3995
  %v4134 = vadd.f32 %v3672, %v4000
  %v4135 = vadd.f32 %v3677, %v4005
  %v4136 = vadd.f32 %v3682, %v4010
  %v4137 = vadd.f32 %v3687, %v4015
  %v4138 = vadd.f32 %v3692, %v4020
  %v4139 = vadd.f32 %v3697, %v4025
  %v4140 = vadd.f32 %v3702, %v4030
  %v4141 = vadd.f32 %v3707, %v4035
  %v4142 = vadd.f32 %v3712, %v4040
  %v4143 = vadd.f32 %v3717, %v4045
  %v4144 = vadd.f32 %v3722, %v4050
  %v4145 = vadd.f32 %v3727, %v4055
  %v4146 = vadd.f32 %v3732, %v4060
  %v4147 = vadd.f32 %v3737, %v4065
  %v4148 = vadd.f32 %v3742, %v4070
  %v4149 = vadd.f32 %v3747, %v4075
  %v4150 = vadd.f32 %v3752, %v4080
  %v4151 = vadd.f32 %v3757, %v4085
  %v4152 = vadd.f32 %v3762, %v4090
  %v4153 = vadd.f32 %v3767, %v4095
  %v4154 = vadd.f32 %v3772, %v4100
  %v4155 = vadd.f32 %v3777, %v4105
  %v4156 = vadd.f32 %v3782, %v4110
  %v4157 = vadd.f32 %v3787, %v4115
  %v4158 = vadd.f32 %v3792, %v4120
  %v4159 = vadd.f32 %v3797, %v4125
  %v4160 = vadd.f32 %v3802, %v4130
  %s4161 = scalar_lea.vmem %s4, 216
  %v4162 = vld [vmem:[%s4161] sm:$0xff]
  %v4163 = vld [vmem:[%s4161 + $0x8] sm:$0xff]
  %v4164 = vld [vmem:[%s4161 + $0x10] sm:$0xff]
  %v4165 = vld [vmem:[%s4161 + $0x18] sm:$0xff]
  %v4166 = vld [vmem:[%s4161 + $0x20] sm:$0xff]
  %v4167 = vld [vmem:[%s4161 + $0x28] sm:$0xff]
  %v4168 = vld [vmem:[%s4161 + $0x30] sm:$0xff]
  %v4169 = vld [vmem:[%s4161 + $0x38] sm:$0xff]
  %v4170 = vld [vmem:[%s4161 + $0x40] sm:$0xff]
  %vm4171 = vcmask 1041408
  %v4172 = vrot.slane %v3033, 6
  %v4173 = vrot.slane %v3038, 6
  %v4174 = vsel %vm4171, %v4172, %v4173
  %v4175 = vrot.slane %v3043, 6
  %v4176 = vsel %vm4171, %v4173, %v4175
  %v4177 = vrot.slane %v3048, 6
  %v4178 = vsel %vm4171, %v4175, %v4177
  %v4179 = vrot.slane %v3053, 6
  %v4180 = vsel %vm4171, %v4177, %v4179
  %v4181 = vrot.slane %v3058, 6
  %v4182 = vsel %vm4171, %v4179, %v4181
  %v4183 = vrot.slane %v3063, 6
  %v4184 = vsel %vm4171, %v4181, %v4183
  %v4185 = vrot.slane %v3068, 6
  %v4186 = vsel %vm4171, %v4183, %v4185
  %v4187 = vrot.slane %v3073, 6
  %v4188 = vsel %vm4171, %v4185, %v4187
  %v4189 = vrot.slane %v3078, 6
  %v4190 = vsel %vm4171, %v4187, %v4189
  %v4191 = vrot.slane %v3083, 6
  %v4192 = vsel %vm4171, %v4189, %v4191
  %v4193 = vrot.slane %v3088, 6
  %v4194 = vsel %vm4171, %v4191, %v4193
  %v4195 = vrot.slane %v3093, 6
  %v4196 = vsel %vm4171, %v4193, %v4195
  %v4197 = vrot.slane %v3098, 6
  %v4198 = vsel %vm4171, %v4195, %v4197
  %v4199 = vrot.slane %v3103, 6
  %v4200 = vsel %vm4171, %v4197, %v4199
  %v4201 = vrot.slane %v3108, 6
  %v4202 = vsel %vm4171, %v4199, %v4201
  %v4203 = vrot.slane %v3113, 6
  %v4204 = vsel %vm4171, %v4201, %v4203
  %v4205 = vrot.slane %v3118, 6
  %v4206 = vsel %vm4171, %v4203, %v4205
  %v4207 = vrot.slane %v3123, 6
  %v4208 = vsel %vm4171, %v4205, %v4207
  %v4209 = vrot.slane %v3128, 6
  %v4210 = vsel %vm4171, %v4207, %v4209
  %v4211 = vrot.slane %v3133, 6
  %v4212 = vsel %vm4171, %v4209, %v4211
  %v4213 = vrot.slane %v3138, 6
  %v4214 = vsel %vm4171, %v4211, %v4213
  %v4215 = vrot.slane %v3143, 6
  %v4216 = vsel %vm4171, %v4213, %v4215
  %v4217 = vrot.slane %v3148, 6
  %v4218 = vsel %vm4171, %v4215, %v4217
  %v4219 = vrot.slane %v3153, 6
  %v4220 = vsel %vm4171, %v4217, %v4219
  %v4221 = vrot.slane %v3158, 6
  %v4222 = vsel %vm4171, %v4219, %v4221
  %v4223 = vrot.slane %v3163, 6
  %v4224 = vsel %vm4171, %v4221, %v4223
  %v4225 = vrot.slane %v3168, 6
  %v4226 = vsel %vm4171, %v4223, %v4225
  %v4227 = vrot.slane %v3173, 6
  %v4228 = vsel %vm4171, %v4225, %v4227
  %v4229 = vsel %vm3282, %v4174, 0
  %v4231 = vsel %vm3282, %v4176, 0
  %v4233 = vsel %vm3282, %v4178, 0
  %v4235 = vsel %vm3282, %v4180, 0
  %v4237 = vsel %vm3282, %v4182, 0
  %v4239 = vsel %vm3282, %v4184, 0
  %v4241 = vsel %vm3282, %v4186, 0
  %v4243 = vsel %vm3282, %v4188, 0
  %v4245 = vsel %vm3282, %v4190, 0
  %v4247 = vsel %vm3282, %v4192, 0
  %v4249 = vsel %vm3282, %v4194, 0
  %v4251 = vsel %vm3282, %v4196, 0
  %v4253 = vsel %vm3282, %v4198, 0
  %v4255 = vsel %vm3282, %v4200, 0
  %v4257 = vsel %vm3282, %v4202, 0
  %v4259 = vsel %vm3282, %v4204, 0
  %v4261 = vsel %vm3282, %v4206, 0
  %v4263 = vsel %vm3282, %v4208, 0
  %v4265 = vsel %vm3282, %v4210, 0
  %v4267 = vsel %vm3282, %v4212, 0
  %v4269 = vsel %vm3282, %v4214, 0
  %v4271 = vsel %vm3282, %v4216, 0
  %v4273 = vsel %vm3282, %v4218, 0
  %v4275 = vsel %vm3282, %v4220, 0
  %v4277 = vsel %vm3282, %v4222, 0
  %v4279 = vsel %vm3282, %v4224, 0
  %v4281 = vsel %vm3282, %v4226, 0
  %v4283 = vsel %vm3282, %v4228, 0
  %4285 = vmatprep.subr.mxu0 0.0
  %4286 = vmatpush1.msra.mxu0 0.0
  %4287 = vmatprep.subr.mxu0 0.0
  %4288 = vmatpush1.msra.mxu0 0.0
  %4289 = vmatprep.subr.mxu0 0.0
  %4290 = vmatpush1.msra.mxu0 0.0
  %4291 = vmatprep.subr.mxu0 0.0
  %4292 = vmatpush1.msra.mxu0 0.0
  %4293 = vmatprep.subr.mxu0 0.0
  %4294 = vmatpush1.msra.mxu0 0.0
  %4295 = vmatprep.subr.mxu0 0.0
  %4296 = vmatpush1.msra.mxu0 0.0
  %4297 = vmatprep.subr.mxu0 0.0
  %4298 = vmatpush1.msra.mxu0 0.0
  %4299 = vmatprep.subr.mxu0 0.0
  %4300 = vmatpush1.msra.mxu0 %v4170
  %4301 = vmatprep.subr.mxu0 0.0
  %4302 = vmatpush1.msra.mxu0 %v4169
  %4303 = vmatprep.subr.mxu0 0.0
  %4304 = vmatpush1.msra.mxu0 %v4168
  %4305 = vmatprep.subr.mxu0 0.0
  %4306 = vmatpush1.msra.mxu0 %v4167
  %4307 = vmatprep.subr.mxu0 0.0
  %4308 = vmatpush1.msra.mxu0 %v4166
  %4309 = vmatprep.subr.mxu0 0.0
  %4310 = vmatpush1.msra.mxu0 %v4165
  %4311 = vmatprep.subr.mxu0 0.0
  %4312 = vmatpush1.msra.mxu0 %v4164
  %4313 = vmatprep.subr.mxu0 0.0
  %4314 = vmatpush1.msra.mxu0 %v4163
  %4315 = vmatprep.subr.mxu0 0.0
  %4316 = vmatpush1.msra.mxu0 %v4162
  %4317 = vmatprep.subr.mxu0 0.0
  %4318 = vmatpush2.msra.mxu0 0.0
  %4319 = vmatprep.subr.mxu0 0.0
  %4320 = vmatpush2.msra.mxu0 0.0
  %4321 = vmatprep.subr.mxu0 0.0
  %4322 = vmatpush2.msra.mxu0 0.0
  %4323 = vmatprep.subr.mxu0 0.0
  %4324 = vmatpush2.msra.mxu0 0.0
  %4325 = vmatprep.subr.mxu0 0.0
  %4326 = vmatpush2.msra.mxu0 0.0
  %4327 = vmatprep.subr.mxu0 0.0
  %4328 = vmatpush2.msra.mxu0 0.0
  %4329 = vmatprep.subr.mxu0 0.0
  %4330 = vmatpush2.msra.mxu0 0.0
  %4331 = vmatprep.subr.mxu0 0.0
  %4332 = vmatpush2.msra.mxu0 0.0
  %4333 = vmatprep.subr.mxu0 0.0
  %4334 = vmatpush2.msra.mxu0 0.0
  %4335 = vmatprep.subr.mxu0 0.0
  %4336 = vmatpush2.msra.mxu0 0.0
  %4337 = vmatprep.subr.mxu0 0.0
  %4338 = vmatpush2.msra.mxu0 0.0
  %4339 = vmatprep.subr.mxu0 0.0
  %4340 = vmatpush2.msra.mxu0 0.0
  %4341 = vmatprep.subr.mxu0 0.0
  %4342 = vmatpush2.msra.mxu0 0.0
  %4343 = vmatprep.subr.mxu0 0.0
  %4344 = vmatpush2.msra.mxu0 0.0
  %4345 = vmatprep.subr.mxu0 0.0
  %4346 = vmatpush2.msra.mxu0 0.0
  %4347 = vmatprep.subr.mxu0 0.0
  %4348 = vmatpush2.msra.mxu0 0.0
  %4349 = vmatprep.mubr.f32.mxu0 0.0
  %4350 = vmatmul.mubr.f32.gmra.mxu0 %v4229
  %v4351 = vpop.f32.mrf.mxu0
  %v4352 = vadd.f32 0.0, %v4351
  %v4353 = vpop.f32.mrf.mxu0
  %4354 = vmatprep.mubr.f32.mxu0 0.0
  %4355 = vmatmul.mubr.f32.gmra.mxu0 %v4231
  %v4356 = vpop.f32.mrf.mxu0
  %v4357 = vadd.f32 0.0, %v4356
  %v4358 = vpop.f32.mrf.mxu0
  %4359 = vmatprep.mubr.f32.mxu0 0.0
  %4360 = vmatmul.mubr.f32.gmra.mxu0 %v4233
  %v4361 = vpop.f32.mrf.mxu0
  %v4362 = vadd.f32 0.0, %v4361
  %v4363 = vpop.f32.mrf.mxu0
  %4364 = vmatprep.mubr.f32.mxu0 0.0
  %4365 = vmatmul.mubr.f32.gmra.mxu0 %v4235
  %v4366 = vpop.f32.mrf.mxu0
  %v4367 = vadd.f32 0.0, %v4366
  %v4368 = vpop.f32.mrf.mxu0
  %4369 = vmatprep.mubr.f32.mxu0 0.0
  %4370 = vmatmul.mubr.f32.gmra.mxu0 %v4237
  %v4371 = vpop.f32.mrf.mxu0
  %v4372 = vadd.f32 0.0, %v4371
  %v4373 = vpop.f32.mrf.mxu0
  %4374 = vmatprep.mubr.f32.mxu0 0.0
  %4375 = vmatmul.mubr.f32.gmra.mxu0 %v4239
  %v4376 = vpop.f32.mrf.mxu0
  %v4377 = vadd.f32 0.0, %v4376
  %v4378 = vpop.f32.mrf.mxu0
  %4379 = vmatprep.mubr.f32.mxu0 0.0
  %4380 = vmatmul.mubr.f32.gmra.mxu0 %v4241
  %v4381 = vpop.f32.mrf.mxu0
  %v4382 = vadd.f32 0.0, %v4381
  %v4383 = vpop.f32.mrf.mxu0
  %4384 = vmatprep.mubr.f32.mxu0 0.0
  %4385 = vmatmul.mubr.f32.gmra.mxu0 %v4243
  %v4386 = vpop.f32.mrf.mxu0
  %v4387 = vadd.f32 0.0, %v4386
  %v4388 = vpop.f32.mrf.mxu0
  %4389 = vmatprep.mubr.f32.mxu0 0.0
  %4390 = vmatmul.mubr.f32.gmra.mxu0 %v4245
  %v4391 = vpop.f32.mrf.mxu0
  %v4392 = vadd.f32 0.0, %v4391
  %v4393 = vpop.f32.mrf.mxu0
  %4394 = vmatprep.mubr.f32.mxu0 0.0
  %4395 = vmatmul.mubr.f32.gmra.mxu0 %v4247
  %v4396 = vpop.f32.mrf.mxu0
  %v4397 = vadd.f32 0.0, %v4396
  %v4398 = vpop.f32.mrf.mxu0
  %4399 = vmatprep.mubr.f32.mxu0 0.0
  %4400 = vmatmul.mubr.f32.gmra.mxu0 %v4249
  %v4401 = vpop.f32.mrf.mxu0
  %v4402 = vadd.f32 0.0, %v4401
  %v4403 = vpop.f32.mrf.mxu0
  %4404 = vmatprep.mubr.f32.mxu0 0.0
  %4405 = vmatmul.mubr.f32.gmra.mxu0 %v4251
  %v4406 = vpop.f32.mrf.mxu0
  %v4407 = vadd.f32 0.0, %v4406
  %v4408 = vpop.f32.mrf.mxu0
  %4409 = vmatprep.mubr.f32.mxu0 0.0
  %4410 = vmatmul.mubr.f32.gmra.mxu0 %v4253
  %v4411 = vpop.f32.mrf.mxu0
  %v4412 = vadd.f32 0.0, %v4411
  %v4413 = vpop.f32.mrf.mxu0
  %4414 = vmatprep.mubr.f32.mxu0 0.0
  %4415 = vmatmul.mubr.f32.gmra.mxu0 %v4255
  %v4416 = vpop.f32.mrf.mxu0
  %v4417 = vadd.f32 0.0, %v4416
  %v4418 = vpop.f32.mrf.mxu0
  %4419 = vmatprep.mubr.f32.mxu0 0.0
  %4420 = vmatmul.mubr.f32.gmra.mxu0 %v4257
  %v4421 = vpop.f32.mrf.mxu0
  %v4422 = vadd.f32 0.0, %v4421
  %v4423 = vpop.f32.mrf.mxu0
  %4424 = vmatprep.mubr.f32.mxu0 0.0
  %4425 = vmatmul.mubr.f32.gmra.mxu0 %v4259
  %v4426 = vpop.f32.mrf.mxu0
  %v4427 = vadd.f32 0.0, %v4426
  %v4428 = vpop.f32.mrf.mxu0
  %4429 = vmatprep.mubr.f32.mxu0 0.0
  %4430 = vmatmul.mubr.f32.gmra.mxu0 %v4261
  %v4431 = vpop.f32.mrf.mxu0
  %v4432 = vadd.f32 0.0, %v4431
  %v4433 = vpop.f32.mrf.mxu0
  %4434 = vmatprep.mubr.f32.mxu0 0.0
  %4435 = vmatmul.mubr.f32.gmra.mxu0 %v4263
  %v4436 = vpop.f32.mrf.mxu0
  %v4437 = vadd.f32 0.0, %v4436
  %v4438 = vpop.f32.mrf.mxu0
  %4439 = vmatprep.mubr.f32.mxu0 0.0
  %4440 = vmatmul.mubr.f32.gmra.mxu0 %v4265
  %v4441 = vpop.f32.mrf.mxu0
  %v4442 = vadd.f32 0.0, %v4441
  %v4443 = vpop.f32.mrf.mxu0
  %4444 = vmatprep.mubr.f32.mxu0 0.0
  %4445 = vmatmul.mubr.f32.gmra.mxu0 %v4267
  %v4446 = vpop.f32.mrf.mxu0
  %v4447 = vadd.f32 0.0, %v4446
  %v4448 = vpop.f32.mrf.mxu0
  %4449 = vmatprep.mubr.f32.mxu0 0.0
  %4450 = vmatmul.mubr.f32.gmra.mxu0 %v4269
  %v4451 = vpop.f32.mrf.mxu0
  %v4452 = vadd.f32 0.0, %v4451
  %v4453 = vpop.f32.mrf.mxu0
  %4454 = vmatprep.mubr.f32.mxu0 0.0
  %4455 = vmatmul.mubr.f32.gmra.mxu0 %v4271
  %v4456 = vpop.f32.mrf.mxu0
  %v4457 = vadd.f32 0.0, %v4456
  %v4458 = vpop.f32.mrf.mxu0
  %4459 = vmatprep.mubr.f32.mxu0 0.0
  %4460 = vmatmul.mubr.f32.gmra.mxu0 %v4273
  %v4461 = vpop.f32.mrf.mxu0
  %v4462 = vadd.f32 0.0, %v4461
  %v4463 = vpop.f32.mrf.mxu0
  %4464 = vmatprep.mubr.f32.mxu0 0.0
  %4465 = vmatmul.mubr.f32.gmra.mxu0 %v4275
  %v4466 = vpop.f32.mrf.mxu0
  %v4467 = vadd.f32 0.0, %v4466
  %v4468 = vpop.f32.mrf.mxu0
  %4469 = vmatprep.mubr.f32.mxu0 0.0
  %4470 = vmatmul.mubr.f32.gmra.mxu0 %v4277
  %v4471 = vpop.f32.mrf.mxu0
  %v4472 = vadd.f32 0.0, %v4471
  %v4473 = vpop.f32.mrf.mxu0
  %4474 = vmatprep.mubr.f32.mxu0 0.0
  %4475 = vmatmul.mubr.f32.gmra.mxu0 %v4279
  %v4476 = vpop.f32.mrf.mxu0
  %v4477 = vadd.f32 0.0, %v4476
  %v4478 = vpop.f32.mrf.mxu0
  %4479 = vmatprep.mubr.f32.mxu0 0.0
  %4480 = vmatmul.mubr.f32.gmra.mxu0 %v4281
  %v4481 = vpop.f32.mrf.mxu0
  %v4482 = vadd.f32 0.0, %v4481
  %v4483 = vpop.f32.mrf.mxu0
  %4484 = vmatprep.mubr.f32.mxu0 0.0
  %4485 = vmatmul.mubr.f32.gmra.mxu0 %v4283
  %v4486 = vpop.f32.mrf.mxu0
  %v4487 = vadd.f32 0.0, %v4486
  %v4488 = vpop.f32.mrf.mxu0
  %4489 = vdwg.mxu0
  %v4490 = vadd.f32 %v4133, %v4352
  %v4491 = vadd.f32 %v4134, %v4357
  %v4492 = vadd.f32 %v4135, %v4362
  %v4493 = vadd.f32 %v4136, %v4367
  %v4494 = vadd.f32 %v4137, %v4372
  %v4495 = vadd.f32 %v4138, %v4377
  %v4496 = vadd.f32 %v4139, %v4382
  %v4497 = vadd.f32 %v4140, %v4387
  %v4498 = vadd.f32 %v4141, %v4392
  %v4499 = vadd.f32 %v4142, %v4397
  %v4500 = vadd.f32 %v4143, %v4402
  %v4501 = vadd.f32 %v4144, %v4407
  %v4502 = vadd.f32 %v4145, %v4412
  %v4503 = vadd.f32 %v4146, %v4417
  %v4504 = vadd.f32 %v4147, %v4422
  %v4505 = vadd.f32 %v4148, %v4427
  %v4506 = vadd.f32 %v4149, %v4432
  %v4507 = vadd.f32 %v4150, %v4437
  %v4508 = vadd.f32 %v4151, %v4442
  %v4509 = vadd.f32 %v4152, %v4447
  %v4510 = vadd.f32 %v4153, %v4452
  %v4511 = vadd.f32 %v4154, %v4457
  %v4512 = vadd.f32 %v4155, %v4462
  %v4513 = vadd.f32 %v4156, %v4467
  %v4514 = vadd.f32 %v4157, %v4472
  %v4515 = vadd.f32 %v4158, %v4477
  %v4516 = vadd.f32 %v4159, %v4482
  %v4517 = vadd.f32 %v4160, %v4487
  %s4518 = scalar_lea.vmem %s4, 288
  %v4519 = vld [vmem:[%s4518] sm:$0xff]
  %v4520 = vld [vmem:[%s4518 + $0x8] sm:$0xff]
  %v4521 = vld [vmem:[%s4518 + $0x10] sm:$0xff]
  %v4522 = vld [vmem:[%s4518 + $0x18] sm:$0xff]
  %v4523 = vld [vmem:[%s4518 + $0x20] sm:$0xff]
  %v4524 = vld [vmem:[%s4518 + $0x28] sm:$0xff]
  %v4525 = vld [vmem:[%s4518 + $0x30] sm:$0xff]
  %v4526 = vld [vmem:[%s4518 + $0x38] sm:$0xff]
  %v4527 = vld [vmem:[%s4518 + $0x40] sm:$0xff]
  %v4528 = vsel %vm3282, %v3173, 0
  %4530 = vmatprep.subr.mxu0 0.0
  %4531 = vmatpush1.msra.mxu0 0.0
  %4532 = vmatprep.subr.mxu0 0.0
  %4533 = vmatpush1.msra.mxu0 0.0
  %4534 = vmatprep.subr.mxu0 0.0
  %4535 = vmatpush1.msra.mxu0 0.0
  %4536 = vmatprep.subr.mxu0 0.0
  %4537 = vmatpush1.msra.mxu0 0.0
  %4538 = vmatprep.subr.mxu0 0.0
  %4539 = vmatpush1.msra.mxu0 0.0
  %4540 = vmatprep.subr.mxu0 0.0
  %4541 = vmatpush1.msra.mxu0 0.0
  %4542 = vmatprep.subr.mxu0 0.0
  %4543 = vmatpush1.msra.mxu0 0.0
  %4544 = vmatprep.subr.mxu0 0.0
  %4545 = vmatpush1.msra.mxu0 %v4527
  %4546 = vmatprep.subr.mxu0 0.0
  %4547 = vmatpush1.msra.mxu0 %v4526
  %4548 = vmatprep.subr.mxu0 0.0
  %4549 = vmatpush1.msra.mxu0 %v4525
  %4550 = vmatprep.subr.mxu0 0.0
  %4551 = vmatpush1.msra.mxu0 %v4524
  %4552 = vmatprep.subr.mxu0 0.0
  %4553 = vmatpush1.msra.mxu0 %v4523
  %4554 = vmatprep.subr.mxu0 0.0
  %4555 = vmatpush1.msra.mxu0 %v4522
  %4556 = vmatprep.subr.mxu0 0.0
  %4557 = vmatpush1.msra.mxu0 %v4521
  %4558 = vmatprep.subr.mxu0 0.0
  %4559 = vmatpush1.msra.mxu0 %v4520
  %4560 = vmatprep.subr.mxu0 0.0
  %4561 = vmatpush1.msra.mxu0 %v4519
  %4562 = vmatprep.subr.mxu0 0.0
  %4563 = vmatpush2.msra.mxu0 0.0
  %4564 = vmatprep.subr.mxu0 0.0
  %4565 = vmatpush2.msra.mxu0 0.0
  %4566 = vmatprep.subr.mxu0 0.0
  %4567 = vmatpush2.msra.mxu0 0.0
  %4568 = vmatprep.subr.mxu0 0.0
  %4569 = vmatpush2.msra.mxu0 0.0
  %4570 = vmatprep.subr.mxu0 0.0
  %4571 = vmatpush2.msra.mxu0 0.0
  %4572 = vmatprep.subr.mxu0 0.0
  %4573 = vmatpush2.msra.mxu0 0.0
  %4574 = vmatprep.subr.mxu0 0.0
  %4575 = vmatpush2.msra.mxu0 0.0
  %4576 = vmatprep.subr.mxu0 0.0
  %4577 = vmatpush2.msra.mxu0 0.0
  %4578 = vmatprep.subr.mxu0 0.0
  %4579 = vmatpush2.msra.mxu0 0.0
  %4580 = vmatprep.subr.mxu0 0.0
  %4581 = vmatpush2.msra.mxu0 0.0
  %4582 = vmatprep.subr.mxu0 0.0
  %4583 = vmatpush2.msra.mxu0 0.0
  %4584 = vmatprep.subr.mxu0 0.0
  %4585 = vmatpush2.msra.mxu0 0.0
  %4586 = vmatprep.subr.mxu0 0.0
  %4587 = vmatpush2.msra.mxu0 0.0
  %4588 = vmatprep.subr.mxu0 0.0
  %4589 = vmatpush2.msra.mxu0 0.0
  %4590 = vmatprep.subr.mxu0 0.0
  %4591 = vmatpush2.msra.mxu0 0.0
  %4592 = vmatprep.subr.mxu0 0.0
  %4593 = vmatpush2.msra.mxu0 0.0
  %4594 = vmatprep.mubr.f32.mxu0 0.0
  %4595 = vmatmul.mubr.f32.gmra.mxu0 %v3546
  %v4596 = vpop.f32.mrf.mxu0
  %v4597 = vadd.f32 0.0, %v4596
  %v4598 = vpop.f32.mrf.mxu0
  %4599 = vmatprep.mubr.f32.mxu0 0.0
  %4600 = vmatmul.mubr.f32.gmra.mxu0 %v3548
  %v4601 = vpop.f32.mrf.mxu0
  %v4602 = vadd.f32 0.0, %v4601
  %v4603 = vpop.f32.mrf.mxu0
  %4604 = vmatprep.mubr.f32.mxu0 0.0
  %4605 = vmatmul.mubr.f32.gmra.mxu0 %v3550
  %v4606 = vpop.f32.mrf.mxu0
  %v4607 = vadd.f32 0.0, %v4606
  %v4608 = vpop.f32.mrf.mxu0
  %4609 = vmatprep.mubr.f32.mxu0 0.0
  %4610 = vmatmul.mubr.f32.gmra.mxu0 %v3552
  %v4611 = vpop.f32.mrf.mxu0
  %v4612 = vadd.f32 0.0, %v4611
  %v4613 = vpop.f32.mrf.mxu0
  %4614 = vmatprep.mubr.f32.mxu0 0.0
  %4615 = vmatmul.mubr.f32.gmra.mxu0 %v3554
  %v4616 = vpop.f32.mrf.mxu0
  %v4617 = vadd.f32 0.0, %v4616
  %v4618 = vpop.f32.mrf.mxu0
  %4619 = vmatprep.mubr.f32.mxu0 0.0
  %4620 = vmatmul.mubr.f32.gmra.mxu0 %v3556
  %v4621 = vpop.f32.mrf.mxu0
  %v4622 = vadd.f32 0.0, %v4621
  %v4623 = vpop.f32.mrf.mxu0
  %4624 = vmatprep.mubr.f32.mxu0 0.0
  %4625 = vmatmul.mubr.f32.gmra.mxu0 %v3558
  %v4626 = vpop.f32.mrf.mxu0
  %v4627 = vadd.f32 0.0, %v4626
  %v4628 = vpop.f32.mrf.mxu0
  %4629 = vmatprep.mubr.f32.mxu0 0.0
  %4630 = vmatmul.mubr.f32.gmra.mxu0 %v3560
  %v4631 = vpop.f32.mrf.mxu0
  %v4632 = vadd.f32 0.0, %v4631
  %v4633 = vpop.f32.mrf.mxu0
  %4634 = vmatprep.mubr.f32.mxu0 0.0
  %4635 = vmatmul.mubr.f32.gmra.mxu0 %v3562
  %v4636 = vpop.f32.mrf.mxu0
  %v4637 = vadd.f32 0.0, %v4636
  %v4638 = vpop.f32.mrf.mxu0
  %4639 = vmatprep.mubr.f32.mxu0 0.0
  %4640 = vmatmul.mubr.f32.gmra.mxu0 %v3564
  %v4641 = vpop.f32.mrf.mxu0
  %v4642 = vadd.f32 0.0, %v4641
  %v4643 = vpop.f32.mrf.mxu0
  %4644 = vmatprep.mubr.f32.mxu0 0.0
  %4645 = vmatmul.mubr.f32.gmra.mxu0 %v3566
  %v4646 = vpop.f32.mrf.mxu0
  %v4647 = vadd.f32 0.0, %v4646
  %v4648 = vpop.f32.mrf.mxu0
  %4649 = vmatprep.mubr.f32.mxu0 0.0
  %4650 = vmatmul.mubr.f32.gmra.mxu0 %v3568
  %v4651 = vpop.f32.mrf.mxu0
  %v4652 = vadd.f32 0.0, %v4651
  %v4653 = vpop.f32.mrf.mxu0
  %4654 = vmatprep.mubr.f32.mxu0 0.0
  %4655 = vmatmul.mubr.f32.gmra.mxu0 %v3570
  %v4656 = vpop.f32.mrf.mxu0
  %v4657 = vadd.f32 0.0, %v4656
  %v4658 = vpop.f32.mrf.mxu0
  %4659 = vmatprep.mubr.f32.mxu0 0.0
  %4660 = vmatmul.mubr.f32.gmra.mxu0 %v3572
  %v4661 = vpop.f32.mrf.mxu0
  %v4662 = vadd.f32 0.0, %v4661
  %v4663 = vpop.f32.mrf.mxu0
  %4664 = vmatprep.mubr.f32.mxu0 0.0
  %4665 = vmatmul.mubr.f32.gmra.mxu0 %v3574
  %v4666 = vpop.f32.mrf.mxu0
  %v4667 = vadd.f32 0.0, %v4666
  %v4668 = vpop.f32.mrf.mxu0
  %4669 = vmatprep.mubr.f32.mxu0 0.0
  %4670 = vmatmul.mubr.f32.gmra.mxu0 %v3576
  %v4671 = vpop.f32.mrf.mxu0
  %v4672 = vadd.f32 0.0, %v4671
  %v4673 = vpop.f32.mrf.mxu0
  %4674 = vmatprep.mubr.f32.mxu0 0.0
  %4675 = vmatmul.mubr.f32.gmra.mxu0 %v3578
  %v4676 = vpop.f32.mrf.mxu0
  %v4677 = vadd.f32 0.0, %v4676
  %v4678 = vpop.f32.mrf.mxu0
  %4679 = vmatprep.mubr.f32.mxu0 0.0
  %4680 = vmatmul.mubr.f32.gmra.mxu0 %v3580
  %v4681 = vpop.f32.mrf.mxu0
  %v4682 = vadd.f32 0.0, %v4681
  %v4683 = vpop.f32.mrf.mxu0
  %4684 = vmatprep.mubr.f32.mxu0 0.0
  %4685 = vmatmul.mubr.f32.gmra.mxu0 %v3582
  %v4686 = vpop.f32.mrf.mxu0
  %v4687 = vadd.f32 0.0, %v4686
  %v4688 = vpop.f32.mrf.mxu0
  %4689 = vmatprep.mubr.f32.mxu0 0.0
  %4690 = vmatmul.mubr.f32.gmra.mxu0 %v3584
  %v4691 = vpop.f32.mrf.mxu0
  %v4692 = vadd.f32 0.0, %v4691
  %v4693 = vpop.f32.mrf.mxu0
  %4694 = vmatprep.mubr.f32.mxu0 0.0
  %4695 = vmatmul.mubr.f32.gmra.mxu0 %v3586
  %v4696 = vpop.f32.mrf.mxu0
  %v4697 = vadd.f32 0.0, %v4696
  %v4698 = vpop.f32.mrf.mxu0
  %4699 = vmatprep.mubr.f32.mxu0 0.0
  %4700 = vmatmul.mubr.f32.gmra.mxu0 %v3588
  %v4701 = vpop.f32.mrf.mxu0
  %v4702 = vadd.f32 0.0, %v4701
  %v4703 = vpop.f32.mrf.mxu0
  %4704 = vmatprep.mubr.f32.mxu0 0.0
  %4705 = vmatmul.mubr.f32.gmra.mxu0 %v3590
  %v4706 = vpop.f32.mrf.mxu0
  %v4707 = vadd.f32 0.0, %v4706
  %v4708 = vpop.f32.mrf.mxu0
  %4709 = vmatprep.mubr.f32.mxu0 0.0
  %4710 = vmatmul.mubr.f32.gmra.mxu0 %v3592
  %v4711 = vpop.f32.mrf.mxu0
  %v4712 = vadd.f32 0.0, %v4711
  %v4713 = vpop.f32.mrf.mxu0
  %4714 = vmatprep.mubr.f32.mxu0 0.0
  %4715 = vmatmul.mubr.f32.gmra.mxu0 %v3594
  %v4716 = vpop.f32.mrf.mxu0
  %v4717 = vadd.f32 0.0, %v4716
  %v4718 = vpop.f32.mrf.mxu0
  %4719 = vmatprep.mubr.f32.mxu0 0.0
  %4720 = vmatmul.mubr.f32.gmra.mxu0 %v3596
  %v4721 = vpop.f32.mrf.mxu0
  %v4722 = vadd.f32 0.0, %v4721
  %v4723 = vpop.f32.mrf.mxu0
  %4724 = vmatprep.mubr.f32.mxu0 0.0
  %4725 = vmatmul.mubr.f32.gmra.mxu0 %v3598
  %v4726 = vpop.f32.mrf.mxu0
  %v4727 = vadd.f32 0.0, %v4726
  %v4728 = vpop.f32.mrf.mxu0
  %4729 = vmatprep.mubr.f32.mxu0 0.0
  %4730 = vmatmul.mubr.f32.gmra.mxu0 %v4528
  %v4731 = vpop.f32.mrf.mxu0
  %v4732 = vadd.f32 0.0, %v4731
  %v4733 = vpop.f32.mrf.mxu0
  %4734 = vdwg.mxu0
  %v4735 = vadd.f32 %v4490, %v4597
  %v4736 = vadd.f32 %v4491, %v4602
  %v4737 = vadd.f32 %v4492, %v4607
  %v4738 = vadd.f32 %v4493, %v4612
  %v4739 = vadd.f32 %v4494, %v4617
  %v4740 = vadd.f32 %v4495, %v4622
  %v4741 = vadd.f32 %v4496, %v4627
  %v4742 = vadd.f32 %v4497, %v4632
  %v4743 = vadd.f32 %v4498, %v4637
  %v4744 = vadd.f32 %v4499, %v4642
  %v4745 = vadd.f32 %v4500, %v4647
  %v4746 = vadd.f32 %v4501, %v4652
  %v4747 = vadd.f32 %v4502, %v4657
  %v4748 = vadd.f32 %v4503, %v4662
  %v4749 = vadd.f32 %v4504, %v4667
  %v4750 = vadd.f32 %v4505, %v4672
  %v4751 = vadd.f32 %v4506, %v4677
  %v4752 = vadd.f32 %v4507, %v4682
  %v4753 = vadd.f32 %v4508, %v4687
  %v4754 = vadd.f32 %v4509, %v4692
  %v4755 = vadd.f32 %v4510, %v4697
  %v4756 = vadd.f32 %v4511, %v4702
  %v4757 = vadd.f32 %v4512, %v4707
  %v4758 = vadd.f32 %v4513, %v4712
  %v4759 = vadd.f32 %v4514, %v4717
  %v4760 = vadd.f32 %v4515, %v4722
  %v4761 = vadd.f32 %v4516, %v4727
  %v4762 = vadd.f32 %v4517, %v4732
  %v4764 = vlaneseq
  %v4765 = vshrl.u32 %v4764, 7
  %v4766 = vsub.s32 0, %v4765
  %v4767 = vrot.slane %v3176, %v4766
  %v4769 = vadd.f32 %v4767, %v4735
  %v4770 = vadd.f32 %v4767, %v4736
  %v4771 = vadd.f32 %v4767, %v4737
  %v4772 = vadd.f32 %v4767, %v4738
  %v4773 = vadd.f32 %v4767, %v4739
  %v4774 = vadd.f32 %v4767, %v4740
  %v4775 = vadd.f32 %v4767, %v4741
  %v4776 = vadd.f32 %v4767, %v4742
  %v4777 = vadd.f32 %v4767, %v4743
  %v4778 = vadd.f32 %v4767, %v4744
  %v4779 = vadd.f32 %v4767, %v4745
  %v4780 = vadd.f32 %v4767, %v4746
  %v4781 = vadd.f32 %v4767, %v4747
  %v4782 = vadd.f32 %v4767, %v4748
  %v4783 = vadd.f32 %v4767, %v4749
  %v4784 = vadd.f32 %v4767, %v4750
  %v4785 = vadd.f32 %v4767, %v4751
  %v4786 = vadd.f32 %v4767, %v4752
  %v4787 = vadd.f32 %v4767, %v4753
  %v4788 = vadd.f32 %v4767, %v4754
  %v4789 = vadd.f32 %v4767, %v4755
  %v4790 = vadd.f32 %v4767, %v4756
  %v4791 = vadd.f32 %v4767, %v4757
  %v4792 = vadd.f32 %v4767, %v4758
  %v4793 = vadd.f32 %v4767, %v4759
  %v4794 = vadd.f32 %v4767, %v4760
  %v4795 = vadd.f32 %v4767, %v4761
  %v4796 = vadd.f32 %v4767, %v4762
  %v4797 = vsub.f32 0.0, %v4769
  %v4798 = vsub.f32 0.0, %v4770
  %v4799 = vsub.f32 0.0, %v4771
  %v4800 = vsub.f32 0.0, %v4772
  %v4801 = vsub.f32 0.0, %v4773
  %v4802 = vsub.f32 0.0, %v4774
  %v4803 = vsub.f32 0.0, %v4775
  %v4804 = vsub.f32 0.0, %v4776
  %v4805 = vsub.f32 0.0, %v4777
  %v4806 = vsub.f32 0.0, %v4778
  %v4807 = vsub.f32 0.0, %v4779
  %v4808 = vsub.f32 0.0, %v4780
  %v4809 = vsub.f32 0.0, %v4781
  %v4810 = vsub.f32 0.0, %v4782
  %v4811 = vsub.f32 0.0, %v4783
  %v4812 = vsub.f32 0.0, %v4784
  %v4813 = vsub.f32 0.0, %v4785
  %v4814 = vsub.f32 0.0, %v4786
  %v4815 = vsub.f32 0.0, %v4787
  %v4816 = vsub.f32 0.0, %v4788
  %v4817 = vsub.f32 0.0, %v4789
  %v4818 = vsub.f32 0.0, %v4790
  %v4819 = vsub.f32 0.0, %v4791
  %v4820 = vsub.f32 0.0, %v4792
  %v4821 = vsub.f32 0.0, %v4793
  %v4822 = vsub.f32 0.0, %v4794
  %v4823 = vsub.f32 0.0, %v4795
  %v4824 = vsub.f32 0.0, %v4796
  %v4825 = vmul.f32 %v4797, 1.442695
  %v4826 = vpow.pop %v4825
  %v4827 = vmul.f32 %v4798, 1.442695
  %v4828 = vpow.pop %v4827
  %v4829 = vmul.f32 %v4799, 1.442695
  %v4830 = vpow.pop %v4829
  %v4831 = vmul.f32 %v4800, 1.442695
  %v4832 = vpow.pop %v4831
  %v4833 = vmul.f32 %v4801, 1.442695
  %v4834 = vpow.pop %v4833
  %v4835 = vmul.f32 %v4802, 1.442695
  %v4836 = vpow.pop %v4835
  %v4837 = vmul.f32 %v4803, 1.442695
  %v4838 = vpow.pop %v4837
  %v4839 = vmul.f32 %v4804, 1.442695
  %v4840 = vpow.pop %v4839
  %v4841 = vmul.f32 %v4805, 1.442695
  %v4842 = vpow.pop %v4841
  %v4843 = vmul.f32 %v4806, 1.442695
  %v4844 = vpow.pop %v4843
  %v4845 = vmul.f32 %v4807, 1.442695
  %v4846 = vpow.pop %v4845
  %v4847 = vmul.f32 %v4808, 1.442695
  %v4848 = vpow.pop %v4847
  %v4849 = vmul.f32 %v4809, 1.442695
  %v4850 = vpow.pop %v4849
  %v4851 = vmul.f32 %v4810, 1.442695
  %v4852 = vpow.pop %v4851
  %v4853 = vmul.f32 %v4811, 1.442695
  %v4854 = vpow.pop %v4853
  %v4855 = vmul.f32 %v4812, 1.442695
  %v4856 = vpow.pop %v4855
  %v4857 = vmul.f32 %v4813, 1.442695
  %v4858 = vpow.pop %v4857
  %v4859 = vmul.f32 %v4814, 1.442695
  %v4860 = vpow.pop %v4859
  %v4861 = vmul.f32 %v4815, 1.442695
  %v4862 = vpow.pop %v4861
  %v4863 = vmul.f32 %v4816, 1.442695
  %v4864 = vpow.pop %v4863
  %v4865 = vmul.f32 %v4817, 1.442695
  %v4866 = vpow.pop %v4865
  %v4867 = vmul.f32 %v4818, 1.442695
  %v4868 = vpow.pop %v4867
  %v4869 = vmul.f32 %v4819, 1.442695
  %v4870 = vpow.pop %v4869
  %v4871 = vmul.f32 %v4820, 1.442695
  %v4872 = vpow.pop %v4871
  %v4873 = vmul.f32 %v4821, 1.442695
  %v4874 = vpow.pop %v4873
  %v4875 = vmul.f32 %v4822, 1.442695
  %v4876 = vpow.pop %v4875
  %v4877 = vmul.f32 %v4823, 1.442695
  %v4878 = vpow.pop %v4877
  %v4879 = vmul.f32 %v4824, 1.442695
  %v4880 = vpow.pop %v4879
  %v4881 = vadd.f32 %v4826, 1.0
  %v4882 = vadd.f32 %v4828, 1.0
  %v4883 = vadd.f32 %v4830, 1.0
  %v4884 = vadd.f32 %v4832, 1.0
  %v4885 = vadd.f32 %v4834, 1.0
  %v4886 = vadd.f32 %v4836, 1.0
  %v4887 = vadd.f32 %v4838, 1.0
  %v4888 = vadd.f32 %v4840, 1.0
  %v4889 = vadd.f32 %v4842, 1.0
  %v4890 = vadd.f32 %v4844, 1.0
  %v4891 = vadd.f32 %v4846, 1.0
  %v4892 = vadd.f32 %v4848, 1.0
  %v4893 = vadd.f32 %v4850, 1.0
  %v4894 = vadd.f32 %v4852, 1.0
  %v4895 = vadd.f32 %v4854, 1.0
  %v4896 = vadd.f32 %v4856, 1.0
  %v4897 = vadd.f32 %v4858, 1.0
  %v4898 = vadd.f32 %v4860, 1.0
  %v4899 = vadd.f32 %v4862, 1.0
  %v4900 = vadd.f32 %v4864, 1.0
  %v4901 = vadd.f32 %v4866, 1.0
  %v4902 = vadd.f32 %v4868, 1.0
  %v4903 = vadd.f32 %v4870, 1.0
  %v4904 = vadd.f32 %v4872, 1.0
  %v4905 = vadd.f32 %v4874, 1.0
  %v4906 = vadd.f32 %v4876, 1.0
  %v4907 = vadd.f32 %v4878, 1.0
  %v4908 = vadd.f32 %v4880, 1.0
  %v4909 = vrcp.pop %v4881
  %v4910 = vmul.f32 1.0, %v4909
  %v4911 = vrcp.pop %v4882
  %v4912 = vmul.f32 1.0, %v4911
  %v4913 = vrcp.pop %v4883
  %v4914 = vmul.f32 1.0, %v4913
  %v4915 = vrcp.pop %v4884
  %v4916 = vmul.f32 1.0, %v4915
  %v4917 = vrcp.pop %v4885
  %v4918 = vmul.f32 1.0, %v4917
  %v4919 = vrcp.pop %v4886
  %v4920 = vmul.f32 1.0, %v4919
  %v4921 = vrcp.pop %v4887
  %v4922 = vmul.f32 1.0, %v4921
  %v4923 = vrcp.pop %v4888
  %v4924 = vmul.f32 1.0, %v4923
  %v4925 = vrcp.pop %v4889
  %v4926 = vmul.f32 1.0, %v4925
  %v4927 = vrcp.pop %v4890
  %v4928 = vmul.f32 1.0, %v4927
  %v4929 = vrcp.pop %v4891
  %v4930 = vmul.f32 1.0, %v4929
  %v4931 = vrcp.pop %v4892
  %v4932 = vmul.f32 1.0, %v4931
  %v4933 = vrcp.pop %v4893
  %v4934 = vmul.f32 1.0, %v4933
  %v4935 = vrcp.pop %v4894
  %v4936 = vmul.f32 1.0, %v4935
  %v4937 = vrcp.pop %v4895
  %v4938 = vmul.f32 1.0, %v4937
  %v4939 = vrcp.pop %v4896
  %v4940 = vmul.f32 1.0, %v4939
  %v4941 = vrcp.pop %v4897
  %v4942 = vmul.f32 1.0, %v4941
  %v4943 = vrcp.pop %v4898
  %v4944 = vmul.f32 1.0, %v4943
  %v4945 = vrcp.pop %v4899
  %v4946 = vmul.f32 1.0, %v4945
  %v4947 = vrcp.pop %v4900
  %v4948 = vmul.f32 1.0, %v4947
  %v4949 = vrcp.pop %v4901
  %v4950 = vmul.f32 1.0, %v4949
  %v4951 = vrcp.pop %v4902
  %v4952 = vmul.f32 1.0, %v4951
  %v4953 = vrcp.pop %v4903
  %v4954 = vmul.f32 1.0, %v4953
  %v4955 = vrcp.pop %v4904
  %v4956 = vmul.f32 1.0, %v4955
  %v4957 = vrcp.pop %v4905
  %v4958 = vmul.f32 1.0, %v4957
  %v4959 = vrcp.pop %v4906
  %v4960 = vmul.f32 1.0, %v4959
  %v4961 = vrcp.pop %v4907
  %v4962 = vmul.f32 1.0, %v4961
  %v4963 = vrcp.pop %v4908
  %v4964 = vmul.f32 1.0, %v4963
  %v4965 = vld [vmem:[%s6] sm:$0xff]
  %v4966 = vld [vmem:[%s6 + $0x8] sm:$0xff]
  %v4967 = vld [vmem:[%s6 + $0x10] sm:$0xff]
  %v4968 = vld [vmem:[%s6 + $0x18] sm:$0xff]
  %v4969 = vld [vmem:[%s6 + $0x20] sm:$0xff]
  %v4970 = vld [vmem:[%s6 + $0x28] sm:$0xff]
  %v4971 = vld [vmem:[%s6 + $0x30] sm:$0xff]
  %v4972 = vld [vmem:[%s6 + $0x38] sm:$0xff]
  %vm4973 = vcmask 785408
  %v4975 = vsel %vm4973, %v4966, 0
  %v4978 = vsel %vm4973, %v4968, 0
  %v4981 = vsel %vm4973, %v4970, 0
  %v4984 = vsel %vm4973, %v4972, 0
  %4986 = vmatprep.subr.mxu0 0.0
  %4987 = vmatpush1.msra.mxu0 %v4940
  %4988 = vmatprep.subr.mxu0 0.0
  %4989 = vmatpush1.msra.mxu0 %v4938
  %4990 = vmatprep.subr.mxu0 0.0
  %4991 = vmatpush1.msra.mxu0 %v4936
  %4992 = vmatprep.subr.mxu0 0.0
  %4993 = vmatpush1.msra.mxu0 %v4934
  %4994 = vmatprep.subr.mxu0 0.0
  %4995 = vmatpush1.msra.mxu0 %v4932
  %4996 = vmatprep.subr.mxu0 0.0
  %4997 = vmatpush1.msra.mxu0 %v4930
  %4998 = vmatprep.subr.mxu0 0.0
  %4999 = vmatpush1.msra.mxu0 %v4928
  %5000 = vmatprep.subr.mxu0 0.0
  %5001 = vmatpush1.msra.mxu0 %v4926
  %5002 = vmatprep.subr.mxu0 0.0
  %5003 = vmatpush1.msra.mxu0 %v4924
  %5004 = vmatprep.subr.mxu0 0.0
  %5005 = vmatpush1.msra.mxu0 %v4922
  %5006 = vmatprep.subr.mxu0 0.0
  %5007 = vmatpush1.msra.mxu0 %v4920
  %5008 = vmatprep.subr.mxu0 0.0
  %5009 = vmatpush1.msra.mxu0 %v4918
  %5010 = vmatprep.subr.mxu0 0.0
  %5011 = vmatpush1.msra.mxu0 %v4916
  %5012 = vmatprep.subr.mxu0 0.0
  %5013 = vmatpush1.msra.mxu0 %v4914
  %5014 = vmatprep.subr.mxu0 0.0
  %5015 = vmatpush1.msra.mxu0 %v4912
  %5016 = vmatprep.subr.mxu0 0.0
  %5017 = vmatpush1.msra.mxu0 %v4910
  %5018 = vmatprep.subr.mxu0 0.0
  %5019 = vmatpush2.msra.mxu0 0.0
  %5020 = vmatprep.subr.mxu0 0.0
  %5021 = vmatpush2.msra.mxu0 0.0
  %5022 = vmatprep.subr.mxu0 0.0
  %5023 = vmatpush2.msra.mxu0 0.0
  %5024 = vmatprep.subr.mxu0 0.0
  %5025 = vmatpush2.msra.mxu0 0.0
  %5026 = vmatprep.subr.mxu0 0.0
  %5027 = vmatpush2.msra.mxu0 %v4964
  %5028 = vmatprep.subr.mxu0 0.0
  %5029 = vmatpush2.msra.mxu0 %v4962
  %5030 = vmatprep.subr.mxu0 0.0
  %5031 = vmatpush2.msra.mxu0 %v4960
  %5032 = vmatprep.subr.mxu0 0.0
  %5033 = vmatpush2.msra.mxu0 %v4958
  %5034 = vmatprep.subr.mxu0 0.0
  %5035 = vmatpush2.msra.mxu0 %v4956
  %5036 = vmatprep.subr.mxu0 0.0
  %5037 = vmatpush2.msra.mxu0 %v4954
  %5038 = vmatprep.subr.mxu0 0.0
  %5039 = vmatpush2.msra.mxu0 %v4952
  %5040 = vmatprep.subr.mxu0 0.0
  %5041 = vmatpush2.msra.mxu0 %v4950
  %5042 = vmatprep.subr.mxu0 0.0
  %5043 = vmatpush2.msra.mxu0 %v4948
  %5044 = vmatprep.subr.mxu0 0.0
  %5045 = vmatpush2.msra.mxu0 %v4946
  %5046 = vmatprep.subr.mxu0 0.0
  %5047 = vmatpush2.msra.mxu0 %v4944
  %5048 = vmatprep.subr.mxu0 0.0
  %5049 = vmatpush2.msra.mxu0 %v4942
  %5050 = vmatprep.mubr.f32.mxu0 %v4975
  %5051 = vmatmul.mubr.f32.gmra.mxu0 %v4965
  %v5052 = vpop.f32.mrf.mxu0
  %v5053 = vadd.f32 0.0, %v5052
  %v5054 = vpop.f32.mrf.mxu0
  %5055 = vmatprep.mubr.f32.mxu0 %v4978
  %5056 = vmatmul.mubr.f32.gmra.mxu0 %v4967
  %v5057 = vpop.f32.mrf.mxu0
  %v5058 = vadd.f32 0.0, %v5057
  %v5059 = vpop.f32.mrf.mxu0
  %5060 = vmatprep.mubr.f32.mxu0 %v4981
  %5061 = vmatmul.mubr.f32.gmra.mxu0 %v4969
  %v5062 = vpop.f32.mrf.mxu0
  %v5063 = vadd.f32 0.0, %v5062
  %v5064 = vpop.f32.mrf.mxu0
  %5065 = vmatprep.mubr.f32.mxu0 %v4984
  %5066 = vmatmul.mubr.f32.gmra.mxu0 %v4971
  %v5067 = vpop.f32.mrf.mxu0
  %v5068 = vadd.f32 0.0, %v5067
  %v5069 = vpop.f32.mrf.mxu0
  %5070 = vdwg.mxu0
  %v5071 = vld [vmem:[%s8] sm:$0x1]
  %v5072 = vld [vmem:[%s7] sm:$0xff]
  %v5073 = vld [vmem:[%s7 + $0x8] sm:$0xff]
  %v5074 = vld [vmem:[%s7 + $0x10] sm:$0xff]
  %v5075 = vld [vmem:[%s7 + $0x18] sm:$0xff]
  %v5076 = vld [vmem:[%s7 + $0x20] sm:$0xff]
  %v5077 = vld [vmem:[%s7 + $0x28] sm:$0xff]
  %v5078 = vld [vmem:[%s7 + $0x30] sm:$0xff]
  %v5079 = vld [vmem:[%s7 + $0x38] sm:$0xff]
  %v5080 = vld [vmem:[%s7 + $0x40] sm:$0xff]
  %v5081 = vld [vmem:[%s7 + $0x48] sm:$0xff]
  %v5082 = vld [vmem:[%s7 + $0x50] sm:$0xff]
  %v5083 = vld [vmem:[%s7 + $0x58] sm:$0xff]
  %v5084 = vld [vmem:[%s7 + $0x60] sm:$0xff]
  %v5085 = vld [vmem:[%s7 + $0x68] sm:$0xff]
  %v5086 = vld [vmem:[%s7 + $0x70] sm:$0xff]
  %v5087 = vld [vmem:[%s7 + $0x78] sm:$0xff]
  %s5088 = scalar_lea.vmem %s7, 128
  %v5089 = vld [vmem:[%s5088] sm:$0xff]
  %v5090 = vld [vmem:[%s5088 + $0x8] sm:$0xff]
  %v5091 = vld [vmem:[%s5088 + $0x10] sm:$0xff]
  %v5092 = vld [vmem:[%s5088 + $0x18] sm:$0xff]
  %v5093 = vld [vmem:[%s5088 + $0x20] sm:$0xff]
  %v5094 = vld [vmem:[%s5088 + $0x28] sm:$0xff]
  %v5095 = vld [vmem:[%s5088 + $0x30] sm:$0xff]
  %v5096 = vld [vmem:[%s5088 + $0x38] sm:$0xff]
  %v5097 = vld [vmem:[%s5088 + $0x40] sm:$0xff]
  %v5098 = vld [vmem:[%s5088 + $0x48] sm:$0xff]
  %v5099 = vld [vmem:[%s5088 + $0x50] sm:$0xff]
  %v5100 = vld [vmem:[%s5088 + $0x58] sm:$0xff]
  %v5101 = vld [vmem:[%s5088 + $0x60] sm:$0xff]
  %v5102 = vld [vmem:[%s5088 + $0x68] sm:$0xff]
  %v5103 = vld [vmem:[%s5088 + $0x70] sm:$0xff]
  %v5104 = vld [vmem:[%s5088 + $0x78] sm:$0xff]
  %5105 = vmatprep.subr.mxu0 0.0
  %5106 = vmatpush1.msra.mxu0 %v5104
  %5107 = vmatprep.subr.mxu0 0.0
  %5108 = vmatpush1.msra.mxu0 %v5103
  %5109 = vmatprep.subr.mxu0 0.0
  %5110 = vmatpush1.msra.mxu0 %v5102
  %5111 = vmatprep.subr.mxu0 0.0
  %5112 = vmatpush1.msra.mxu0 %v5101
  %5113 = vmatprep.subr.mxu0 0.0
  %5114 = vmatpush1.msra.mxu0 %v5100
  %5115 = vmatprep.subr.mxu0 0.0
  %5116 = vmatpush1.msra.mxu0 %v5099
  %5117 = vmatprep.subr.mxu0 0.0
  %5118 = vmatpush1.msra.mxu0 %v5098
  %5119 = vmatprep.subr.mxu0 0.0
  %5120 = vmatpush1.msra.mxu0 %v5097
  %5121 = vmatprep.subr.mxu0 0.0
  %5122 = vmatpush1.msra.mxu0 %v5096
  %5123 = vmatprep.subr.mxu0 0.0
  %5124 = vmatpush1.msra.mxu0 %v5095
  %5125 = vmatprep.subr.mxu0 0.0
  %5126 = vmatpush1.msra.mxu0 %v5094
  %5127 = vmatprep.subr.mxu0 0.0
  %5128 = vmatpush1.msra.mxu0 %v5093
  %5129 = vmatprep.subr.mxu0 0.0
  %5130 = vmatpush1.msra.mxu0 %v5092
  %5131 = vmatprep.subr.mxu0 0.0
  %5132 = vmatpush1.msra.mxu0 %v5091
  %5133 = vmatprep.subr.mxu0 0.0
  %5134 = vmatpush1.msra.mxu0 %v5090
  %5135 = vmatprep.subr.mxu0 0.0
  %5136 = vmatpush1.msra.mxu0 %v5089
  %5137 = vmatprep.subr.mxu0 0.0
  %5138 = vmatpush2.msra.mxu0 0.0
  %5139 = vmatprep.subr.mxu0 0.0
  %5140 = vmatpush2.msra.mxu0 0.0
  %5141 = vmatprep.subr.mxu0 0.0
  %5142 = vmatpush2.msra.mxu0 0.0
  %5143 = vmatprep.subr.mxu0 0.0
  %5144 = vmatpush2.msra.mxu0 0.0
  %5145 = vmatprep.subr.mxu0 0.0
  %5146 = vmatpush2.msra.mxu0 0.0
  %5147 = vmatprep.subr.mxu0 0.0
  %5148 = vmatpush2.msra.mxu0 0.0
  %5149 = vmatprep.subr.mxu0 0.0
  %5150 = vmatpush2.msra.mxu0 0.0
  %5151 = vmatprep.subr.mxu0 0.0
  %5152 = vmatpush2.msra.mxu0 0.0
  %5153 = vmatprep.subr.mxu0 0.0
  %5154 = vmatpush2.msra.mxu0 0.0
  %5155 = vmatprep.subr.mxu0 0.0
  %5156 = vmatpush2.msra.mxu0 0.0
  %5157 = vmatprep.subr.mxu0 0.0
  %5158 = vmatpush2.msra.mxu0 0.0
  %5159 = vmatprep.subr.mxu0 0.0
  %5160 = vmatpush2.msra.mxu0 0.0
  %5161 = vmatprep.subr.mxu0 0.0
  %5162 = vmatpush2.msra.mxu0 0.0
  %5163 = vmatprep.subr.mxu0 0.0
  %5164 = vmatpush2.msra.mxu0 0.0
  %5165 = vmatprep.subr.mxu0 0.0
  %5166 = vmatpush2.msra.mxu0 0.0
  %5167 = vmatprep.subr.mxu0 0.0
  %5168 = vmatpush2.msra.mxu0 0.0
  %5169 = vmatprep.mubr.f32.mxu0 0.0
  %5170 = vmatmul.mubr.f32.gmra.mxu0 %v5058
  %v5171 = vpop.f32.mrf.mxu0
  %v5172 = vadd.f32 0.0, %v5171
  %v5173 = vpop.f32.mrf.mxu0
  %5174 = vdwg.mxu0
  %5175 = vmatprep.subr.mxu0 0.0
  %5176 = vmatpush1.msra.mxu0 %v5087
  %5177 = vmatprep.subr.mxu0 0.0
  %5178 = vmatpush1.msra.mxu0 %v5086
  %5179 = vmatprep.subr.mxu0 0.0
  %5180 = vmatpush1.msra.mxu0 %v5085
  %5181 = vmatprep.subr.mxu0 0.0
  %5182 = vmatpush1.msra.mxu0 %v5084
  %5183 = vmatprep.subr.mxu0 0.0
  %5184 = vmatpush1.msra.mxu0 %v5083
  %5185 = vmatprep.subr.mxu0 0.0
  %5186 = vmatpush1.msra.mxu0 %v5082
  %5187 = vmatprep.subr.mxu0 0.0
  %5188 = vmatpush1.msra.mxu0 %v5081
  %5189 = vmatprep.subr.mxu0 0.0
  %5190 = vmatpush1.msra.mxu0 %v5080
  %5191 = vmatprep.subr.mxu0 0.0
  %5192 = vmatpush1.msra.mxu0 %v5079
  %5193 = vmatprep.subr.mxu0 0.0
  %5194 = vmatpush1.msra.mxu0 %v5078
  %5195 = vmatprep.subr.mxu0 0.0
  %5196 = vmatpush1.msra.mxu0 %v5077
  %5197 = vmatprep.subr.mxu0 0.0
  %5198 = vmatpush1.msra.mxu0 %v5076
  %5199 = vmatprep.subr.mxu0 0.0
  %5200 = vmatpush1.msra.mxu0 %v5075
  %5201 = vmatprep.subr.mxu0 0.0
  %5202 = vmatpush1.msra.mxu0 %v5074
  %5203 = vmatprep.subr.mxu0 0.0
  %5204 = vmatpush1.msra.mxu0 %v5073
  %5205 = vmatprep.subr.mxu0 0.0
  %5206 = vmatpush1.msra.mxu0 %v5072
  %5207 = vmatprep.subr.mxu0 0.0
  %5208 = vmatpush2.msra.mxu0 0.0
  %5209 = vmatprep.subr.mxu0 0.0
  %5210 = vmatpush2.msra.mxu0 0.0
  %5211 = vmatprep.subr.mxu0 0.0
  %5212 = vmatpush2.msra.mxu0 0.0
  %5213 = vmatprep.subr.mxu0 0.0
  %5214 = vmatpush2.msra.mxu0 0.0
  %5215 = vmatprep.subr.mxu0 0.0
  %5216 = vmatpush2.msra.mxu0 0.0
  %5217 = vmatprep.subr.mxu0 0.0
  %5218 = vmatpush2.msra.mxu0 0.0
  %5219 = vmatprep.subr.mxu0 0.0
  %5220 = vmatpush2.msra.mxu0 0.0
  %5221 = vmatprep.subr.mxu0 0.0
  %5222 = vmatpush2.msra.mxu0 0.0
  %5223 = vmatprep.subr.mxu0 0.0
  %5224 = vmatpush2.msra.mxu0 0.0
  %5225 = vmatprep.subr.mxu0 0.0
  %5226 = vmatpush2.msra.mxu0 0.0
  %5227 = vmatprep.subr.mxu0 0.0
  %5228 = vmatpush2.msra.mxu0 0.0
  %5229 = vmatprep.subr.mxu0 0.0
  %5230 = vmatpush2.msra.mxu0 0.0
  %5231 = vmatprep.subr.mxu0 0.0
  %5232 = vmatpush2.msra.mxu0 0.0
  %5233 = vmatprep.subr.mxu0 0.0
  %5234 = vmatpush2.msra.mxu0 0.0
  %5235 = vmatprep.subr.mxu0 0.0
  %5236 = vmatpush2.msra.mxu0 0.0
  %5237 = vmatprep.subr.mxu0 0.0
  %5238 = vmatpush2.msra.mxu0 0.0
  %5239 = vmatprep.mubr.f32.mxu0 0.0
  %5240 = vmatmul.mubr.f32.gmra.mxu0 %v5053
  %v5241 = vpop.f32.mrf.mxu0
  %v5242 = vadd.f32 %v5172, %v5241
  %v5243 = vpop.f32.mrf.mxu0
  %5244 = vdwg.mxu0
  %s5245 = scalar_lea.vmem %s7, 256
  %v5246 = vld [vmem:[%s5245] sm:$0xff]
  %v5247 = vld [vmem:[%s5245 + $0x8] sm:$0xff]
  %v5248 = vld [vmem:[%s5245 + $0x10] sm:$0xff]
  %v5249 = vld [vmem:[%s5245 + $0x18] sm:$0xff]
  %v5250 = vld [vmem:[%s5245 + $0x20] sm:$0xff]
  %v5251 = vld [vmem:[%s5245 + $0x28] sm:$0xff]
  %v5252 = vld [vmem:[%s5245 + $0x30] sm:$0xff]
  %v5253 = vld [vmem:[%s5245 + $0x38] sm:$0xff]
  %v5254 = vld [vmem:[%s5245 + $0x40] sm:$0xff]
  %v5255 = vld [vmem:[%s5245 + $0x48] sm:$0xff]
  %v5256 = vld [vmem:[%s5245 + $0x50] sm:$0xff]
  %v5257 = vld [vmem:[%s5245 + $0x58] sm:$0xff]
  %v5258 = vld [vmem:[%s5245 + $0x60] sm:$0xff]
  %v5259 = vld [vmem:[%s5245 + $0x68] sm:$0xff]
  %v5260 = vld [vmem:[%s5245 + $0x70] sm:$0xff]
  %v5261 = vld [vmem:[%s5245 + $0x78] sm:$0xff]
  %5262 = vmatprep.subr.mxu0 0.0
  %5263 = vmatpush1.msra.mxu0 %v5261
  %5264 = vmatprep.subr.mxu0 0.0
  %5265 = vmatpush1.msra.mxu0 %v5260
  %5266 = vmatprep.subr.mxu0 0.0
  %5267 = vmatpush1.msra.mxu0 %v5259
  %5268 = vmatprep.subr.mxu0 0.0
  %5269 = vmatpush1.msra.mxu0 %v5258
  %5270 = vmatprep.subr.mxu0 0.0
  %5271 = vmatpush1.msra.mxu0 %v5257
  %5272 = vmatprep.subr.mxu0 0.0
  %5273 = vmatpush1.msra.mxu0 %v5256
  %5274 = vmatprep.subr.mxu0 0.0
  %5275 = vmatpush1.msra.mxu0 %v5255
  %5276 = vmatprep.subr.mxu0 0.0
  %5277 = vmatpush1.msra.mxu0 %v5254
  %5278 = vmatprep.subr.mxu0 0.0
  %5279 = vmatpush1.msra.mxu0 %v5253
  %5280 = vmatprep.subr.mxu0 0.0
  %5281 = vmatpush1.msra.mxu0 %v5252
  %5282 = vmatprep.subr.mxu0 0.0
  %5283 = vmatpush1.msra.mxu0 %v5251
  %5284 = vmatprep.subr.mxu0 0.0
  %5285 = vmatpush1.msra.mxu0 %v5250
  %5286 = vmatprep.subr.mxu0 0.0
  %5287 = vmatpush1.msra.mxu0 %v5249
  %5288 = vmatprep.subr.mxu0 0.0
  %5289 = vmatpush1.msra.mxu0 %v5248
  %5290 = vmatprep.subr.mxu0 0.0
  %5291 = vmatpush1.msra.mxu0 %v5247
  %5292 = vmatprep.subr.mxu0 0.0
  %5293 = vmatpush1.msra.mxu0 %v5246
  %5294 = vmatprep.subr.mxu0 0.0
  %5295 = vmatpush2.msra.mxu0 0.0
  %5296 = vmatprep.subr.mxu0 0.0
  %5297 = vmatpush2.msra.mxu0 0.0
  %5298 = vmatprep.subr.mxu0 0.0
  %5299 = vmatpush2.msra.mxu0 0.0
  %5300 = vmatprep.subr.mxu0 0.0
  %5301 = vmatpush2.msra.mxu0 0.0
  %5302 = vmatprep.subr.mxu0 0.0
  %5303 = vmatpush2.msra.mxu0 0.0
  %5304 = vmatprep.subr.mxu0 0.0
  %5305 = vmatpush2.msra.mxu0 0.0
  %5306 = vmatprep.subr.mxu0 0.0
  %5307 = vmatpush2.msra.mxu0 0.0
  %5308 = vmatprep.subr.mxu0 0.0
  %5309 = vmatpush2.msra.mxu0 0.0
  %5310 = vmatprep.subr.mxu0 0.0
  %5311 = vmatpush2.msra.mxu0 0.0
  %5312 = vmatprep.subr.mxu0 0.0
  %5313 = vmatpush2.msra.mxu0 0.0
  %5314 = vmatprep.subr.mxu0 0.0
  %5315 = vmatpush2.msra.mxu0 0.0
  %5316 = vmatprep.subr.mxu0 0.0
  %5317 = vmatpush2.msra.mxu0 0.0
  %5318 = vmatprep.subr.mxu0 0.0
  %5319 = vmatpush2.msra.mxu0 0.0
  %5320 = vmatprep.subr.mxu0 0.0
  %5321 = vmatpush2.msra.mxu0 0.0
  %5322 = vmatprep.subr.mxu0 0.0
  %5323 = vmatpush2.msra.mxu0 0.0
  %5324 = vmatprep.subr.mxu0 0.0
  %5325 = vmatpush2.msra.mxu0 0.0
  %5326 = vmatprep.mubr.f32.mxu0 0.0
  %5327 = vmatmul.mubr.f32.gmra.mxu0 %v5063
  %v5328 = vpop.f32.mrf.mxu0
  %v5329 = vadd.f32 0.0, %v5328
  %v5330 = vpop.f32.mrf.mxu0
  %5331 = vdwg.mxu0
  %v5332 = vadd.f32 %v5242, %v5329
  %s5333 = scalar_lea.vmem %s7, 384
  %v5334 = vld [vmem:[%s5333] sm:$0xff]
  %v5335 = vld [vmem:[%s5333 + $0x8] sm:$0xff]
  %v5336 = vld [vmem:[%s5333 + $0x10] sm:$0xff]
  %v5337 = vld [vmem:[%s5333 + $0x18] sm:$0xff]
  %v5338 = vld [vmem:[%s5333 + $0x20] sm:$0xff]
  %v5339 = vld [vmem:[%s5333 + $0x28] sm:$0xff]
  %v5340 = vld [vmem:[%s5333 + $0x30] sm:$0xff]
  %v5341 = vld [vmem:[%s5333 + $0x38] sm:$0xff]
  %v5342 = vld [vmem:[%s5333 + $0x40] sm:$0xff]
  %v5343 = vld [vmem:[%s5333 + $0x48] sm:$0xff]
  %v5344 = vld [vmem:[%s5333 + $0x50] sm:$0xff]
  %v5345 = vld [vmem:[%s5333 + $0x58] sm:$0xff]
  %v5346 = vld [vmem:[%s5333 + $0x60] sm:$0xff]
  %v5347 = vld [vmem:[%s5333 + $0x68] sm:$0xff]
  %v5348 = vld [vmem:[%s5333 + $0x70] sm:$0xff]
  %v5349 = vld [vmem:[%s5333 + $0x78] sm:$0xff]
  %5350 = vmatprep.subr.mxu0 0.0
  %5351 = vmatpush1.msra.mxu0 %v5349
  %5352 = vmatprep.subr.mxu0 0.0
  %5353 = vmatpush1.msra.mxu0 %v5348
  %5354 = vmatprep.subr.mxu0 0.0
  %5355 = vmatpush1.msra.mxu0 %v5347
  %5356 = vmatprep.subr.mxu0 0.0
  %5357 = vmatpush1.msra.mxu0 %v5346
  %5358 = vmatprep.subr.mxu0 0.0
  %5359 = vmatpush1.msra.mxu0 %v5345
  %5360 = vmatprep.subr.mxu0 0.0
  %5361 = vmatpush1.msra.mxu0 %v5344
  %5362 = vmatprep.subr.mxu0 0.0
  %5363 = vmatpush1.msra.mxu0 %v5343
  %5364 = vmatprep.subr.mxu0 0.0
  %5365 = vmatpush1.msra.mxu0 %v5342
  %5366 = vmatprep.subr.mxu0 0.0
  %5367 = vmatpush1.msra.mxu0 %v5341
  %5368 = vmatprep.subr.mxu0 0.0
  %5369 = vmatpush1.msra.mxu0 %v5340
  %5370 = vmatprep.subr.mxu0 0.0
  %5371 = vmatpush1.msra.mxu0 %v5339
  %5372 = vmatprep.subr.mxu0 0.0
  %5373 = vmatpush1.msra.mxu0 %v5338
  %5374 = vmatprep.subr.mxu0 0.0
  %5375 = vmatpush1.msra.mxu0 %v5337
  %5376 = vmatprep.subr.mxu0 0.0
  %5377 = vmatpush1.msra.mxu0 %v5336
  %5378 = vmatprep.subr.mxu0 0.0
  %5379 = vmatpush1.msra.mxu0 %v5335
  %5380 = vmatprep.subr.mxu0 0.0
  %5381 = vmatpush1.msra.mxu0 %v5334
  %5382 = vmatprep.subr.mxu0 0.0
  %5383 = vmatpush2.msra.mxu0 0.0
  %5384 = vmatprep.subr.mxu0 0.0
  %5385 = vmatpush2.msra.mxu0 0.0
  %5386 = vmatprep.subr.mxu0 0.0
  %5387 = vmatpush2.msra.mxu0 0.0
  %5388 = vmatprep.subr.mxu0 0.0
  %5389 = vmatpush2.msra.mxu0 0.0
  %5390 = vmatprep.subr.mxu0 0.0
  %5391 = vmatpush2.msra.mxu0 0.0
  %5392 = vmatprep.subr.mxu0 0.0
  %5393 = vmatpush2.msra.mxu0 0.0
  %5394 = vmatprep.subr.mxu0 0.0
  %5395 = vmatpush2.msra.mxu0 0.0
  %5396 = vmatprep.subr.mxu0 0.0
  %5397 = vmatpush2.msra.mxu0 0.0
  %5398 = vmatprep.subr.mxu0 0.0
  %5399 = vmatpush2.msra.mxu0 0.0
  %5400 = vmatprep.subr.mxu0 0.0
  %5401 = vmatpush2.msra.mxu0 0.0
  %5402 = vmatprep.subr.mxu0 0.0
  %5403 = vmatpush2.msra.mxu0 0.0
  %5404 = vmatprep.subr.mxu0 0.0
  %5405 = vmatpush2.msra.mxu0 0.0
  %5406 = vmatprep.subr.mxu0 0.0
  %5407 = vmatpush2.msra.mxu0 0.0
  %5408 = vmatprep.subr.mxu0 0.0
  %5409 = vmatpush2.msra.mxu0 0.0
  %5410 = vmatprep.subr.mxu0 0.0
  %5411 = vmatpush2.msra.mxu0 0.0
  %5412 = vmatprep.subr.mxu0 0.0
  %5413 = vmatpush2.msra.mxu0 0.0
  %5414 = vmatprep.mubr.f32.mxu0 0.0
  %5415 = vmatmul.mubr.f32.gmra.mxu0 %v5068
  %v5416 = vpop.f32.mrf.mxu0
  %v5417 = vadd.f32 0.0, %v5416
  %v5418 = vpop.f32.mrf.mxu0
  %5419 = vdwg.mxu0
  %v5420 = vadd.f32 %v5332, %v5417
  %v5422 = vlaneseq
  %v5423 = vshrl.u32 %v5422, 7
  %v5424 = vsub.s32 0, %v5423
  %v5425 = vrot.slane %v5071, %v5424
  %v5427 = vadd.f32 %v5425, %v5420
  %v5428 = vsub.f32 0.0, %v5427
  %v5429 = vmul.f32 %v5428, 1.442695
  %v5430 = vpow.pop %v5429
  %v5431 = vadd.f32 %v5430, 1.0
  %v5432 = vrcp.pop %v5431
  %v5433 = vmul.f32 1.0, %v5432
  %v5434 = vld [vmem:[%s9] sm:$0xff]
  %v5435 = vld [vmem:[%s9 + $0x8] sm:$0xff]
  %v5436 = vld [vmem:[%s9 + $0x10] sm:$0xff]
  %v5437 = vld [vmem:[%s9 + $0x18] sm:$0xff]
  %v5438 = vld [vmem:[%s9 + $0x20] sm:$0xff]
  %v5439 = vld [vmem:[%s9 + $0x28] sm:$0xff]
  %v5440 = vld [vmem:[%s9 + $0x30] sm:$0xff]
  %v5441 = vld [vmem:[%s9 + $0x38] sm:$0xff]
  %v5442 = vld [vmem:[%s9 + $0x40] sm:$0xff]
  %v5443 = vld [vmem:[%s9 + $0x48] sm:$0xff]
  %v5444 = vld [vmem:[%s9 + $0x50] sm:$0xff]
  %v5445 = vld [vmem:[%s9 + $0x58] sm:$0xff]
  %v5446 = vld [vmem:[%s9 + $0x60] sm:$0xff]
  %v5447 = vld [vmem:[%s9 + $0x68] sm:$0xff]
  %v5448 = vld [vmem:[%s9 + $0x70] sm:$0xff]
  %v5449 = vld [vmem:[%s10] sm:$0x1]
  %v5451 = vlaneseq
  %v5452 = vshrl.u32 %v5451, 7
  %v5453 = vsub.s32 0, %v5452
  %v5454 = vrot.slane %v5449, %v5453
  %vm5456 = vcmask 982016
  %v5458 = vsel %vm5456, %v5433, 0
  %5460 = vmatprep.subr.mxu0 0.0
  %5461 = vmatpush1.msra.mxu0 0.0
  %5462 = vmatprep.subr.mxu0 0.0
  %5463 = vmatpush1.msra.mxu0 %v5448
  %5464 = vmatprep.subr.mxu0 0.0
  %5465 = vmatpush1.msra.mxu0 %v5447
  %5466 = vmatprep.subr.mxu0 0.0
  %5467 = vmatpush1.msra.mxu0 %v5446
  %5468 = vmatprep.subr.mxu0 0.0
  %5469 = vmatpush1.msra.mxu0 %v5445
  %5470 = vmatprep.subr.mxu0 0.0
  %5471 = vmatpush1.msra.mxu0 %v5444
  %5472 = vmatprep.subr.mxu0 0.0
  %5473 = vmatpush1.msra.mxu0 %v5443
  %5474 = vmatprep.subr.mxu0 0.0
  %5475 = vmatpush1.msra.mxu0 %v5442
  %5476 = vmatprep.subr.mxu0 0.0
  %5477 = vmatpush1.msra.mxu0 %v5441
  %5478 = vmatprep.subr.mxu0 0.0
  %5479 = vmatpush1.msra.mxu0 %v5440
  %5480 = vmatprep.subr.mxu0 0.0
  %5481 = vmatpush1.msra.mxu0 %v5439
  %5482 = vmatprep.subr.mxu0 0.0
  %5483 = vmatpush1.msra.mxu0 %v5438
  %5484 = vmatprep.subr.mxu0 0.0
  %5485 = vmatpush1.msra.mxu0 %v5437
  %5486 = vmatprep.subr.mxu0 0.0
  %5487 = vmatpush1.msra.mxu0 %v5436
  %5488 = vmatprep.subr.mxu0 0.0
  %5489 = vmatpush1.msra.mxu0 %v5435
  %5490 = vmatprep.subr.mxu0 0.0
  %5491 = vmatpush1.msra.mxu0 %v5434
  %5492 = vmatprep.subr.mxu0 0.0
  %5493 = vmatpush2.msra.mxu0 0.0
  %5494 = vmatprep.subr.mxu0 0.0
  %5495 = vmatpush2.msra.mxu0 0.0
  %5496 = vmatprep.subr.mxu0 0.0
  %5497 = vmatpush2.msra.mxu0 0.0
  %5498 = vmatprep.subr.mxu0 0.0
  %5499 = vmatpush2.msra.mxu0 0.0
  %5500 = vmatprep.subr.mxu0 0.0
  %5501 = vmatpush2.msra.mxu0 0.0
  %5502 = vmatprep.subr.mxu0 0.0
  %5503 = vmatpush2.msra.mxu0 0.0
  %5504 = vmatprep.subr.mxu0 0.0
  %5505 = vmatpush2.msra.mxu0 0.0
  %5506 = vmatprep.subr.mxu0 0.0
  %5507 = vmatpush2.msra.mxu0 0.0
  %5508 = vmatprep.subr.mxu0 0.0
  %5509 = vmatpush2.msra.mxu0 0.0
  %5510 = vmatprep.subr.mxu0 0.0
  %5511 = vmatpush2.msra.mxu0 0.0
  %5512 = vmatprep.subr.mxu0 0.0
  %5513 = vmatpush2.msra.mxu0 0.0
  %5514 = vmatprep.subr.mxu0 0.0
  %5515 = vmatpush2.msra.mxu0 0.0
  %5516 = vmatprep.subr.mxu0 0.0
  %5517 = vmatpush2.msra.mxu0 0.0
  %5518 = vmatprep.subr.mxu0 0.0
  %5519 = vmatpush2.msra.mxu0 0.0
  %5520 = vmatprep.subr.mxu0 0.0
  %5521 = vmatpush2.msra.mxu0 0.0
  %5522 = vmatprep.subr.mxu0 0.0
  %5523 = vmatpush2.msra.mxu0 0.0
  %5524 = vmatprep.mubr.f32.mxu0 0.0
  %5525 = vmatmul.mubr.f32.gmra.mxu0 %v5458
  %v5526 = vpop.f32.mrf.mxu0
  %v5527 = vadd.f32 %v5454, %v5526
  %v5528 = vpop.f32.mrf.mxu0
  %5529 = vdwg.mxu0
  %v5530 = vsub.f32 0.0, %v5527
  %v5531 = vmul.f32 %v5530, 1.442695
  %v5532 = vpow.pop %v5531
  %v5533 = vadd.f32 %v5532, 1.0
  %v5534 = vrcp.pop %v5533
  %v5535 = vmul.f32 1.0, %v5534
  %v5536 = vld [vmem:[%s11] sm:$0xff]
  %v5537 = vld [vmem:[%s11 + $0x8] sm:$0xff]
  %v5538 = vld [vmem:[%s11 + $0x10] sm:$0xff]
  %v5539 = vld [vmem:[%s11 + $0x18] sm:$0xff]
  %v5540 = vld [vmem:[%s11 + $0x20] sm:$0xff]
  %v5541 = vld [vmem:[%s11 + $0x28] sm:$0xff]
  %v5542 = vld [vmem:[%s11 + $0x30] sm:$0xff]
  %v5543 = vld [vmem:[%s11 + $0x38] sm:$0xff]
  %v5544 = vld [vmem:[%s11 + $0x40] sm:$0xff]
  %v5545 = vld [vmem:[%s11 + $0x48] sm:$0xff]
  %v5546 = vld [vmem:[%s11 + $0x50] sm:$0xf]
  %v5547 = vld [vmem:[%s12] sm:$0x1]
  %v5549 = vlaneseq
  %v5550 = vshrl.u32 %v5549, 7
  %v5551 = vsub.s32 0, %v5550
  %v5552 = vrot.slane %v5547, %v5551
  %vm5554 = vcmask 687104
  %v5556 = vsel %vm5554, %v5535, 0
  %v5559 = vsel %vm247, %v5546, 0
  %5561 = vmatprep.subr.mxu0 0.0
  %5562 = vmatpush1.msra.mxu0 0.0
  %5563 = vmatprep.subr.mxu0 0.0
  %5564 = vmatpush1.msra.mxu0 0.0
  %5565 = vmatprep.subr.mxu0 0.0
  %5566 = vmatpush1.msra.mxu0 0.0
  %5567 = vmatprep.subr.mxu0 0.0
  %5568 = vmatpush1.msra.mxu0 0.0
  %5569 = vmatprep.subr.mxu0 0.0
  %5570 = vmatpush1.msra.mxu0 0.0
  %5571 = vmatprep.subr.mxu0 0.0
  %5572 = vmatpush1.msra.mxu0 %v5559
  %5573 = vmatprep.subr.mxu0 0.0
  %5574 = vmatpush1.msra.mxu0 %v5545
  %5575 = vmatprep.subr.mxu0 0.0
  %5576 = vmatpush1.msra.mxu0 %v5544
  %5577 = vmatprep.subr.mxu0 0.0
  %5578 = vmatpush1.msra.mxu0 %v5543
  %5579 = vmatprep.subr.mxu0 0.0
  %5580 = vmatpush1.msra.mxu0 %v5542
  %5581 = vmatprep.subr.mxu0 0.0
  %5582 = vmatpush1.msra.mxu0 %v5541
  %5583 = vmatprep.subr.mxu0 0.0
  %5584 = vmatpush1.msra.mxu0 %v5540
  %5585 = vmatprep.subr.mxu0 0.0
  %5586 = vmatpush1.msra.mxu0 %v5539
  %5587 = vmatprep.subr.mxu0 0.0
  %5588 = vmatpush1.msra.mxu0 %v5538
  %5589 = vmatprep.subr.mxu0 0.0
  %5590 = vmatpush1.msra.mxu0 %v5537
  %5591 = vmatprep.subr.mxu0 0.0
  %5592 = vmatpush1.msra.mxu0 %v5536
  %5593 = vmatprep.subr.mxu0 0.0
  %5594 = vmatpush2.msra.mxu0 0.0
  %5595 = vmatprep.subr.mxu0 0.0
  %5596 = vmatpush2.msra.mxu0 0.0
  %5597 = vmatprep.subr.mxu0 0.0
  %5598 = vmatpush2.msra.mxu0 0.0
  %5599 = vmatprep.subr.mxu0 0.0
  %5600 = vmatpush2.msra.mxu0 0.0
  %5601 = vmatprep.subr.mxu0 0.0
  %5602 = vmatpush2.msra.mxu0 0.0
  %5603 = vmatprep.subr.mxu0 0.0
  %5604 = vmatpush2.msra.mxu0 0.0
  %5605 = vmatprep.subr.mxu0 0.0
  %5606 = vmatpush2.msra.mxu0 0.0
  %5607 = vmatprep.subr.mxu0 0.0
  %5608 = vmatpush2.msra.mxu0 0.0
  %5609 = vmatprep.subr.mxu0 0.0
  %5610 = vmatpush2.msra.mxu0 0.0
  %5611 = vmatprep.subr.mxu0 0.0
  %5612 = vmatpush2.msra.mxu0 0.0
  %5613 = vmatprep.subr.mxu0 0.0
  %5614 = vmatpush2.msra.mxu0 0.0
  %5615 = vmatprep.subr.mxu0 0.0
  %5616 = vmatpush2.msra.mxu0 0.0
  %5617 = vmatprep.subr.mxu0 0.0
  %5618 = vmatpush2.msra.mxu0 0.0
  %5619 = vmatprep.subr.mxu0 0.0
  %5620 = vmatpush2.msra.mxu0 0.0
  %5621 = vmatprep.subr.mxu0 0.0
  %5622 = vmatpush2.msra.mxu0 0.0
  %5623 = vmatprep.subr.mxu0 0.0
  %5624 = vmatpush2.msra.mxu0 0.0
  %5625 = vmatprep.mubr.f32.mxu0 0.0
  %5626 = vmatmul.mubr.f32.gmra.mxu0 %v5556
  %v5627 = vpop.f32.mrf.mxu0
  %v5628 = vadd.f32 %v5552, %v5627
  %v5629 = vpop.f32.mrf.mxu0
  %5630 = vdwg.mxu0
  %5631 = vst [vmem:[%s13] sm:$0xff] %v5628
  // Predicated region
  $region54: #{lenet_forward.1} parent=0 // pred_check
    _
  $region55: #{lenet_forward.1} parent=0 // pred_check_branch
    %5633 = sbr.rel (0) target = $region57
  $region56: #{lenet_forward.1} parent=0 // pred_region
    _
  $region57: #{lenet_forward.1} parent=0 // pred_fallthru
    _
  // Predicated region
  $region58: #{lenet_forward.1} parent=0 // pred_check
    _
  $region59: #{lenet_forward.1} parent=0 // pred_check_branch
    %5635 = sbr.rel (0) target = $region61
  $region60: #{lenet_forward.1} parent=0 // pred_region
    _
  $region61: #{lenet_forward.1} parent=0 // pred_fallthru
    _

</llo_original>
